<compile_context>
chip_gen: v7x
topology: tpu7x:2x2x1
jax: 0.10.0
libtpu: 0.0.40
codegen_flags: <defaults>
</compile_context>

<pallas_src>
import jax
import jax.numpy as jnp
from jax.experimental import pallas as pl
from jax.experimental.pallas import tpu as pltpu


# ----------------------------------------------------------------------------
# Fused kernel: conv1(k=5,s=2)+relu+pool2  ->  conv2(k=5)+relu+pool2  ->  folded fc
#   p_ref  : (1, 4, 5, J)   conv1 im2col patches; phase r holds conv1 output
#                           positions 4j+r (pool pairs for both pooling stages)
#   w1_ref : (32, 5)        conv1 weight (Cout, K)
#   b1_ref : (32, 1)
#   w2_ref : (5, 64, 32)    conv2 weight per tap (tap, Cout, Cin)
#   b2_ref : (64, 1)
#   wf_ref : (C, 64, L4)    folded fc1·fc2 weight, per-class planes in flatten order
#   bf_ref : (1, C)
#   o_ref  : (1, 1, C)
# ----------------------------------------------------------------------------
def fused_conv_fc_kernel(p_ref, w1_ref, b1_ref, w2_ref, b2_ref, wf_ref, bf_ref,
                         o_ref):
    num_classes, _, L4 = wf_ref.shape

    def mm(a, b):
        return jnp.dot(a, b, preferred_element_type=jnp.float32)

    w1 = w1_ref[...]                     # (32, 5)
    b1 = b1_ref[...]                     # (32, 1)
    # conv1 (stride 2) + ReLU at the 4 interleaved phases, then maxpool(2):
    #   h1[2j]   = max(y1[4j],   y1[4j+1])  -> he
    #   h1[2j+1] = max(y1[4j+2], y1[4j+3])  -> ho
    y1 = [jnp.maximum(mm(w1, p_ref[0, r]) + b1, 0.0) for r in range(4)]  # (32, J)
    he = jnp.maximum(y1[0], y1[1])       # h1 at even pooled positions (32, J)
    ho = jnp.maximum(y1[2], y1[3])       # h1 at odd pooled positions  (32, J)

    # conv2 (k=5) + ReLU + maxpool(2): accumulated per-tap matmuls on the
    # VMEM-resident he/ho (in-kernel im2col via lane-offset slices).
    he0, he1, he2 = he[:, 0:L4], he[:, 1:L4 + 1], he[:, 2:L4 + 2]
    ho0, ho1, ho2 = ho[:, 0:L4], ho[:, 1:L4 + 1], ho[:, 2:L4 + 2]
    w2 = [w2_ref[k] for k in range(5)]   # (64, 32) each
    b2 = b2_ref[...]                     # (64, 1)

    y2e = (mm(w2[0], he0) + mm(w2[1], ho0) + mm(w2[2], he1)
           + mm(w2[3], ho1) + mm(w2[4], he2))        # conv2 at even positions
    y2o = (mm(w2[0], ho0) + mm(w2[1], he1) + mm(w2[2], ho1)
           + mm(w2[3], he2) + mm(w2[4], ho2))        # conv2 at odd positions
    h2 = jnp.maximum(jnp.maximum(y2e + b2, 0.0),
                     jnp.maximum(y2o + b2, 0.0))     # (64, L4) channel-major

    # folded fc1·fc2 head: out[c] = <h2, wf[c]> + bf[c]
    row = jnp.concatenate(
        [jnp.sum(h2 * wf_ref[c], keepdims=True) for c in range(num_classes)],
        axis=1)                                      # (1, C)
    o_ref[0] = row + bf_ref[...]


def fused_forward(patches, w1c, b1col, w2t, b2col, wfold_planes, bfold2d):
    B, _, _, J = patches.shape
    C, _, L4 = wfold_planes.shape
    out = pl.pallas_call(
        fused_conv_fc_kernel,
        out_shape=jax.ShapeDtypeStruct((B, 1, C), jnp.float32),
        grid=(B,),
        in_specs=[
            pl.BlockSpec((1, 4, 5, J), lambda b: (b, 0, 0, 0)),
            pl.BlockSpec((32, 5), lambda b: (0, 0)),
            pl.BlockSpec((32, 1), lambda b: (0, 0)),
            pl.BlockSpec((5, 64, 32), lambda b: (0, 0, 0)),
            pl.BlockSpec((64, 1), lambda b: (0, 0)),
            pl.BlockSpec((C, 64, L4), lambda b: (0, 0, 0)),
            pl.BlockSpec((1, C), lambda b: (0, 0)),
        ],
        out_specs=pl.BlockSpec((1, 1, C), lambda b: (b, 0, 0)),
        compiler_params=pltpu.CompilerParams(
            dimension_semantics=("parallel",)),
    )(patches, w1c, b1col, w2t, b2col, wfold_planes, bfold2d)
    return out[:, 0, :]


# ----------------------------------------------------------------------------
# One-time parameter preparation (outside the jitted forward):
#  - channel-major conv weights
#  - constant-fold fc1·fc2 (no activation between them in the module's forward)
# ----------------------------------------------------------------------------
def prepare_params(params, L4):
    (w1, b1, w2, b2, wf1, bf1, wf2, bf2) = params
    C = wf2.shape[0]
    w1c = w1[:, 0, :]                          # (32, 5)
    b1col = b1.reshape(-1, 1)                  # (32, 1)
    w2t = jnp.transpose(w2, (2, 0, 1))         # (5, 64, 32) = (tap, Cout, Cin)
    b2col = b2.reshape(-1, 1)                  # (64, 1)
    wfold = jnp.dot(wf2, wf1, precision=jax.lax.Precision.HIGHEST)    # (C, 22336)
    bfold = jnp.dot(wf2, bf1, precision=jax.lax.Precision.HIGHEST) + bf2
    wfold_planes = wfold.reshape(C, wf1.shape[1] // L4, L4)           # (C, 64, L4)
    bfold2d = bfold.reshape(1, C)
    return (w1c, b1col, w2t, b2col, wfold_planes, bfold2d)


# ----------------------------------------------------------------------------
# Full forward pass (cheap conv1 im2col glue in plain JAX, everything else in
# the single Pallas kernel).
# ----------------------------------------------------------------------------
def conv1d_model_forward(x, prepared):
    (w1c, b1col, w2t, b2col, wfold_planes, bfold2d) = prepared
    B, _, L = x.shape
    x2 = x[:, 0, :]                            # (B, L)

    L1 = (L - 5) // 2 + 1                      # conv1 output length (stride 2)
    L2 = L1 // 2                               # after maxpool(2)
    L4 = (L2 - 4) // 2                         # after conv2 (k=5) + maxpool(2)
    J = L2 // 2                                # # even (= # odd) pooled-conv1 positions
    assert L1 % 4 == 0 and L2 % 2 == 0 and J == L4 + 2
    assert wfold_planes.shape[-1] == L4

    # conv1 im2col, phase r: Pr[k, j] = x[8j + 2r + k]  (conv1 output pos 4j + r)
    patches = jnp.stack(
        [jnp.stack([x2[:, 2 * r + k: 2 * r + k + 8 * (J - 1) + 1: 8]
                    for k in range(5)], axis=1)
         for r in range(4)], axis=1)           # (B, 4, 5, J)

    return fused_forward(patches, w1c, b1col, w2t, b2col, wfold_planes, bfold2d)


# ----------------------------------------------------------------------------
# Pure-JAX reference (independent, UNFUSED fc1/fc2 path) for validation.
# ----------------------------------------------------------------------------
def ref_forward(x, params):
    (w1, b1, w2, b2, wf1, bf1, wf2, bf2) = params
    dn = ("NCH", "OIH", "NCH")
    y = jax.lax.conv_general_dilated(x, w1, window_strides=(2,),
                                     padding="VALID", dimension_numbers=dn)
    y = jnp.maximum(y + b1[None, :, None], 0.0)
    y = jax.lax.reduce_window(y, -jnp.inf, jax.lax.max,
                              (1, 1, 2), (1, 1, 2), "VALID")
    y = jax.lax.conv_general_dilated(y, w2, window_strides=(1,),
                                     padding="VALID", dimension_numbers=dn)
    y = jnp.maximum(y + b2[None, :, None], 0.0)
    y = jax.lax.reduce_window(y, -jnp.inf, jax.lax.max,
                              (1, 1, 2), (1, 1, 2), "VALID")
    f = y.reshape(y.shape[0], -1)
    h = jnp.dot(f, wf1.T, precision=jax.lax.Precision.HIGHEST) + bf1
    return jnp.dot(h, wf2.T, precision=jax.lax.Precision.HIGHEST) + bf2


if __name__ == "__main__":
    key = jax.random.PRNGKey(0)
    B = 2
    num_classes = 2
    # fc1 hard-codes in_features = 22336 = 64*349, which forces input length 2811
    # (smallest length consistent with the module's forward).
    L = 2811

    keys = jax.random.split(key, 9)

    def uni(k, shape, fan_in):
        bound = 1.0 / (fan_in ** 0.5)
        return jax.random.uniform(k, shape, jnp.float32, -bound, bound)

    w1 = uni(keys[0], (32, 1, 5), 5)
    b1 = uni(keys[1], (32,), 5)
    w2 = uni(keys[2], (64, 32, 5), 32 * 5)
    b2 = uni(keys[3], (64,), 32 * 5)
    wf1 = uni(keys[4], (512, 22336), 22336)
    bf1 = uni(keys[5], (512,), 22336)
    wf2 = uni(keys[6], (num_classes, 512), 512)
    bf2 = uni(keys[7], (num_classes,), 512)
    x = jax.random.normal(keys[8], (B, 1, L), jnp.float32)

    params = (w1, b1, w2, b2, wf1, bf1, wf2, bf2)

    L4 = ((((L - 5) // 2 + 1) // 2) - 4) // 2          # 349
    prepared = prepare_params(params, L4)              # fold fc1·fc2 once, offline
    prepared = jax.tree_util.tree_map(jax.block_until_ready, prepared)

    out = jax.jit(conv1d_model_forward)(x, prepared)
    out = jax.block_until_ready(out)

    ref = ref_forward(x, params)
    max_err = float(jnp.max(jnp.abs(out - ref)))
    assert out.shape == (B, num_classes)
    if max_err < 1e-2:
        print("KERNEL_OK")
    else:
        print(f"MISMATCH max_err={max_err}")
</pallas_src>

<mosaic_0001>
module attributes {stable_mosaic.version = 11 : i64} {
  func.func @fused_conv_fc_kernel(%arg0: i32, %arg1: memref<1x4x5x351xf32, #tpu.memory_space<vmem>>, %arg2: memref<32x5xf32, #tpu.memory_space<vmem>>, %arg3: memref<32x1xf32, #tpu.memory_space<vmem>>, %arg4: memref<5x64x32xf32, #tpu.memory_space<vmem>>, %arg5: memref<64x1xf32, #tpu.memory_space<vmem>>, %arg6: memref<2x64x349xf32, #tpu.memory_space<vmem>>, %arg7: memref<1x2xf32, #tpu.memory_space<vmem>>, %arg8: memref<1x1x2xf32, #tpu.memory_space<vmem>>) attributes {dimension_semantics = [#tpu.dimension_semantics<parallel>], iteration_bounds = array<i64: 2>, scalar_prefetch = 0 : i64, scratch_operands = 0 : i64, tpu.core_type = #tpu.core_type<tc>, window_params = [{transform_indices = @transform_0, window_bounds = array<i64: 1, 4, 5, 351>}, {pipeline_mode = #tpu.pipeline_mode<synchronous>, transform_indices = @transform_1, window_bounds = array<i64: 32, 5>}, {pipeline_mode = #tpu.pipeline_mode<synchronous>, transform_indices = @transform_2, window_bounds = array<i64: 32, 1>}, {pipeline_mode = #tpu.pipeline_mode<synchronous>, transform_indices = @transform_3, window_bounds = array<i64: 5, 64, 32>}, {pipeline_mode = #tpu.pipeline_mode<synchronous>, transform_indices = @transform_4, window_bounds = array<i64: 64, 1>}, {pipeline_mode = #tpu.pipeline_mode<synchronous>, transform_indices = @transform_5, window_bounds = array<i64: 2, 64, 349>}, {pipeline_mode = #tpu.pipeline_mode<synchronous>, transform_indices = @transform_6, window_bounds = array<i64: 1, 2>}, {transform_indices = @transform_7, window_bounds = array<i64: 1, 1, 2>}]} {
    %c0 = arith.constant 0 : index
    %c0_0 = arith.constant 0 : index
    %0 = vector.load %arg2[%c0, %c0_0] : memref<32x5xf32, #tpu.memory_space<vmem>>, vector<32x5xf32>
    %c0_1 = arith.constant 0 : index
    %c0_2 = arith.constant 0 : index
    %1 = vector.load %arg3[%c0_1, %c0_2] : memref<32x1xf32, #tpu.memory_space<vmem>>, vector<32x1xf32>
    %c0_3 = arith.constant 0 : index
    %c0_4 = arith.constant 0 : index
    %c0_5 = arith.constant 0 : index
    %c0_6 = arith.constant 0 : index
    %2 = vector.load %arg1[%c0_3, %c0_4, %c0_5, %c0_6] : memref<1x4x5x351xf32, #tpu.memory_space<vmem>>, vector<1x1x5x351xf32>
    %3 = vector.shape_cast %2 : vector<1x1x5x351xf32> to vector<5x351xf32>
    %cst = arith.constant dense<0.000000e+00> : vector<32x351xf32>
    %4 = tpu.matmul %0, %3, %cst {dimension_numbers = #tpu.dot_dimension_numbers<[1], [0], [0], [1], [0, 0, 1, 1], [], []>} : vector<32x5xf32>, vector<5x351xf32>, vector<32x351xf32> -> vector<32x351xf32>
    %5 = vector.broadcast %1 : vector<32x1xf32> to vector<32x351xf32>
    %6 = arith.addf %4, %5 : vector<32x351xf32>
    %cst_7 = arith.constant 0.000000e+00 : f32
    %7 = vector.broadcast %cst_7 : f32 to vector<32x351xf32>
    %8 = arith.maximumf %6, %7 : vector<32x351xf32>
    %c0_8 = arith.constant 0 : index
    %c1 = arith.constant 1 : index
    %c0_9 = arith.constant 0 : index
    %c0_10 = arith.constant 0 : index
    %9 = vector.load %arg1[%c0_8, %c1, %c0_9, %c0_10] : memref<1x4x5x351xf32, #tpu.memory_space<vmem>>, vector<1x1x5x351xf32>
    %10 = vector.shape_cast %9 : vector<1x1x5x351xf32> to vector<5x351xf32>
    %cst_11 = arith.constant dense<0.000000e+00> : vector<32x351xf32>
    %11 = tpu.matmul %0, %10, %cst_11 {dimension_numbers = #tpu.dot_dimension_numbers<[1], [0], [0], [1], [0, 0, 1, 1], [], []>} : vector<32x5xf32>, vector<5x351xf32>, vector<32x351xf32> -> vector<32x351xf32>
    %12 = vector.broadcast %1 : vector<32x1xf32> to vector<32x351xf32>
    %13 = arith.addf %11, %12 : vector<32x351xf32>
    %cst_12 = arith.constant 0.000000e+00 : f32
    %14 = vector.broadcast %cst_12 : f32 to vector<32x351xf32>
    %15 = arith.maximumf %13, %14 : vector<32x351xf32>
    %c0_13 = arith.constant 0 : index
    %c2 = arith.constant 2 : index
    %c0_14 = arith.constant 0 : index
    %c0_15 = arith.constant 0 : index
    %16 = vector.load %arg1[%c0_13, %c2, %c0_14, %c0_15] : memref<1x4x5x351xf32, #tpu.memory_space<vmem>>, vector<1x1x5x351xf32>
    %17 = vector.shape_cast %16 : vector<1x1x5x351xf32> to vector<5x351xf32>
    %cst_16 = arith.constant dense<0.000000e+00> : vector<32x351xf32>
    %18 = tpu.matmul %0, %17, %cst_16 {dimension_numbers = #tpu.dot_dimension_numbers<[1], [0], [0], [1], [0, 0, 1, 1], [], []>} : vector<32x5xf32>, vector<5x351xf32>, vector<32x351xf32> -> vector<32x351xf32>
    %19 = vector.broadcast %1 : vector<32x1xf32> to vector<32x351xf32>
    %20 = arith.addf %18, %19 : vector<32x351xf32>
    %cst_17 = arith.constant 0.000000e+00 : f32
    %21 = vector.broadcast %cst_17 : f32 to vector<32x351xf32>
    %22 = arith.maximumf %20, %21 : vector<32x351xf32>
    %c0_18 = arith.constant 0 : index
    %c3 = arith.constant 3 : index
    %c0_19 = arith.constant 0 : index
    %c0_20 = arith.constant 0 : index
    %23 = vector.load %arg1[%c0_18, %c3, %c0_19, %c0_20] : memref<1x4x5x351xf32, #tpu.memory_space<vmem>>, vector<1x1x5x351xf32>
    %24 = vector.shape_cast %23 : vector<1x1x5x351xf32> to vector<5x351xf32>
    %cst_21 = arith.constant dense<0.000000e+00> : vector<32x351xf32>
    %25 = tpu.matmul %0, %24, %cst_21 {dimension_numbers = #tpu.dot_dimension_numbers<[1], [0], [0], [1], [0, 0, 1, 1], [], []>} : vector<32x5xf32>, vector<5x351xf32>, vector<32x351xf32> -> vector<32x351xf32>
    %26 = vector.broadcast %1 : vector<32x1xf32> to vector<32x351xf32>
    %27 = arith.addf %25, %26 : vector<32x351xf32>
    %cst_22 = arith.constant 0.000000e+00 : f32
    %28 = vector.broadcast %cst_22 : f32 to vector<32x351xf32>
    %29 = arith.maximumf %27, %28 : vector<32x351xf32>
    %30 = arith.maximumf %8, %15 : vector<32x351xf32>
    %31 = arith.maximumf %22, %29 : vector<32x351xf32>
    %32 = vector.extract_strided_slice %30 {offsets = [0, 0], sizes = [32, 349], strides = [1, 1]} : vector<32x351xf32> to vector<32x349xf32>
    %33 = vector.extract_strided_slice %30 {offsets = [0, 1], sizes = [32, 349], strides = [1, 1]} : vector<32x351xf32> to vector<32x349xf32>
    %34 = vector.extract_strided_slice %30 {offsets = [0, 2], sizes = [32, 349], strides = [1, 1]} : vector<32x351xf32> to vector<32x349xf32>
    %35 = vector.extract_strided_slice %31 {offsets = [0, 0], sizes = [32, 349], strides = [1, 1]} : vector<32x351xf32> to vector<32x349xf32>
    %36 = vector.extract_strided_slice %31 {offsets = [0, 1], sizes = [32, 349], strides = [1, 1]} : vector<32x351xf32> to vector<32x349xf32>
    %37 = vector.extract_strided_slice %31 {offsets = [0, 2], sizes = [32, 349], strides = [1, 1]} : vector<32x351xf32> to vector<32x349xf32>
    %c0_23 = arith.constant 0 : index
    %c0_24 = arith.constant 0 : index
    %c0_25 = arith.constant 0 : index
    %38 = vector.load %arg4[%c0_23, %c0_24, %c0_25] : memref<5x64x32xf32, #tpu.memory_space<vmem>>, vector<1x64x32xf32>
    %39 = vector.shape_cast %38 : vector<1x64x32xf32> to vector<64x32xf32>
    %c1_26 = arith.constant 1 : index
    %c0_27 = arith.constant 0 : index
    %c0_28 = arith.constant 0 : index
    %40 = vector.load %arg4[%c1_26, %c0_27, %c0_28] : memref<5x64x32xf32, #tpu.memory_space<vmem>>, vector<1x64x32xf32>
    %41 = vector.shape_cast %40 : vector<1x64x32xf32> to vector<64x32xf32>
    %c2_29 = arith.constant 2 : index
    %c0_30 = arith.constant 0 : index
    %c0_31 = arith.constant 0 : index
    %42 = vector.load %arg4[%c2_29, %c0_30, %c0_31] : memref<5x64x32xf32, #tpu.memory_space<vmem>>, vector<1x64x32xf32>
    %43 = vector.shape_cast %42 : vector<1x64x32xf32> to vector<64x32xf32>
    %c3_32 = arith.constant 3 : index
    %c0_33 = arith.constant 0 : index
    %c0_34 = arith.constant 0 : index
    %44 = vector.load %arg4[%c3_32, %c0_33, %c0_34] : memref<5x64x32xf32, #tpu.memory_space<vmem>>, vector<1x64x32xf32>
    %45 = vector.shape_cast %44 : vector<1x64x32xf32> to vector<64x32xf32>
    %c4 = arith.constant 4 : index
    %c0_35 = arith.constant 0 : index
    %c0_36 = arith.constant 0 : index
    %46 = vector.load %arg4[%c4, %c0_35, %c0_36] : memref<5x64x32xf32, #tpu.memory_space<vmem>>, vector<1x64x32xf32>
    %47 = vector.shape_cast %46 : vector<1x64x32xf32> to vector<64x32xf32>
    %c0_37 = arith.constant 0 : index
    %c0_38 = arith.constant 0 : index
    %48 = vector.load %arg5[%c0_37, %c0_38] : memref<64x1xf32, #tpu.memory_space<vmem>>, vector<64x1xf32>
    %cst_39 = arith.constant dense<0.000000e+00> : vector<64x349xf32>
    %49 = tpu.matmul %39, %32, %cst_39 {dimension_numbers = #tpu.dot_dimension_numbers<[1], [0], [0], [1], [0, 0, 1, 1], [], []>} : vector<64x32xf32>, vector<32x349xf32>, vector<64x349xf32> -> vector<64x349xf32>
    %cst_40 = arith.constant dense<0.000000e+00> : vector<64x349xf32>
    %50 = tpu.matmul %41, %35, %cst_40 {dimension_numbers = #tpu.dot_dimension_numbers<[1], [0], [0], [1], [0, 0, 1, 1], [], []>} : vector<64x32xf32>, vector<32x349xf32>, vector<64x349xf32> -> vector<64x349xf32>
    %51 = arith.addf %49, %50 : vector<64x349xf32>
    %cst_41 = arith.constant dense<0.000000e+00> : vector<64x349xf32>
    %52 = tpu.matmul %43, %33, %cst_41 {dimension_numbers = #tpu.dot_dimension_numbers<[1], [0], [0], [1], [0, 0, 1, 1], [], []>} : vector<64x32xf32>, vector<32x349xf32>, vector<64x349xf32> -> vector<64x349xf32>
    %53 = arith.addf %51, %52 : vector<64x349xf32>
    %cst_42 = arith.constant dense<0.000000e+00> : vector<64x349xf32>
    %54 = tpu.matmul %45, %36, %cst_42 {dimension_numbers = #tpu.dot_dimension_numbers<[1], [0], [0], [1], [0, 0, 1, 1], [], []>} : vector<64x32xf32>, vector<32x349xf32>, vector<64x349xf32> -> vector<64x349xf32>
    %55 = arith.addf %53, %54 : vector<64x349xf32>
    %cst_43 = arith.constant dense<0.000000e+00> : vector<64x349xf32>
    %56 = tpu.matmul %47, %34, %cst_43 {dimension_numbers = #tpu.dot_dimension_numbers<[1], [0], [0], [1], [0, 0, 1, 1], [], []>} : vector<64x32xf32>, vector<32x349xf32>, vector<64x349xf32> -> vector<64x349xf32>
    %57 = arith.addf %55, %56 : vector<64x349xf32>
    %cst_44 = arith.constant dense<0.000000e+00> : vector<64x349xf32>
    %58 = tpu.matmul %39, %35, %cst_44 {dimension_numbers = #tpu.dot_dimension_numbers<[1], [0], [0], [1], [0, 0, 1, 1], [], []>} : vector<64x32xf32>, vector<32x349xf32>, vector<64x349xf32> -> vector<64x349xf32>
    %cst_45 = arith.constant dense<0.000000e+00> : vector<64x349xf32>
    %59 = tpu.matmul %41, %33, %cst_45 {dimension_numbers = #tpu.dot_dimension_numbers<[1], [0], [0], [1], [0, 0, 1, 1], [], []>} : vector<64x32xf32>, vector<32x349xf32>, vector<64x349xf32> -> vector<64x349xf32>
    %60 = arith.addf %58, %59 : vector<64x349xf32>
    %cst_46 = arith.constant dense<0.000000e+00> : vector<64x349xf32>
    %61 = tpu.matmul %43, %36, %cst_46 {dimension_numbers = #tpu.dot_dimension_numbers<[1], [0], [0], [1], [0, 0, 1, 1], [], []>} : vector<64x32xf32>, vector<32x349xf32>, vector<64x349xf32> -> vector<64x349xf32>
    %62 = arith.addf %60, %61 : vector<64x349xf32>
    %cst_47 = arith.constant dense<0.000000e+00> : vector<64x349xf32>
    %63 = tpu.matmul %45, %34, %cst_47 {dimension_numbers = #tpu.dot_dimension_numbers<[1], [0], [0], [1], [0, 0, 1, 1], [], []>} : vector<64x32xf32>, vector<32x349xf32>, vector<64x349xf32> -> vector<64x349xf32>
    %64 = arith.addf %62, %63 : vector<64x349xf32>
    %cst_48 = arith.constant dense<0.000000e+00> : vector<64x349xf32>
    %65 = tpu.matmul %47, %37, %cst_48 {dimension_numbers = #tpu.dot_dimension_numbers<[1], [0], [0], [1], [0, 0, 1, 1], [], []>} : vector<64x32xf32>, vector<32x349xf32>, vector<64x349xf32> -> vector<64x349xf32>
    %66 = arith.addf %64, %65 : vector<64x349xf32>
    %67 = vector.broadcast %48 : vector<64x1xf32> to vector<64x349xf32>
    %68 = arith.addf %57, %67 : vector<64x349xf32>
    %cst_49 = arith.constant 0.000000e+00 : f32
    %69 = vector.broadcast %cst_49 : f32 to vector<64x349xf32>
    %70 = arith.maximumf %68, %69 : vector<64x349xf32>
    %71 = vector.broadcast %48 : vector<64x1xf32> to vector<64x349xf32>
    %72 = arith.addf %66, %71 : vector<64x349xf32>
    %cst_50 = arith.constant 0.000000e+00 : f32
    %73 = vector.broadcast %cst_50 : f32 to vector<64x349xf32>
    %74 = arith.maximumf %72, %73 : vector<64x349xf32>
    %75 = arith.maximumf %70, %74 : vector<64x349xf32>
    %c0_51 = arith.constant 0 : index
    %c0_52 = arith.constant 0 : index
    %c0_53 = arith.constant 0 : index
    %76 = vector.load %arg6[%c0_51, %c0_52, %c0_53] : memref<2x64x349xf32, #tpu.memory_space<vmem>>, vector<1x64x349xf32>
    %77 = vector.shape_cast %76 : vector<1x64x349xf32> to vector<64x349xf32>
    %78 = arith.mulf %75, %77 : vector<64x349xf32>
    %79 = vector.shape_cast %78 : vector<64x349xf32> to vector<1x64x349xf32>
    %cst_54 = arith.constant dense<0.000000e+00> : vector<1xf32>
    %80 = vector.multi_reduction <add>, %79, %cst_54 [1, 2] : vector<1x64x349xf32> to vector<1xf32>
    %81 = vector.shape_cast %80 : vector<1xf32> to vector<1x1x1xf32>
    %82 = vector.extract %81[0, 0, 0] : f32 from vector<1x1x1xf32>
    %83 = vector.broadcast %82 : f32 to vector<1x1xf32>
    %c1_55 = arith.constant 1 : index
    %c0_56 = arith.constant 0 : index
    %c0_57 = arith.constant 0 : index
    %84 = vector.load %arg6[%c1_55, %c0_56, %c0_57] : memref<2x64x349xf32, #tpu.memory_space<vmem>>, vector<1x64x349xf32>
    %85 = vector.shape_cast %84 : vector<1x64x349xf32> to vector<64x349xf32>
    %86 = arith.mulf %75, %85 : vector<64x349xf32>
    %87 = vector.shape_cast %86 : vector<64x349xf32> to vector<1x64x349xf32>
    %cst_58 = arith.constant dense<0.000000e+00> : vector<1xf32>
    %88 = vector.multi_reduction <add>, %87, %cst_58 [1, 2] : vector<1x64x349xf32> to vector<1xf32>
    %89 = vector.shape_cast %88 : vector<1xf32> to vector<1x1x1xf32>
    %90 = vector.extract %89[0, 0, 0] : f32 from vector<1x1x1xf32>
    %91 = vector.broadcast %90 : f32 to vector<1x1xf32>
    %92 = tpu.concatenate %83, %91 in 1 : vector<1x1xf32>, vector<1x1xf32> -> vector<1x2xf32>
    %c0_59 = arith.constant 0 : index
    %c0_60 = arith.constant 0 : index
    %93 = vector.load %arg7[%c0_59, %c0_60] : memref<1x2xf32, #tpu.memory_space<vmem>>, vector<1x2xf32>
    %94 = arith.addf %92, %93 : vector<1x2xf32>
    %c0_61 = arith.constant 0 : index
    %c0_62 = arith.constant 0 : index
    %c0_63 = arith.constant 0 : index
    %95 = vector.load %arg8[%c0_61, %c0_62, %c0_63] : memref<1x1x2xf32, #tpu.memory_space<vmem>>, vector<1x1x2xf32>
    %96 = vector.shape_cast %95 : vector<1x1x2xf32> to vector<1x2xf32>
    %97 = vector.shape_cast %94 : vector<1x2xf32> to vector<1x1x2xf32>
    tpu.vector_store %arg8[%c0_61, %c0_62, %c0_63], %97 {strides = array<i32>} : memref<1x1x2xf32, #tpu.memory_space<vmem>>, vector<1x1x2xf32>,
    return
  }
  func.func @transform_0(%arg0: i32) -> (i32, i32, i32, i32) {
    %c0_i32 = arith.constant 0 : i32
    %c0_i32_0 = arith.constant 0 : i32
    %c0_i32_1 = arith.constant 0 : i32
    %c0_i32_2 = arith.constant 0 : i32
    return %arg0, %c0_i32, %c0_i32_0, %c0_i32_1 : i32, i32, i32, i32
  }
  func.func @transform_1(%arg0: i32) -> (i32, i32) {
    %c0_i32 = arith.constant 0 : i32
    %c0_i32_0 = arith.constant 0 : i32
    %c0_i32_1 = arith.constant 0 : i32
    return %c0_i32, %c0_i32_0 : i32, i32
  }
  func.func @transform_2(%arg0: i32) -> (i32, i32) {
    %c0_i32 = arith.constant 0 : i32
    %c0_i32_0 = arith.constant 0 : i32
    %c0_i32_1 = arith.constant 0 : i32
    return %c0_i32, %c0_i32_0 : i32, i32
  }
  func.func @transform_3(%arg0: i32) -> (i32, i32, i32) {
    %c0_i32 = arith.constant 0 : i32
    %c0_i32_0 = arith.constant 0 : i32
    %c0_i32_1 = arith.constant 0 : i32
    %c0_i32_2 = arith.constant 0 : i32
    return %c0_i32, %c0_i32_0, %c0_i32_1 : i32, i32, i32
  }
  func.func @transform_4(%arg0: i32) -> (i32, i32) {
    %c0_i32 = arith.constant 0 : i32
    %c0_i32_0 = arith.constant 0 : i32
    %c0_i32_1 = arith.constant 0 : i32
    return %c0_i32, %c0_i32_0 : i32, i32
  }
  func.func @transform_5(%arg0: i32) -> (i32, i32, i32) {
    %c0_i32 = arith.constant 0 : i32
    %c0_i32_0 = arith.constant 0 : i32
    %c0_i32_1 = arith.constant 0 : i32
    %c0_i32_2 = arith.constant 0 : i32
    return %c0_i32, %c0_i32_0, %c0_i32_1 : i32, i32, i32
  }
  func.func @transform_6(%arg0: i32) -> (i32, i32) {
    %c0_i32 = arith.constant 0 : i32
    %c0_i32_0 = arith.constant 0 : i32
    %c0_i32_1 = arith.constant 0 : i32
    return %c0_i32, %c0_i32_0 : i32, i32
  }
  func.func @transform_7(%arg0: i32) -> (i32, i32, i32) {
    %c0_i32 = arith.constant 0 : i32
    %c0_i32_0 = arith.constant 0 : i32
    %c0_i32_1 = arith.constant 0 : i32
    return %arg0, %c0_i32, %c0_i32_0 : i32, i32, i32
  }
}

</mosaic_0001>

<llo_original>
// kernel: conv1d_model_forward.1
$region0: #{conv1d_model_forward.1}
  #allocation0 [shape = 'u32[]', space=smem, size = 0x4, offset = 0x4, fixed_abs, tag = 'smem constant byte address 0x4 - core index']
  #allocation1 [shape = 'u32[144,128]{1,0:T(1,128)}', space=vmem, size = 0x12000, scoped, tag = 'internal scratch']
  %s0 = inlined_call_operand.vmem [shape: f32[2,4,5,351], index: 0, kind: input, shape index: {}]
  %s1 = inlined_call_operand.vmem [shape: f32[32,5], index: 1, kind: input, shape index: {}]
  %s2 = inlined_call_operand.vmem [shape: f32[32,1], index: 2, kind: input, shape index: {}]
  %s3 = inlined_call_operand.vmem [shape: f32[5,64,32], index: 3, kind: input, shape index: {}]
  %s4 = inlined_call_operand.vmem [shape: f32[64,1], index: 4, kind: input, shape index: {}]
  %s5 = inlined_call_operand.vmem [shape: f32[2,64,349], index: 5, kind: input, shape index: {}]
  %s6 = inlined_call_operand.vmem [shape: f32[1,2], index: 6, kind: input, shape index: {}]
  %s7 = inlined_call_operand.hbm [shape: f32[2,1,2], index: 7, kind: output, shape index: {}]
  %s8 = sld [smem:[#allocation0]]
  $region61: #{conv1d_model_forward.1} parent=0
    _
  %s10 = ssub.s32 1, %s8
  %s11 = scalar_select 0, %s10, %s8
  $region1: #{conv1d_model_forward.1} parent=0
    #allocation2 [shape = 'u8[1024]{0}', space=vmem, size = 0x400, scoped, tag = 'output window, operand 0']
    #allocation3 [shape = 's32[2]{0}', space=sflag, size = 0x8, scoped, tag = 'scoped memory for conv1d_model_forward.1']
    %12 = vsyncpa [#allocation3], 0
    %s13 = scalar_lea.sflag [#allocation3], 1
    %14 = vsyncpa %s13, 0
    loop: start=0, step=1, limit=4
    $region2: #{conv1d_model_forward.1} parent=1 // loop_pre_header
      _
    $region3: #{conv1d_model_forward.1} parent=1 // loop_header
      %s16 = sphi 0, %s20
      %p17 = scmp.ge.s32.totalorder %s16, 4
      %s26 = sphi 0, %s28
      %s29 = sphi 0, %s26
      %s30 = sphi 0, %s29
      %s46 = sphi 0, %s30
      %s50 = sphi 0, %s50
      %s52 = sphi 0, %s50
      %s53 = sphi 0, %s52
      %s67 = sphi 0, %s53
      %s71 = sphi 0, %s71
      %s73 = sphi 0, %s71
      %s74 = sphi 0, %s73
      %s88 = sphi 0, %s74
      %s92 = sphi 0, %s92
      %s94 = sphi 0, %s92
      %s95 = sphi 0, %s94
      %s109 = sphi 0, %s95
      %s113 = sphi 0, %s113
      %s115 = sphi 0, %s113
      %s116 = sphi 0, %s115
      %s130 = sphi 0, %s116
      %s134 = sphi 0, %s134
      %s136 = sphi 0, %s134
      %s137 = sphi 0, %s136
      %s151 = sphi 0, %s137
      %s155 = sphi 0, %s155
      %s157 = sphi 0, %s155
      %s158 = sphi 0, %s157
      %s172 = sphi 0, %s158
      %s178 = sphi 0, %s180
      %s181 = sphi 0, %s178
      %s182 = sphi 0, %s181
      %s198 = sphi 0, %s182
    $region4: #{conv1d_model_forward.1} parent=1 // loop_header_branch
      %19 = sbr.rel (%p17) target = $region8
    $region5: #{conv1d_model_forward.1} parent=1 // loop_body
      %s21 = ssub.s32 %s16, 1
      %s22 = ssub.s32 %s16, 2
      %s23 = sadd.s32 %s16, 1
      %s24 = ssub.s32 %s16, %s23
      %p25 = scmp.eq.s32.totalorder %s24, 0
      %s27 = sadd.s32 %s26, 1
      %s28 = scalar_select %p25, %s26, %s27
      %p31 = pneg %p25
      %p32 = scmp.eq.s32.totalorder %s16, 1
      %p33 = por %p31, %p32
      %p34 = scmp.ne.s32.totalorder %s26, %s29
      %p35 = scmp.eq.s32.totalorder %s16, 0
      %p36 = por %p34, %p35
      %p37 = scmp.ne.s32.totalorder %s26, %s29
      %p38 = scmp.eq.s32.totalorder %s21, 1
      %p39 = por %p37, %p38
      %p40 = scmp.ne.s32.totalorder %s29, %s30
      %p41 = scmp.eq.s32.totalorder %s21, 0
      %p42 = por %p40, %p41
      %p43 = scmp.ne.s32.totalorder %s29, %s30
      %p44 = scmp.eq.s32.totalorder %s22, 1
      %p45 = por %p43, %p44
      %p47 = scmp.ne.s32.totalorder %s30, %s46
      %p48 = scmp.eq.s32.totalorder %s22, 0
      %p49 = por %p47, %p48
      %s51 = sadd.s32 %s50, 1
      %p54 = scmp.eq.s32.totalorder %s16, 1
      %p55 = scmp.ne.s32.totalorder %s50, %s52
      %p56 = scmp.eq.s32.totalorder %s16, 0
      %p57 = por %p55, %p56
      %p58 = scmp.ne.s32.totalorder %s50, %s52
      %p59 = scmp.eq.s32.totalorder %s21, 1
      %p60 = por %p58, %p59
      %p61 = scmp.ne.s32.totalorder %s52, %s53
      %p62 = scmp.eq.s32.totalorder %s21, 0
      %p63 = por %p61, %p62
      %p64 = scmp.ne.s32.totalorder %s52, %s53
      %p65 = scmp.eq.s32.totalorder %s22, 1
      %p66 = por %p64, %p65
      %p68 = scmp.ne.s32.totalorder %s53, %s67
      %p69 = scmp.eq.s32.totalorder %s22, 0
      %p70 = por %p68, %p69
      %s72 = sadd.s32 %s71, 1
      %p75 = scmp.eq.s32.totalorder %s16, 1
      %p76 = scmp.ne.s32.totalorder %s71, %s73
      %p77 = scmp.eq.s32.totalorder %s16, 0
      %p78 = por %p76, %p77
      %p79 = scmp.ne.s32.totalorder %s71, %s73
      %p80 = scmp.eq.s32.totalorder %s21, 1
      %p81 = por %p79, %p80
      %p82 = scmp.ne.s32.totalorder %s73, %s74
      %p83 = scmp.eq.s32.totalorder %s21, 0
      %p84 = por %p82, %p83
      %p85 = scmp.ne.s32.totalorder %s73, %s74
      %p86 = scmp.eq.s32.totalorder %s22, 1
      %p87 = por %p85, %p86
      %p89 = scmp.ne.s32.totalorder %s74, %s88
      %p90 = scmp.eq.s32.totalorder %s22, 0
      %p91 = por %p89, %p90
      %s93 = sadd.s32 %s92, 1
      %p96 = scmp.eq.s32.totalorder %s16, 1
      %p97 = scmp.ne.s32.totalorder %s92, %s94
      %p98 = scmp.eq.s32.totalorder %s16, 0
      %p99 = por %p97, %p98
      %p100 = scmp.ne.s32.totalorder %s92, %s94
      %p101 = scmp.eq.s32.totalorder %s21, 1
      %p102 = por %p100, %p101
      %p103 = scmp.ne.s32.totalorder %s94, %s95
      %p104 = scmp.eq.s32.totalorder %s21, 0
      %p105 = por %p103, %p104
      %p106 = scmp.ne.s32.totalorder %s94, %s95
      %p107 = scmp.eq.s32.totalorder %s22, 1
      %p108 = por %p106, %p107
      %p110 = scmp.ne.s32.totalorder %s95, %s109
      %p111 = scmp.eq.s32.totalorder %s22, 0
      %p112 = por %p110, %p111
      %s114 = sadd.s32 %s113, 1
      %p117 = scmp.eq.s32.totalorder %s16, 1
      %p118 = scmp.ne.s32.totalorder %s113, %s115
      %p119 = scmp.eq.s32.totalorder %s16, 0
      %p120 = por %p118, %p119
      %p121 = scmp.ne.s32.totalorder %s113, %s115
      %p122 = scmp.eq.s32.totalorder %s21, 1
      %p123 = por %p121, %p122
      %p124 = scmp.ne.s32.totalorder %s115, %s116
      %p125 = scmp.eq.s32.totalorder %s21, 0
      %p126 = por %p124, %p125
      %p127 = scmp.ne.s32.totalorder %s115, %s116
      %p128 = scmp.eq.s32.totalorder %s22, 1
      %p129 = por %p127, %p128
      %p131 = scmp.ne.s32.totalorder %s116, %s130
      %p132 = scmp.eq.s32.totalorder %s22, 0
      %p133 = por %p131, %p132
      %s135 = sadd.s32 %s134, 1
      %p138 = scmp.eq.s32.totalorder %s16, 1
      %p139 = scmp.ne.s32.totalorder %s134, %s136
      %p140 = scmp.eq.s32.totalorder %s16, 0
      %p141 = por %p139, %p140
      %p142 = scmp.ne.s32.totalorder %s134, %s136
      %p143 = scmp.eq.s32.totalorder %s21, 1
      %p144 = por %p142, %p143
      %p145 = scmp.ne.s32.totalorder %s136, %s137
      %p146 = scmp.eq.s32.totalorder %s21, 0
      %p147 = por %p145, %p146
      %p148 = scmp.ne.s32.totalorder %s136, %s137
      %p149 = scmp.eq.s32.totalorder %s22, 1
      %p150 = por %p148, %p149
      %p152 = scmp.ne.s32.totalorder %s137, %s151
      %p153 = scmp.eq.s32.totalorder %s22, 0
      %p154 = por %p152, %p153
      %s156 = sadd.s32 %s155, 1
      %p159 = scmp.eq.s32.totalorder %s16, 1
      %p160 = scmp.ne.s32.totalorder %s155, %s157
      %p161 = scmp.eq.s32.totalorder %s16, 0
      %p162 = por %p160, %p161
      %p163 = scmp.ne.s32.totalorder %s155, %s157
      %p164 = scmp.eq.s32.totalorder %s21, 1
      %p165 = por %p163, %p164
      %p166 = scmp.ne.s32.totalorder %s157, %s158
      %p167 = scmp.eq.s32.totalorder %s21, 0
      %p168 = por %p166, %p167
      %p169 = scmp.ne.s32.totalorder %s157, %s158
      %p170 = scmp.eq.s32.totalorder %s22, 1
      %p171 = por %p169, %p170
      %p173 = scmp.ne.s32.totalorder %s158, %s172
      %p174 = scmp.eq.s32.totalorder %s22, 0
      %p175 = por %p173, %p174
      %s176 = ssub.s32 %s16, %s23
      %p177 = scmp.eq.s32.totalorder %s176, 0
      %s179 = sadd.s32 %s178, 1
      %s180 = scalar_select %p177, %s178, %s179
      %p183 = pneg %p177
      %p184 = scmp.eq.s32.totalorder %s16, 1
      %p185 = por %p183, %p184
      %p186 = scmp.ne.s32.totalorder %s178, %s181
      %p187 = scmp.eq.s32.totalorder %s16, 0
      %p188 = por %p186, %p187
      %p189 = scmp.ne.s32.totalorder %s178, %s181
      %p190 = scmp.eq.s32.totalorder %s21, 1
      %p191 = por %p189, %p190
      %p192 = scmp.ne.s32.totalorder %s181, %s182
      %p193 = scmp.eq.s32.totalorder %s21, 0
      %p194 = por %p192, %p193
      %p195 = scmp.ne.s32.totalorder %s181, %s182
      %p196 = scmp.eq.s32.totalorder %s22, 1
      %p197 = por %p195, %p196
      %p199 = scmp.ne.s32.totalorder %s182, %s198
      %p200 = scmp.eq.s32.totalorder %s22, 0
      %p201 = por %p199, %p200
      %p202 = scmp.le.s32.totalorder 1, %s16
      %p203 = scmp.lt.s32.totalorder %s16, 3
      %p204 = pnand %p202, %p203
      %p205 = pneg %p204
      // Predicated region
      $region9: #{conv1d_model_forward.1} parent=5 // pred_check
        _
      $region10: #{conv1d_model_forward.1} parent=5 // pred_check_branch
        %207 = sbr.rel (%p204) target = $region12
      $region11: #{conv1d_model_forward.1} parent=5 // pred_region
        %s208 = ssub.s32 %s16, 1
        // Predicated region
        $region13: #{conv1d_model_forward.1} parent=11 // pred_check
          %p209 = pneg %p63
        $region14: #{conv1d_model_forward.1} parent=11 // pred_check_branch
          %211 = sbr.rel (%p209) target = $region16
        $region15: #{conv1d_model_forward.1} parent=11 // pred_region
          _
        $region16: #{conv1d_model_forward.1} parent=11 // pred_fallthru
          _
        // Predicated region
        $region17: #{conv1d_model_forward.1} parent=11 // pred_check
          %p212 = pneg %p84
        $region18: #{conv1d_model_forward.1} parent=11 // pred_check_branch
          %214 = sbr.rel (%p212) target = $region20
        $region19: #{conv1d_model_forward.1} parent=11 // pred_region
          _
        $region20: #{conv1d_model_forward.1} parent=11 // pred_fallthru
          _
        // Predicated region
        $region21: #{conv1d_model_forward.1} parent=11 // pred_check
          %p215 = pneg %p105
        $region22: #{conv1d_model_forward.1} parent=11 // pred_check_branch
          %217 = sbr.rel (%p215) target = $region24
        $region23: #{conv1d_model_forward.1} parent=11 // pred_region
          _
        $region24: #{conv1d_model_forward.1} parent=11 // pred_fallthru
          _
        // Predicated region
        $region25: #{conv1d_model_forward.1} parent=11 // pred_check
          %p218 = pneg %p126
        $region26: #{conv1d_model_forward.1} parent=11 // pred_check_branch
          %220 = sbr.rel (%p218) target = $region28
        $region27: #{conv1d_model_forward.1} parent=11 // pred_region
          _
        $region28: #{conv1d_model_forward.1} parent=11 // pred_fallthru
          _
        // Predicated region
        $region29: #{conv1d_model_forward.1} parent=11 // pred_check
          %p221 = pneg %p147
        $region30: #{conv1d_model_forward.1} parent=11 // pred_check_branch
          %223 = sbr.rel (%p221) target = $region32
        $region31: #{conv1d_model_forward.1} parent=11 // pred_region
          _
        $region32: #{conv1d_model_forward.1} parent=11 // pred_fallthru
          _
        // Predicated region
        $region33: #{conv1d_model_forward.1} parent=11 // pred_check
          %p224 = pneg %p168
        $region34: #{conv1d_model_forward.1} parent=11 // pred_check_branch
          %226 = sbr.rel (%p224) target = $region36
        $region35: #{conv1d_model_forward.1} parent=11 // pred_region
          _
        $region36: #{conv1d_model_forward.1} parent=11 // pred_fallthru
          _
      $region12: #{conv1d_model_forward.1} parent=5 // pred_fallthru
        _
      %p227 = scmp.lt.s32.totalorder %s16, 2
      // Predicated region
      $region37: #{conv1d_model_forward.1} parent=5 // pred_check
        %p228 = pneg %p227
      $region38: #{conv1d_model_forward.1} parent=5 // pred_check_branch
        %230 = sbr.rel (%p228) target = $region40
      $region39: #{conv1d_model_forward.1} parent=5 // pred_region
        // Predicated region
        $region41: #{conv1d_model_forward.1} parent=39 // pred_check
          %p231 = pneg %p36
        $region42: #{conv1d_model_forward.1} parent=39 // pred_check_branch
          %233 = sbr.rel (%p231) target = $region44
        $region43: #{conv1d_model_forward.1} parent=39 // pred_region
          %p234 = scmp.lt.s32.totalorder %s16, 1
          %s235 = scalar_select %p234, %s16, 1
          %s236 = smul.addr %s235, 12
          %s237 = smul.addr %s236, 8
          %s238 = scalar_lea.vmem %s0, %s237
        $region44: #{conv1d_model_forward.1} parent=39 // pred_fallthru
          _
      $region40: #{conv1d_model_forward.1} parent=5 // pred_fallthru
        _
      %p239 = scmp.le.s32.totalorder 1, %s16
      %p240 = scmp.lt.s32.totalorder %s16, 3
      %p241 = pnand %p239, %p240
      %p242 = pneg %p241
      // Predicated region
      $region45: #{conv1d_model_forward.1} parent=5 // pred_check
        _
      $region46: #{conv1d_model_forward.1} parent=5 // pred_check_branch
        %244 = sbr.rel (%p241) target = $region48
      $region47: #{conv1d_model_forward.1} parent=5 // pred_region
        %s245 = ssub.s32 %s16, 1
        %p246 = scmp.lt.s32.totalorder %s21, 1
        %s247 = scalar_select %p246, %s21, 1
        %s248 = smul.addr %s247, 12
        %s249 = smul.addr %s248, 8
        %s250 = scalar_lea.vmem %s0, %s249
        %p251 = pneg %p42
        %p252 = pneg %p39
        %p253 = pneg %p63
        %p254 = pneg %p60
        %p255 = pneg %p84
        %p256 = pneg %p81
        %p257 = pneg %p105
        %p258 = pneg %p102
        %p259 = pneg %p126
        %p260 = pneg %p123
        %p261 = pneg %p147
        %p262 = pneg %p144
        %p263 = pneg %p168
        %p264 = pneg %p165
        %p265 = pneg %p194
        %p266 = pneg %p191
        %s267 = sand.u32 %s181, 1
        %s268 = scalar_lea.sflag [#allocation3], %s267
        %s269 = sand.u32 %s181, 1
        %s270 = scalar_lea.vmem [#allocation2], %s269
        %p271 = scmp.lt.s32.totalorder %s21, 1
        %s272 = scalar_select %p271, %s21, 1
        %s273 = smul.addr %s272, 12
        %s274 = smul.addr %s273, 8
        %s275 = scalar_lea.vmem %s0, %s274
        %v276 = vld [vmem:[%s1] sm:$0xff]
        %v277 = vld [vmem:[%s1 + $0x8] sm:$0xff]
        %v278 = vld [vmem:[%s1 + $0x10] sm:$0xff]
        %v279 = vld [vmem:[%s1 + $0x18] sm:$0xff]
        %v280 = vld [vmem:[%s2] sm:$0xff]
        %v281 = vld [vmem:[%s2 + $0x8] sm:$0xff]
        %v282 = vld [vmem:[%s2 + $0x10] sm:$0xff]
        %v283 = vld [vmem:[%s2 + $0x18] sm:$0xff]
        %v284 = vld [vmem:[%s275] sm:$0x1f]
        %v285 = vld [vmem:[%s275 + $0x8] sm:$0x1f]
        %v286 = vld [vmem:[%s275 + $0x10] sm:$0x1f]
        %288 = vset.pattern.permute.xlu0 0
        %289 = vperm.xlu0 %288, %v280
        %v290 = vpop.permute.xlu0 %289
        %293 = vset.pattern.permute.xlu0 0
        %294 = vperm.xlu0 %293, %v281
        %v295 = vpop.permute.xlu0 %294
        %298 = vset.pattern.permute.xlu0 0
        %299 = vperm.xlu0 %298, %v282
        %v300 = vpop.permute.xlu0 %299
        %303 = vset.pattern.permute.xlu0 0
        %304 = vperm.xlu0 %303, %v283
        %v305 = vpop.permute.xlu0 %304
        %vm307 = vcmask 39936
        %v309 = vsel %vm307, %v276, 0
        %v312 = vsel %vm307, %v277, 0
        %v315 = vsel %vm307, %v278, 0
        %v318 = vsel %vm307, %v279, 0
        %vm320 = vcmask 1044480
        %v322 = vsel %vm320, %v284, 0
        %v325 = vsel %vm320, %v285, 0
        %v328 = vsel %vm320, %v286, 0
        %330 = vmatprep.subr.mxu0 %v325
        %331 = vmatpush1.msra.mxu0 %v322
        %332 = vmatprep.subr.mxu0 0.0
        %333 = vmatpush1.msra.mxu0 0.0
        %334 = vmatprep.subr.mxu0 0.0
        %335 = vmatpush1.msra.mxu0 0.0
        %336 = vmatprep.subr.mxu0 0.0
        %337 = vmatpush1.msra.mxu0 0.0
        %338 = vmatprep.subr.mxu0 0.0
        %339 = vmatpush1.msra.mxu0 0.0
        %340 = vmatprep.subr.mxu0 0.0
        %341 = vmatpush1.msra.mxu0 0.0
        %342 = vmatprep.subr.mxu0 0.0
        %343 = vmatpush1.msra.mxu0 0.0
        %344 = vmatprep.subr.mxu0 0.0
        %345 = vmatpush1.msra.mxu0 0.0
        %346 = vmatprep.subr.mxu0 0.0
        %347 = vmatpush1.msra.mxu0 0.0
        %348 = vmatprep.subr.mxu0 0.0
        %349 = vmatpush1.msra.mxu0 0.0
        %350 = vmatprep.subr.mxu0 0.0
        %351 = vmatpush1.msra.mxu0 0.0
        %352 = vmatprep.subr.mxu0 0.0
        %353 = vmatpush1.msra.mxu0 0.0
        %354 = vmatprep.subr.mxu0 0.0
        %355 = vmatpush1.msra.mxu0 0.0
        %356 = vmatprep.subr.mxu0 0.0
        %357 = vmatpush1.msra.mxu0 0.0
        %358 = vmatprep.subr.mxu0 0.0
        %359 = vmatpush1.msra.mxu0 0.0
        %360 = vmatprep.subr.mxu0 0.0
        %361 = vmatpush1.msra.mxu0 0.0
        %362 = vmatprep.subr.mxu0 0.0
        %363 = vmatpush1.msra.mxu0 0.0
        %364 = vmatprep.subr.mxu0 0.0
        %365 = vmatpush1.msra.mxu0 0.0
        %366 = vmatprep.subr.mxu0 0.0
        %367 = vmatpush1.msra.mxu0 0.0
        %368 = vmatprep.subr.mxu0 0.0
        %369 = vmatpush1.msra.mxu0 0.0
        %370 = vmatprep.subr.mxu0 0.0
        %371 = vmatpush1.msra.mxu0 0.0
        %372 = vmatprep.subr.mxu0 0.0
        %373 = vmatpush1.msra.mxu0 0.0
        %374 = vmatprep.subr.mxu0 0.0
        %375 = vmatpush1.msra.mxu0 0.0
        %376 = vmatprep.subr.mxu0 0.0
        %377 = vmatpush1.msra.mxu0 0.0
        %378 = vmatprep.subr.mxu0 0.0
        %379 = vmatpush1.msra.mxu0 0.0
        %380 = vmatprep.subr.mxu0 0.0
        %381 = vmatpush1.msra.mxu0 0.0
        %382 = vmatprep.subr.mxu0 0.0
        %383 = vmatpush1.msra.mxu0 0.0
        %384 = vmatprep.subr.mxu0 0.0
        %385 = vmatpush1.msra.mxu0 0.0
        %386 = vmatprep.subr.mxu0 0.0
        %387 = vmatpush1.msra.mxu0 0.0
        %388 = vmatprep.subr.mxu0 0.0
        %389 = vmatpush1.msra.mxu0 0.0
        %390 = vmatprep.subr.mxu0 0.0
        %391 = vmatpush1.msra.mxu0 0.0
        %392 = vmatprep.subr.mxu0 0.0
        %393 = vmatpush1.msra.mxu0 0.0
        %394 = vmatprep.mubr.f32.mxu0 0.0
        %395 = vmatmul.mubr.f32.gmra.mrb[0].mxu0 %v309
        %v396 = vpop.f32.mrb[0].mxu0
        %v397 = vadd.f32 %v290, %v396
        %v398 = vpop.f32.mrb[0].mxu0
        %v399 = vadd.f32 %v290, %v398
        %400 = vmatprep.mubr.f32.mxu0 0.0
        %401 = vmatmul.mubr.f32.gmra.mrb[0].mxu0 %v312
        %v402 = vpop.f32.mrb[0].mxu0
        %v403 = vadd.f32 %v295, %v402
        %v404 = vpop.f32.mrb[0].mxu0
        %v405 = vadd.f32 %v295, %v404
        %406 = vmatprep.mubr.f32.mxu0 0.0
        %407 = vmatmul.mubr.f32.gmra.mrb[0].mxu0 %v315
        %v408 = vpop.f32.mrb[0].mxu0
        %v409 = vadd.f32 %v300, %v408
        %v410 = vpop.f32.mrb[0].mxu0
        %v411 = vadd.f32 %v300, %v410
        %412 = vmatprep.mubr.f32.mxu0 0.0
        %413 = vmatmul.mubr.f32.gmra.mrb[0].mxu0 %v318
        %v414 = vpop.f32.mrb[0].mxu0
        %v415 = vadd.f32 %v305, %v414
        %v416 = vpop.f32.mrb[0].mxu0
        %v417 = vadd.f32 %v305, %v416
        %418 = vdwg.mxu0
        %419 = vmatprep.subr.mxu0 0.0
        %420 = vmatpush1.msra.mxu0 %v328
        %421 = vmatprep.subr.mxu0 0.0
        %422 = vmatpush1.msra.mxu0 0.0
        %423 = vmatprep.subr.mxu0 0.0
        %424 = vmatpush1.msra.mxu0 0.0
        %425 = vmatprep.subr.mxu0 0.0
        %426 = vmatpush1.msra.mxu0 0.0
        %427 = vmatprep.subr.mxu0 0.0
        %428 = vmatpush1.msra.mxu0 0.0
        %429 = vmatprep.subr.mxu0 0.0
        %430 = vmatpush1.msra.mxu0 0.0
        %431 = vmatprep.subr.mxu0 0.0
        %432 = vmatpush1.msra.mxu0 0.0
        %433 = vmatprep.subr.mxu0 0.0
        %434 = vmatpush1.msra.mxu0 0.0
        %435 = vmatprep.subr.mxu0 0.0
        %436 = vmatpush1.msra.mxu0 0.0
        %437 = vmatprep.subr.mxu0 0.0
        %438 = vmatpush1.msra.mxu0 0.0
        %439 = vmatprep.subr.mxu0 0.0
        %440 = vmatpush1.msra.mxu0 0.0
        %441 = vmatprep.subr.mxu0 0.0
        %442 = vmatpush1.msra.mxu0 0.0
        %443 = vmatprep.subr.mxu0 0.0
        %444 = vmatpush1.msra.mxu0 0.0
        %445 = vmatprep.subr.mxu0 0.0
        %446 = vmatpush1.msra.mxu0 0.0
        %447 = vmatprep.subr.mxu0 0.0
        %448 = vmatpush1.msra.mxu0 0.0
        %449 = vmatprep.subr.mxu0 0.0
        %450 = vmatpush1.msra.mxu0 0.0
        %451 = vmatprep.subr.mxu0 0.0
        %452 = vmatpush1.msra.mxu0 0.0
        %453 = vmatprep.subr.mxu0 0.0
        %454 = vmatpush1.msra.mxu0 0.0
        %455 = vmatprep.subr.mxu0 0.0
        %456 = vmatpush1.msra.mxu0 0.0
        %457 = vmatprep.subr.mxu0 0.0
        %458 = vmatpush1.msra.mxu0 0.0
        %459 = vmatprep.subr.mxu0 0.0
        %460 = vmatpush1.msra.mxu0 0.0
        %461 = vmatprep.subr.mxu0 0.0
        %462 = vmatpush1.msra.mxu0 0.0
        %463 = vmatprep.subr.mxu0 0.0
        %464 = vmatpush1.msra.mxu0 0.0
        %465 = vmatprep.subr.mxu0 0.0
        %466 = vmatpush1.msra.mxu0 0.0
        %467 = vmatprep.subr.mxu0 0.0
        %468 = vmatpush1.msra.mxu0 0.0
        %469 = vmatprep.subr.mxu0 0.0
        %470 = vmatpush1.msra.mxu0 0.0
        %471 = vmatprep.subr.mxu0 0.0
        %472 = vmatpush1.msra.mxu0 0.0
        %473 = vmatprep.subr.mxu0 0.0
        %474 = vmatpush1.msra.mxu0 0.0
        %475 = vmatprep.subr.mxu0 0.0
        %476 = vmatpush1.msra.mxu0 0.0
        %477 = vmatprep.subr.mxu0 0.0
        %478 = vmatpush1.msra.mxu0 0.0
        %479 = vmatprep.subr.mxu0 0.0
        %480 = vmatpush1.msra.mxu0 0.0
        %481 = vmatprep.subr.mxu0 0.0
        %482 = vmatpush1.msra.mxu0 0.0
        %483 = vmatprep.mubr.f32.mxu0 0.0
        %484 = vmatmul.mubr.f32.gmra.mrb[0].mxu0 %v309
        %v485 = vpop.f32.mrb[0].mxu0
        %v486 = vadd.f32 %v290, %v485
        %v487 = vpop.f32.mrb[0].mxu0
        %488 = vmatprep.mubr.f32.mxu0 0.0
        %489 = vmatmul.mubr.f32.gmra.mrb[0].mxu0 %v312
        %v490 = vpop.f32.mrb[0].mxu0
        %v491 = vadd.f32 %v295, %v490
        %v492 = vpop.f32.mrb[0].mxu0
        %493 = vmatprep.mubr.f32.mxu0 0.0
        %494 = vmatmul.mubr.f32.gmra.mrb[0].mxu0 %v315
        %v495 = vpop.f32.mrb[0].mxu0
        %v496 = vadd.f32 %v300, %v495
        %v497 = vpop.f32.mrb[0].mxu0
        %498 = vmatprep.mubr.f32.mxu0 0.0
        %499 = vmatmul.mubr.f32.gmra.mrb[0].mxu0 %v318
        %v500 = vpop.f32.mrb[0].mxu0
        %v501 = vadd.f32 %v305, %v500
        %v502 = vpop.f32.mrb[0].mxu0
        %503 = vdwg.mxu0
        %v504 = vmax.f32 %v397, 0.0
        %v505 = vmax.f32 %v399, 0.0
        %v506 = vmax.f32 %v486, 0.0
        %v507 = vmax.f32 %v403, 0.0
        %v508 = vmax.f32 %v405, 0.0
        %v509 = vmax.f32 %v491, 0.0
        %v510 = vmax.f32 %v409, 0.0
        %v511 = vmax.f32 %v411, 0.0
        %v512 = vmax.f32 %v496, 0.0
        %v513 = vmax.f32 %v415, 0.0
        %v514 = vmax.f32 %v417, 0.0
        %v515 = vmax.f32 %v501, 0.0
        %s516 = scalar_lea.vmem %s275, 24
        %v517 = vld [vmem:[%s516] sm:$0x1f]
        %v518 = vld [vmem:[%s516 + $0x8] sm:$0x1f]
        %v519 = vld [vmem:[%s516 + $0x10] sm:$0x1f]
        %v521 = vsel %vm320, %v517, 0
        %v524 = vsel %vm320, %v518, 0
        %v527 = vsel %vm320, %v519, 0
        %529 = vmatprep.subr.mxu0 %v524
        %530 = vmatpush1.msra.mxu0 %v521
        %531 = vmatprep.subr.mxu0 0.0
        %532 = vmatpush1.msra.mxu0 0.0
        %533 = vmatprep.subr.mxu0 0.0
        %534 = vmatpush1.msra.mxu0 0.0
        %535 = vmatprep.subr.mxu0 0.0
        %536 = vmatpush1.msra.mxu0 0.0
        %537 = vmatprep.subr.mxu0 0.0
        %538 = vmatpush1.msra.mxu0 0.0
        %539 = vmatprep.subr.mxu0 0.0
        %540 = vmatpush1.msra.mxu0 0.0
        %541 = vmatprep.subr.mxu0 0.0
        %542 = vmatpush1.msra.mxu0 0.0
        %543 = vmatprep.subr.mxu0 0.0
        %544 = vmatpush1.msra.mxu0 0.0
        %545 = vmatprep.subr.mxu0 0.0
        %546 = vmatpush1.msra.mxu0 0.0
        %547 = vmatprep.subr.mxu0 0.0
        %548 = vmatpush1.msra.mxu0 0.0
        %549 = vmatprep.subr.mxu0 0.0
        %550 = vmatpush1.msra.mxu0 0.0
        %551 = vmatprep.subr.mxu0 0.0
        %552 = vmatpush1.msra.mxu0 0.0
        %553 = vmatprep.subr.mxu0 0.0
        %554 = vmatpush1.msra.mxu0 0.0
        %555 = vmatprep.subr.mxu0 0.0
        %556 = vmatpush1.msra.mxu0 0.0
        %557 = vmatprep.subr.mxu0 0.0
        %558 = vmatpush1.msra.mxu0 0.0
        %559 = vmatprep.subr.mxu0 0.0
        %560 = vmatpush1.msra.mxu0 0.0
        %561 = vmatprep.subr.mxu0 0.0
        %562 = vmatpush1.msra.mxu0 0.0
        %563 = vmatprep.subr.mxu0 0.0
        %564 = vmatpush1.msra.mxu0 0.0
        %565 = vmatprep.subr.mxu0 0.0
        %566 = vmatpush1.msra.mxu0 0.0
        %567 = vmatprep.subr.mxu0 0.0
        %568 = vmatpush1.msra.mxu0 0.0
        %569 = vmatprep.subr.mxu0 0.0
        %570 = vmatpush1.msra.mxu0 0.0
        %571 = vmatprep.subr.mxu0 0.0
        %572 = vmatpush1.msra.mxu0 0.0
        %573 = vmatprep.subr.mxu0 0.0
        %574 = vmatpush1.msra.mxu0 0.0
        %575 = vmatprep.subr.mxu0 0.0
        %576 = vmatpush1.msra.mxu0 0.0
        %577 = vmatprep.subr.mxu0 0.0
        %578 = vmatpush1.msra.mxu0 0.0
        %579 = vmatprep.subr.mxu0 0.0
        %580 = vmatpush1.msra.mxu0 0.0
        %581 = vmatprep.subr.mxu0 0.0
        %582 = vmatpush1.msra.mxu0 0.0
        %583 = vmatprep.subr.mxu0 0.0
        %584 = vmatpush1.msra.mxu0 0.0
        %585 = vmatprep.subr.mxu0 0.0
        %586 = vmatpush1.msra.mxu0 0.0
        %587 = vmatprep.subr.mxu0 0.0
        %588 = vmatpush1.msra.mxu0 0.0
        %589 = vmatprep.subr.mxu0 0.0
        %590 = vmatpush1.msra.mxu0 0.0
        %591 = vmatprep.subr.mxu0 0.0
        %592 = vmatpush1.msra.mxu0 0.0
        %593 = vmatprep.mubr.f32.mxu0 0.0
        %594 = vmatmul.mubr.f32.gmra.mrb[0].mxu0 %v309
        %v595 = vpop.f32.mrb[0].mxu0
        %v596 = vadd.f32 %v290, %v595
        %v597 = vpop.f32.mrb[0].mxu0
        %v598 = vadd.f32 %v290, %v597
        %599 = vmatprep.mubr.f32.mxu0 0.0
        %600 = vmatmul.mubr.f32.gmra.mrb[0].mxu0 %v312
        %v601 = vpop.f32.mrb[0].mxu0
        %v602 = vadd.f32 %v295, %v601
        %v603 = vpop.f32.mrb[0].mxu0
        %v604 = vadd.f32 %v295, %v603
        %605 = vmatprep.mubr.f32.mxu0 0.0
        %606 = vmatmul.mubr.f32.gmra.mrb[0].mxu0 %v315
        %v607 = vpop.f32.mrb[0].mxu0
        %v608 = vadd.f32 %v300, %v607
        %v609 = vpop.f32.mrb[0].mxu0
        %v610 = vadd.f32 %v300, %v609
        %611 = vmatprep.mubr.f32.mxu0 0.0
        %612 = vmatmul.mubr.f32.gmra.mrb[0].mxu0 %v318
        %v613 = vpop.f32.mrb[0].mxu0
        %v614 = vadd.f32 %v305, %v613
        %v615 = vpop.f32.mrb[0].mxu0
        %v616 = vadd.f32 %v305, %v615
        %617 = vdwg.mxu0
        %618 = vmatprep.subr.mxu0 0.0
        %619 = vmatpush1.msra.mxu0 %v527
        %620 = vmatprep.subr.mxu0 0.0
        %621 = vmatpush1.msra.mxu0 0.0
        %622 = vmatprep.subr.mxu0 0.0
        %623 = vmatpush1.msra.mxu0 0.0
        %624 = vmatprep.subr.mxu0 0.0
        %625 = vmatpush1.msra.mxu0 0.0
        %626 = vmatprep.subr.mxu0 0.0
        %627 = vmatpush1.msra.mxu0 0.0
        %628 = vmatprep.subr.mxu0 0.0
        %629 = vmatpush1.msra.mxu0 0.0
        %630 = vmatprep.subr.mxu0 0.0
        %631 = vmatpush1.msra.mxu0 0.0
        %632 = vmatprep.subr.mxu0 0.0
        %633 = vmatpush1.msra.mxu0 0.0
        %634 = vmatprep.subr.mxu0 0.0
        %635 = vmatpush1.msra.mxu0 0.0
        %636 = vmatprep.subr.mxu0 0.0
        %637 = vmatpush1.msra.mxu0 0.0
        %638 = vmatprep.subr.mxu0 0.0
        %639 = vmatpush1.msra.mxu0 0.0
        %640 = vmatprep.subr.mxu0 0.0
        %641 = vmatpush1.msra.mxu0 0.0
        %642 = vmatprep.subr.mxu0 0.0
        %643 = vmatpush1.msra.mxu0 0.0
        %644 = vmatprep.subr.mxu0 0.0
        %645 = vmatpush1.msra.mxu0 0.0
        %646 = vmatprep.subr.mxu0 0.0
        %647 = vmatpush1.msra.mxu0 0.0
        %648 = vmatprep.subr.mxu0 0.0
        %649 = vmatpush1.msra.mxu0 0.0
        %650 = vmatprep.subr.mxu0 0.0
        %651 = vmatpush1.msra.mxu0 0.0
        %652 = vmatprep.subr.mxu0 0.0
        %653 = vmatpush1.msra.mxu0 0.0
        %654 = vmatprep.subr.mxu0 0.0
        %655 = vmatpush1.msra.mxu0 0.0
        %656 = vmatprep.subr.mxu0 0.0
        %657 = vmatpush1.msra.mxu0 0.0
        %658 = vmatprep.subr.mxu0 0.0
        %659 = vmatpush1.msra.mxu0 0.0
        %660 = vmatprep.subr.mxu0 0.0
        %661 = vmatpush1.msra.mxu0 0.0
        %662 = vmatprep.subr.mxu0 0.0
        %663 = vmatpush1.msra.mxu0 0.0
        %664 = vmatprep.subr.mxu0 0.0
        %665 = vmatpush1.msra.mxu0 0.0
        %666 = vmatprep.subr.mxu0 0.0
        %667 = vmatpush1.msra.mxu0 0.0
        %668 = vmatprep.subr.mxu0 0.0
        %669 = vmatpush1.msra.mxu0 0.0
        %670 = vmatprep.subr.mxu0 0.0
        %671 = vmatpush1.msra.mxu0 0.0
        %672 = vmatprep.subr.mxu0 0.0
        %673 = vmatpush1.msra.mxu0 0.0
        %674 = vmatprep.subr.mxu0 0.0
        %675 = vmatpush1.msra.mxu0 0.0
        %676 = vmatprep.subr.mxu0 0.0
        %677 = vmatpush1.msra.mxu0 0.0
        %678 = vmatprep.subr.mxu0 0.0
        %679 = vmatpush1.msra.mxu0 0.0
        %680 = vmatprep.subr.mxu0 0.0
        %681 = vmatpush1.msra.mxu0 0.0
        %682 = vmatprep.mubr.f32.mxu0 0.0
        %683 = vmatmul.mubr.f32.gmra.mrb[0].mxu0 %v309
        %v684 = vpop.f32.mrb[0].mxu0
        %v685 = vadd.f32 %v290, %v684
        %v686 = vpop.f32.mrb[0].mxu0
        %687 = vmatprep.mubr.f32.mxu0 0.0
        %688 = vmatmul.mubr.f32.gmra.mrb[0].mxu0 %v312
        %v689 = vpop.f32.mrb[0].mxu0
        %v690 = vadd.f32 %v295, %v689
        %v691 = vpop.f32.mrb[0].mxu0
        %692 = vmatprep.mubr.f32.mxu0 0.0
        %693 = vmatmul.mubr.f32.gmra.mrb[0].mxu0 %v315
        %v694 = vpop.f32.mrb[0].mxu0
        %v695 = vadd.f32 %v300, %v694
        %v696 = vpop.f32.mrb[0].mxu0
        %697 = vmatprep.mubr.f32.mxu0 0.0
        %698 = vmatmul.mubr.f32.gmra.mrb[0].mxu0 %v318
        %v699 = vpop.f32.mrb[0].mxu0
        %v700 = vadd.f32 %v305, %v699
        %v701 = vpop.f32.mrb[0].mxu0
        %702 = vdwg.mxu0
        %v703 = vmax.f32 %v596, 0.0
        %v704 = vmax.f32 %v598, 0.0
        %v705 = vmax.f32 %v685, 0.0
        %v706 = vmax.f32 %v602, 0.0
        %v707 = vmax.f32 %v604, 0.0
        %v708 = vmax.f32 %v690, 0.0
        %v709 = vmax.f32 %v608, 0.0
        %v710 = vmax.f32 %v610, 0.0
        %v711 = vmax.f32 %v695, 0.0
        %v712 = vmax.f32 %v614, 0.0
        %v713 = vmax.f32 %v616, 0.0
        %v714 = vmax.f32 %v700, 0.0
        %s715 = scalar_lea.vmem %s275, 48
        %v716 = vld [vmem:[%s715] sm:$0x1f]
        %v717 = vld [vmem:[%s715 + $0x8] sm:$0x1f]
        %v718 = vld [vmem:[%s715 + $0x10] sm:$0x1f]
        %v720 = vsel %vm320, %v716, 0
        %v723 = vsel %vm320, %v717, 0
        %v726 = vsel %vm320, %v718, 0
        %728 = vmatprep.subr.mxu0 %v723
        %729 = vmatpush1.msra.mxu0 %v720
        %730 = vmatprep.subr.mxu0 0.0
        %731 = vmatpush1.msra.mxu0 0.0
        %732 = vmatprep.subr.mxu0 0.0
        %733 = vmatpush1.msra.mxu0 0.0
        %734 = vmatprep.subr.mxu0 0.0
        %735 = vmatpush1.msra.mxu0 0.0
        %736 = vmatprep.subr.mxu0 0.0
        %737 = vmatpush1.msra.mxu0 0.0
        %738 = vmatprep.subr.mxu0 0.0
        %739 = vmatpush1.msra.mxu0 0.0
        %740 = vmatprep.subr.mxu0 0.0
        %741 = vmatpush1.msra.mxu0 0.0
        %742 = vmatprep.subr.mxu0 0.0
        %743 = vmatpush1.msra.mxu0 0.0
        %744 = vmatprep.subr.mxu0 0.0
        %745 = vmatpush1.msra.mxu0 0.0
        %746 = vmatprep.subr.mxu0 0.0
        %747 = vmatpush1.msra.mxu0 0.0
        %748 = vmatprep.subr.mxu0 0.0
        %749 = vmatpush1.msra.mxu0 0.0
        %750 = vmatprep.subr.mxu0 0.0
        %751 = vmatpush1.msra.mxu0 0.0
        %752 = vmatprep.subr.mxu0 0.0
        %753 = vmatpush1.msra.mxu0 0.0
        %754 = vmatprep.subr.mxu0 0.0
        %755 = vmatpush1.msra.mxu0 0.0
        %756 = vmatprep.subr.mxu0 0.0
        %757 = vmatpush1.msra.mxu0 0.0
        %758 = vmatprep.subr.mxu0 0.0
        %759 = vmatpush1.msra.mxu0 0.0
        %760 = vmatprep.subr.mxu0 0.0
        %761 = vmatpush1.msra.mxu0 0.0
        %762 = vmatprep.subr.mxu0 0.0
        %763 = vmatpush1.msra.mxu0 0.0
        %764 = vmatprep.subr.mxu0 0.0
        %765 = vmatpush1.msra.mxu0 0.0
        %766 = vmatprep.subr.mxu0 0.0
        %767 = vmatpush1.msra.mxu0 0.0
        %768 = vmatprep.subr.mxu0 0.0
        %769 = vmatpush1.msra.mxu0 0.0
        %770 = vmatprep.subr.mxu0 0.0
        %771 = vmatpush1.msra.mxu0 0.0
        %772 = vmatprep.subr.mxu0 0.0
        %773 = vmatpush1.msra.mxu0 0.0
        %774 = vmatprep.subr.mxu0 0.0
        %775 = vmatpush1.msra.mxu0 0.0
        %776 = vmatprep.subr.mxu0 0.0
        %777 = vmatpush1.msra.mxu0 0.0
        %778 = vmatprep.subr.mxu0 0.0
        %779 = vmatpush1.msra.mxu0 0.0
        %780 = vmatprep.subr.mxu0 0.0
        %781 = vmatpush1.msra.mxu0 0.0
        %782 = vmatprep.subr.mxu0 0.0
        %783 = vmatpush1.msra.mxu0 0.0
        %784 = vmatprep.subr.mxu0 0.0
        %785 = vmatpush1.msra.mxu0 0.0
        %786 = vmatprep.subr.mxu0 0.0
        %787 = vmatpush1.msra.mxu0 0.0
        %788 = vmatprep.subr.mxu0 0.0
        %789 = vmatpush1.msra.mxu0 0.0
        %790 = vmatprep.subr.mxu0 0.0
        %791 = vmatpush1.msra.mxu0 0.0
        %792 = vmatprep.mubr.f32.mxu0 0.0
        %793 = vmatmul.mubr.f32.gmra.mrb[0].mxu0 %v309
        %v794 = vpop.f32.mrb[0].mxu0
        %v795 = vadd.f32 %v290, %v794
        %v796 = vpop.f32.mrb[0].mxu0
        %v797 = vadd.f32 %v290, %v796
        %798 = vmatprep.mubr.f32.mxu0 0.0
        %799 = vmatmul.mubr.f32.gmra.mrb[0].mxu0 %v312
        %v800 = vpop.f32.mrb[0].mxu0
        %v801 = vadd.f32 %v295, %v800
        %v802 = vpop.f32.mrb[0].mxu0
        %v803 = vadd.f32 %v295, %v802
        %804 = vmatprep.mubr.f32.mxu0 0.0
        %805 = vmatmul.mubr.f32.gmra.mrb[0].mxu0 %v315
        %v806 = vpop.f32.mrb[0].mxu0
        %v807 = vadd.f32 %v300, %v806
        %v808 = vpop.f32.mrb[0].mxu0
        %v809 = vadd.f32 %v300, %v808
        %810 = vmatprep.mubr.f32.mxu0 0.0
        %811 = vmatmul.mubr.f32.gmra.mrb[0].mxu0 %v318
        %v812 = vpop.f32.mrb[0].mxu0
        %v813 = vadd.f32 %v305, %v812
        %v814 = vpop.f32.mrb[0].mxu0
        %v815 = vadd.f32 %v305, %v814
        %816 = vdwg.mxu0
        %817 = vmatprep.subr.mxu0 0.0
        %818 = vmatpush1.msra.mxu0 %v726
        %819 = vmatprep.subr.mxu0 0.0
        %820 = vmatpush1.msra.mxu0 0.0
        %821 = vmatprep.subr.mxu0 0.0
        %822 = vmatpush1.msra.mxu0 0.0
        %823 = vmatprep.subr.mxu0 0.0
        %824 = vmatpush1.msra.mxu0 0.0
        %825 = vmatprep.subr.mxu0 0.0
        %826 = vmatpush1.msra.mxu0 0.0
        %827 = vmatprep.subr.mxu0 0.0
        %828 = vmatpush1.msra.mxu0 0.0
        %829 = vmatprep.subr.mxu0 0.0
        %830 = vmatpush1.msra.mxu0 0.0
        %831 = vmatprep.subr.mxu0 0.0
        %832 = vmatpush1.msra.mxu0 0.0
        %833 = vmatprep.subr.mxu0 0.0
        %834 = vmatpush1.msra.mxu0 0.0
        %835 = vmatprep.subr.mxu0 0.0
        %836 = vmatpush1.msra.mxu0 0.0
        %837 = vmatprep.subr.mxu0 0.0
        %838 = vmatpush1.msra.mxu0 0.0
        %839 = vmatprep.subr.mxu0 0.0
        %840 = vmatpush1.msra.mxu0 0.0
        %841 = vmatprep.subr.mxu0 0.0
        %842 = vmatpush1.msra.mxu0 0.0
        %843 = vmatprep.subr.mxu0 0.0
        %844 = vmatpush1.msra.mxu0 0.0
        %845 = vmatprep.subr.mxu0 0.0
        %846 = vmatpush1.msra.mxu0 0.0
        %847 = vmatprep.subr.mxu0 0.0
        %848 = vmatpush1.msra.mxu0 0.0
        %849 = vmatprep.subr.mxu0 0.0
        %850 = vmatpush1.msra.mxu0 0.0
        %851 = vmatprep.subr.mxu0 0.0
        %852 = vmatpush1.msra.mxu0 0.0
        %853 = vmatprep.subr.mxu0 0.0
        %854 = vmatpush1.msra.mxu0 0.0
        %855 = vmatprep.subr.mxu0 0.0
        %856 = vmatpush1.msra.mxu0 0.0
        %857 = vmatprep.subr.mxu0 0.0
        %858 = vmatpush1.msra.mxu0 0.0
        %859 = vmatprep.subr.mxu0 0.0
        %860 = vmatpush1.msra.mxu0 0.0
        %861 = vmatprep.subr.mxu0 0.0
        %862 = vmatpush1.msra.mxu0 0.0
        %863 = vmatprep.subr.mxu0 0.0
        %864 = vmatpush1.msra.mxu0 0.0
        %865 = vmatprep.subr.mxu0 0.0
        %866 = vmatpush1.msra.mxu0 0.0
        %867 = vmatprep.subr.mxu0 0.0
        %868 = vmatpush1.msra.mxu0 0.0
        %869 = vmatprep.subr.mxu0 0.0
        %870 = vmatpush1.msra.mxu0 0.0
        %871 = vmatprep.subr.mxu0 0.0
        %872 = vmatpush1.msra.mxu0 0.0
        %873 = vmatprep.subr.mxu0 0.0
        %874 = vmatpush1.msra.mxu0 0.0
        %875 = vmatprep.subr.mxu0 0.0
        %876 = vmatpush1.msra.mxu0 0.0
        %877 = vmatprep.subr.mxu0 0.0
        %878 = vmatpush1.msra.mxu0 0.0
        %879 = vmatprep.subr.mxu0 0.0
        %880 = vmatpush1.msra.mxu0 0.0
        %881 = vmatprep.mubr.f32.mxu0 0.0
        %882 = vmatmul.mubr.f32.gmra.mrb[0].mxu0 %v309
        %v883 = vpop.f32.mrb[0].mxu0
        %v884 = vadd.f32 %v290, %v883
        %v885 = vpop.f32.mrb[0].mxu0
        %886 = vmatprep.mubr.f32.mxu0 0.0
        %887 = vmatmul.mubr.f32.gmra.mrb[0].mxu0 %v312
        %v888 = vpop.f32.mrb[0].mxu0
        %v889 = vadd.f32 %v295, %v888
        %v890 = vpop.f32.mrb[0].mxu0
        %891 = vmatprep.mubr.f32.mxu0 0.0
        %892 = vmatmul.mubr.f32.gmra.mrb[0].mxu0 %v315
        %v893 = vpop.f32.mrb[0].mxu0
        %v894 = vadd.f32 %v300, %v893
        %v895 = vpop.f32.mrb[0].mxu0
        %896 = vmatprep.mubr.f32.mxu0 0.0
        %897 = vmatmul.mubr.f32.gmra.mrb[0].mxu0 %v318
        %v898 = vpop.f32.mrb[0].mxu0
        %v899 = vadd.f32 %v305, %v898
        %v900 = vpop.f32.mrb[0].mxu0
        %901 = vdwg.mxu0
        %v902 = vmax.f32 %v795, 0.0
        %v903 = vmax.f32 %v797, 0.0
        %v904 = vmax.f32 %v884, 0.0
        %v905 = vmax.f32 %v801, 0.0
        %v906 = vmax.f32 %v803, 0.0
        %v907 = vmax.f32 %v889, 0.0
        %v908 = vmax.f32 %v807, 0.0
        %v909 = vmax.f32 %v809, 0.0
        %v910 = vmax.f32 %v894, 0.0
        %v911 = vmax.f32 %v813, 0.0
        %v912 = vmax.f32 %v815, 0.0
        %v913 = vmax.f32 %v899, 0.0
        %s914 = scalar_lea.vmem %s275, 72
        %v915 = vld [vmem:[%s914] sm:$0x1f]
        %v916 = vld [vmem:[%s914 + $0x8] sm:$0x1f]
        %v917 = vld [vmem:[%s914 + $0x10] sm:$0x1f]
        %v919 = vsel %vm320, %v915, 0
        %v922 = vsel %vm320, %v916, 0
        %v925 = vsel %vm320, %v917, 0
        %927 = vmatprep.subr.mxu0 %v922
        %928 = vmatpush1.msra.mxu0 %v919
        %929 = vmatprep.subr.mxu0 0.0
        %930 = vmatpush1.msra.mxu0 0.0
        %931 = vmatprep.subr.mxu0 0.0
        %932 = vmatpush1.msra.mxu0 0.0
        %933 = vmatprep.subr.mxu0 0.0
        %934 = vmatpush1.msra.mxu0 0.0
        %935 = vmatprep.subr.mxu0 0.0
        %936 = vmatpush1.msra.mxu0 0.0
        %937 = vmatprep.subr.mxu0 0.0
        %938 = vmatpush1.msra.mxu0 0.0
        %939 = vmatprep.subr.mxu0 0.0
        %940 = vmatpush1.msra.mxu0 0.0
        %941 = vmatprep.subr.mxu0 0.0
        %942 = vmatpush1.msra.mxu0 0.0
        %943 = vmatprep.subr.mxu0 0.0
        %944 = vmatpush1.msra.mxu0 0.0
        %945 = vmatprep.subr.mxu0 0.0
        %946 = vmatpush1.msra.mxu0 0.0
        %947 = vmatprep.subr.mxu0 0.0
        %948 = vmatpush1.msra.mxu0 0.0
        %949 = vmatprep.subr.mxu0 0.0
        %950 = vmatpush1.msra.mxu0 0.0
        %951 = vmatprep.subr.mxu0 0.0
        %952 = vmatpush1.msra.mxu0 0.0
        %953 = vmatprep.subr.mxu0 0.0
        %954 = vmatpush1.msra.mxu0 0.0
        %955 = vmatprep.subr.mxu0 0.0
        %956 = vmatpush1.msra.mxu0 0.0
        %957 = vmatprep.subr.mxu0 0.0
        %958 = vmatpush1.msra.mxu0 0.0
        %959 = vmatprep.subr.mxu0 0.0
        %960 = vmatpush1.msra.mxu0 0.0
        %961 = vmatprep.subr.mxu0 0.0
        %962 = vmatpush1.msra.mxu0 0.0
        %963 = vmatprep.subr.mxu0 0.0
        %964 = vmatpush1.msra.mxu0 0.0
        %965 = vmatprep.subr.mxu0 0.0
        %966 = vmatpush1.msra.mxu0 0.0
        %967 = vmatprep.subr.mxu0 0.0
        %968 = vmatpush1.msra.mxu0 0.0
        %969 = vmatprep.subr.mxu0 0.0
        %970 = vmatpush1.msra.mxu0 0.0
        %971 = vmatprep.subr.mxu0 0.0
        %972 = vmatpush1.msra.mxu0 0.0
        %973 = vmatprep.subr.mxu0 0.0
        %974 = vmatpush1.msra.mxu0 0.0
        %975 = vmatprep.subr.mxu0 0.0
        %976 = vmatpush1.msra.mxu0 0.0
        %977 = vmatprep.subr.mxu0 0.0
        %978 = vmatpush1.msra.mxu0 0.0
        %979 = vmatprep.subr.mxu0 0.0
        %980 = vmatpush1.msra.mxu0 0.0
        %981 = vmatprep.subr.mxu0 0.0
        %982 = vmatpush1.msra.mxu0 0.0
        %983 = vmatprep.subr.mxu0 0.0
        %984 = vmatpush1.msra.mxu0 0.0
        %985 = vmatprep.subr.mxu0 0.0
        %986 = vmatpush1.msra.mxu0 0.0
        %987 = vmatprep.subr.mxu0 0.0
        %988 = vmatpush1.msra.mxu0 0.0
        %989 = vmatprep.subr.mxu0 0.0
        %990 = vmatpush1.msra.mxu0 0.0
        %991 = vmatprep.mubr.f32.mxu0 0.0
        %992 = vmatmul.mubr.f32.gmra.mrb[0].mxu0 %v309
        %v993 = vpop.f32.mrb[0].mxu0
        %v994 = vadd.f32 %v290, %v993
        %v995 = vpop.f32.mrb[0].mxu0
        %v996 = vadd.f32 %v290, %v995
        %997 = vmatprep.mubr.f32.mxu0 0.0
        %998 = vmatmul.mubr.f32.gmra.mrb[0].mxu0 %v312
        %v999 = vpop.f32.mrb[0].mxu0
        %v1000 = vadd.f32 %v295, %v999
        %v1001 = vpop.f32.mrb[0].mxu0
        %v1002 = vadd.f32 %v295, %v1001
        %1003 = vmatprep.mubr.f32.mxu0 0.0
        %1004 = vmatmul.mubr.f32.gmra.mrb[0].mxu0 %v315
        %v1005 = vpop.f32.mrb[0].mxu0
        %v1006 = vadd.f32 %v300, %v1005
        %v1007 = vpop.f32.mrb[0].mxu0
        %v1008 = vadd.f32 %v300, %v1007
        %1009 = vmatprep.mubr.f32.mxu0 0.0
        %1010 = vmatmul.mubr.f32.gmra.mrb[0].mxu0 %v318
        %v1011 = vpop.f32.mrb[0].mxu0
        %v1012 = vadd.f32 %v305, %v1011
        %v1013 = vpop.f32.mrb[0].mxu0
        %v1014 = vadd.f32 %v305, %v1013
        %1015 = vdwg.mxu0
        %1016 = vmatprep.subr.mxu0 0.0
        %1017 = vmatpush1.msra.mxu0 %v925
        %1018 = vmatprep.subr.mxu0 0.0
        %1019 = vmatpush1.msra.mxu0 0.0
        %1020 = vmatprep.subr.mxu0 0.0
        %1021 = vmatpush1.msra.mxu0 0.0
        %1022 = vmatprep.subr.mxu0 0.0
        %1023 = vmatpush1.msra.mxu0 0.0
        %1024 = vmatprep.subr.mxu0 0.0
        %1025 = vmatpush1.msra.mxu0 0.0
        %1026 = vmatprep.subr.mxu0 0.0
        %1027 = vmatpush1.msra.mxu0 0.0
        %1028 = vmatprep.subr.mxu0 0.0
        %1029 = vmatpush1.msra.mxu0 0.0
        %1030 = vmatprep.subr.mxu0 0.0
        %1031 = vmatpush1.msra.mxu0 0.0
        %1032 = vmatprep.subr.mxu0 0.0
        %1033 = vmatpush1.msra.mxu0 0.0
        %1034 = vmatprep.subr.mxu0 0.0
        %1035 = vmatpush1.msra.mxu0 0.0
        %1036 = vmatprep.subr.mxu0 0.0
        %1037 = vmatpush1.msra.mxu0 0.0
        %1038 = vmatprep.subr.mxu0 0.0
        %1039 = vmatpush1.msra.mxu0 0.0
        %1040 = vmatprep.subr.mxu0 0.0
        %1041 = vmatpush1.msra.mxu0 0.0
        %1042 = vmatprep.subr.mxu0 0.0
        %1043 = vmatpush1.msra.mxu0 0.0
        %1044 = vmatprep.subr.mxu0 0.0
        %1045 = vmatpush1.msra.mxu0 0.0
        %1046 = vmatprep.subr.mxu0 0.0
        %1047 = vmatpush1.msra.mxu0 0.0
        %1048 = vmatprep.subr.mxu0 0.0
        %1049 = vmatpush1.msra.mxu0 0.0
        %1050 = vmatprep.subr.mxu0 0.0
        %1051 = vmatpush1.msra.mxu0 0.0
        %1052 = vmatprep.subr.mxu0 0.0
        %1053 = vmatpush1.msra.mxu0 0.0
        %1054 = vmatprep.subr.mxu0 0.0
        %1055 = vmatpush1.msra.mxu0 0.0
        %1056 = vmatprep.subr.mxu0 0.0
        %1057 = vmatpush1.msra.mxu0 0.0
        %1058 = vmatprep.subr.mxu0 0.0
        %1059 = vmatpush1.msra.mxu0 0.0
        %1060 = vmatprep.subr.mxu0 0.0
        %1061 = vmatpush1.msra.mxu0 0.0
        %1062 = vmatprep.subr.mxu0 0.0
        %1063 = vmatpush1.msra.mxu0 0.0
        %1064 = vmatprep.subr.mxu0 0.0
        %1065 = vmatpush1.msra.mxu0 0.0
        %1066 = vmatprep.subr.mxu0 0.0
        %1067 = vmatpush1.msra.mxu0 0.0
        %1068 = vmatprep.subr.mxu0 0.0
        %1069 = vmatpush1.msra.mxu0 0.0
        %1070 = vmatprep.subr.mxu0 0.0
        %1071 = vmatpush1.msra.mxu0 0.0
        %1072 = vmatprep.subr.mxu0 0.0
        %1073 = vmatpush1.msra.mxu0 0.0
        %1074 = vmatprep.subr.mxu0 0.0
        %1075 = vmatpush1.msra.mxu0 0.0
        %1076 = vmatprep.subr.mxu0 0.0
        %1077 = vmatpush1.msra.mxu0 0.0
        %1078 = vmatprep.subr.mxu0 0.0
        %1079 = vmatpush1.msra.mxu0 0.0
        %1080 = vmatprep.mubr.f32.mxu0 0.0
        %1081 = vmatmul.mubr.f32.gmra.mrb[0].mxu0 %v309
        %v1082 = vpop.f32.mrb[0].mxu0
        %v1083 = vadd.f32 %v290, %v1082
        %v1084 = vpop.f32.mrb[0].mxu0
        %1085 = vmatprep.mubr.f32.mxu0 0.0
        %1086 = vmatmul.mubr.f32.gmra.mrb[0].mxu0 %v312
        %v1087 = vpop.f32.mrb[0].mxu0
        %v1088 = vadd.f32 %v295, %v1087
        %v1089 = vpop.f32.mrb[0].mxu0
        %1090 = vmatprep.mubr.f32.mxu0 0.0
        %1091 = vmatmul.mubr.f32.gmra.mrb[0].mxu0 %v315
        %v1092 = vpop.f32.mrb[0].mxu0
        %v1093 = vadd.f32 %v300, %v1092
        %v1094 = vpop.f32.mrb[0].mxu0
        %1095 = vmatprep.mubr.f32.mxu0 0.0
        %1096 = vmatmul.mubr.f32.gmra.mrb[0].mxu0 %v318
        %v1097 = vpop.f32.mrb[0].mxu0
        %v1098 = vadd.f32 %v305, %v1097
        %v1099 = vpop.f32.mrb[0].mxu0
        %1100 = vdwg.mxu0
        %v1101 = vmax.f32 %v994, 0.0
        %v1102 = vmax.f32 %v996, 0.0
        %v1103 = vmax.f32 %v1083, 0.0
        %v1104 = vmax.f32 %v1000, 0.0
        %v1105 = vmax.f32 %v1002, 0.0
        %v1106 = vmax.f32 %v1088, 0.0
        %v1107 = vmax.f32 %v1006, 0.0
        %v1108 = vmax.f32 %v1008, 0.0
        %v1109 = vmax.f32 %v1093, 0.0
        %v1110 = vmax.f32 %v1012, 0.0
        %v1111 = vmax.f32 %v1014, 0.0
        %v1112 = vmax.f32 %v1098, 0.0
        %v1113 = vmax.f32 %v504, %v703
        %v1114 = vmax.f32 %v505, %v704
        %v1115 = vmax.f32 %v506, %v705
        %v1116 = vmax.f32 %v507, %v706
        %v1117 = vmax.f32 %v508, %v707
        %v1118 = vmax.f32 %v509, %v708
        %v1119 = vmax.f32 %v510, %v709
        %v1120 = vmax.f32 %v511, %v710
        %v1121 = vmax.f32 %v512, %v711
        %v1122 = vmax.f32 %v513, %v712
        %v1123 = vmax.f32 %v514, %v713
        %v1124 = vmax.f32 %v515, %v714
        %v1125 = vmax.f32 %v902, %v1101
        %v1126 = vmax.f32 %v903, %v1102
        %v1127 = vmax.f32 %v904, %v1103
        %v1128 = vmax.f32 %v905, %v1104
        %v1129 = vmax.f32 %v906, %v1105
        %v1130 = vmax.f32 %v907, %v1106
        %v1131 = vmax.f32 %v908, %v1107
        %v1132 = vmax.f32 %v909, %v1108
        %v1133 = vmax.f32 %v910, %v1109
        %v1134 = vmax.f32 %v911, %v1110
        %v1135 = vmax.f32 %v912, %v1111
        %v1136 = vmax.f32 %v913, %v1112
        %v1137 = vld [vmem:[%s3] sm:$0xff]
        %v1138 = vld [vmem:[%s3 + $0x8] sm:$0xff]
        %v1139 = vld [vmem:[%s3 + $0x10] sm:$0xff]
        %v1140 = vld [vmem:[%s3 + $0x18] sm:$0xff]
        %v1141 = vld [vmem:[%s3 + $0x20] sm:$0xff]
        %v1142 = vld [vmem:[%s3 + $0x28] sm:$0xff]
        %v1143 = vld [vmem:[%s3 + $0x30] sm:$0xff]
        %v1144 = vld [vmem:[%s3 + $0x38] sm:$0xff]
        %s1145 = scalar_lea.vmem %s3, 64
        %v1146 = vld [vmem:[%s1145] sm:$0xff]
        %v1147 = vld [vmem:[%s1145 + $0x8] sm:$0xff]
        %v1148 = vld [vmem:[%s1145 + $0x10] sm:$0xff]
        %v1149 = vld [vmem:[%s1145 + $0x18] sm:$0xff]
        %v1150 = vld [vmem:[%s1145 + $0x20] sm:$0xff]
        %v1151 = vld [vmem:[%s1145 + $0x28] sm:$0xff]
        %v1152 = vld [vmem:[%s1145 + $0x30] sm:$0xff]
        %v1153 = vld [vmem:[%s1145 + $0x38] sm:$0xff]
        %s1154 = scalar_lea.vmem %s3, 128
        %v1155 = vld [vmem:[%s1154] sm:$0xff]
        %v1156 = vld [vmem:[%s1154 + $0x8] sm:$0xff]
        %v1157 = vld [vmem:[%s1154 + $0x10] sm:$0xff]
        %v1158 = vld [vmem:[%s1154 + $0x18] sm:$0xff]
        %v1159 = vld [vmem:[%s1154 + $0x20] sm:$0xff]
        %v1160 = vld [vmem:[%s1154 + $0x28] sm:$0xff]
        %v1161 = vld [vmem:[%s1154 + $0x30] sm:$0xff]
        %v1162 = vld [vmem:[%s1154 + $0x38] sm:$0xff]
        %s1163 = scalar_lea.vmem %s3, 192
        %v1164 = vld [vmem:[%s1163] sm:$0xff]
        %v1165 = vld [vmem:[%s1163 + $0x8] sm:$0xff]
        %v1166 = vld [vmem:[%s1163 + $0x10] sm:$0xff]
        %v1167 = vld [vmem:[%s1163 + $0x18] sm:$0xff]
        %v1168 = vld [vmem:[%s1163 + $0x20] sm:$0xff]
        %v1169 = vld [vmem:[%s1163 + $0x28] sm:$0xff]
        %v1170 = vld [vmem:[%s1163 + $0x30] sm:$0xff]
        %v1171 = vld [vmem:[%s1163 + $0x38] sm:$0xff]
        %s1172 = scalar_lea.vmem %s3, 256
        %v1173 = vld [vmem:[%s1172] sm:$0xff]
        %v1174 = vld [vmem:[%s1172 + $0x8] sm:$0xff]
        %v1175 = vld [vmem:[%s1172 + $0x10] sm:$0xff]
        %v1176 = vld [vmem:[%s1172 + $0x18] sm:$0xff]
        %v1177 = vld [vmem:[%s1172 + $0x20] sm:$0xff]
        %v1178 = vld [vmem:[%s1172 + $0x28] sm:$0xff]
        %v1179 = vld [vmem:[%s1172 + $0x30] sm:$0xff]
        %v1180 = vld [vmem:[%s1172 + $0x38] sm:$0xff]
        %v1181 = vld [vmem:[%s4] sm:$0xff]
        %v1182 = vld [vmem:[%s4 + $0x8] sm:$0xff]
        %v1183 = vld [vmem:[%s4 + $0x10] sm:$0xff]
        %v1184 = vld [vmem:[%s4 + $0x18] sm:$0xff]
        %v1185 = vld [vmem:[%s4 + $0x20] sm:$0xff]
        %v1186 = vld [vmem:[%s4 + $0x28] sm:$0xff]
        %v1187 = vld [vmem:[%s4 + $0x30] sm:$0xff]
        %v1188 = vld [vmem:[%s4 + $0x38] sm:$0xff]
        %vm1189 = vcmask 261120
        %v1191 = vsel %vm1189, %v1146, 0
        %v1194 = vsel %vm1189, %v1147, 0
        %v1197 = vsel %vm1189, %v1148, 0
        %v1200 = vsel %vm1189, %v1149, 0
        %v1203 = vsel %vm1189, %v1150, 0
        %v1206 = vsel %vm1189, %v1151, 0
        %v1209 = vsel %vm1189, %v1152, 0
        %v1212 = vsel %vm1189, %v1153, 0
        %1214 = vmatprep.subr.mxu0 %v1126
        %1215 = vmatpush1.msra.mxu0 %v1125
        %1216 = vmatprep.subr.mxu0 %v1129
        %1217 = vmatpush1.msra.mxu0 %v1128
        %1218 = vmatprep.subr.mxu0 %v1132
        %1219 = vmatpush1.msra.mxu0 %v1131
        %1220 = vmatprep.subr.mxu0 %v1135
        %1221 = vmatpush1.msra.mxu0 %v1134
        %1222 = vmatprep.subr.mxu0 0.0
        %1223 = vmatpush1.msra.mxu0 0.0
        %1224 = vmatprep.subr.mxu0 0.0
        %1225 = vmatpush1.msra.mxu0 0.0
        %1226 = vmatprep.subr.mxu0 0.0
        %1227 = vmatpush1.msra.mxu0 0.0
        %1228 = vmatprep.subr.mxu0 0.0
        %1229 = vmatpush1.msra.mxu0 0.0
        %1230 = vmatprep.subr.mxu0 0.0
        %1231 = vmatpush1.msra.mxu0 0.0
        %1232 = vmatprep.subr.mxu0 0.0
        %1233 = vmatpush1.msra.mxu0 0.0
        %1234 = vmatprep.subr.mxu0 0.0
        %1235 = vmatpush1.msra.mxu0 0.0
        %1236 = vmatprep.subr.mxu0 0.0
        %1237 = vmatpush1.msra.mxu0 0.0
        %1238 = vmatprep.subr.mxu0 0.0
        %1239 = vmatpush1.msra.mxu0 0.0
        %1240 = vmatprep.subr.mxu0 0.0
        %1241 = vmatpush1.msra.mxu0 0.0
        %1242 = vmatprep.subr.mxu0 0.0
        %1243 = vmatpush1.msra.mxu0 0.0
        %1244 = vmatprep.subr.mxu0 0.0
        %1245 = vmatpush1.msra.mxu0 0.0
        %1246 = vmatprep.subr.mxu0 0.0
        %1247 = vmatpush1.msra.mxu0 0.0
        %1248 = vmatprep.subr.mxu0 0.0
        %1249 = vmatpush1.msra.mxu0 0.0
        %1250 = vmatprep.subr.mxu0 0.0
        %1251 = vmatpush1.msra.mxu0 0.0
        %1252 = vmatprep.subr.mxu0 0.0
        %1253 = vmatpush1.msra.mxu0 0.0
        %1254 = vmatprep.subr.mxu0 0.0
        %1255 = vmatpush1.msra.mxu0 0.0
        %1256 = vmatprep.subr.mxu0 0.0
        %1257 = vmatpush1.msra.mxu0 0.0
        %1258 = vmatprep.subr.mxu0 0.0
        %1259 = vmatpush1.msra.mxu0 0.0
        %1260 = vmatprep.subr.mxu0 0.0
        %1261 = vmatpush1.msra.mxu0 0.0
        %1262 = vmatprep.subr.mxu0 0.0
        %1263 = vmatpush1.msra.mxu0 0.0
        %1264 = vmatprep.subr.mxu0 0.0
        %1265 = vmatpush1.msra.mxu0 0.0
        %1266 = vmatprep.subr.mxu0 0.0
        %1267 = vmatpush1.msra.mxu0 0.0
        %1268 = vmatprep.subr.mxu0 0.0
        %1269 = vmatpush1.msra.mxu0 0.0
        %1270 = vmatprep.subr.mxu0 0.0
        %1271 = vmatpush1.msra.mxu0 0.0
        %1272 = vmatprep.subr.mxu0 0.0
        %1273 = vmatpush1.msra.mxu0 0.0
        %1274 = vmatprep.subr.mxu0 0.0
        %1275 = vmatpush1.msra.mxu0 0.0
        %1276 = vmatprep.subr.mxu0 0.0
        %1277 = vmatpush1.msra.mxu0 0.0
        %1278 = vmatprep.mubr.f32.mxu0 0.0
        %1279 = vmatmul.mubr.f32.gmra.mrb[0].mxu0 %v1191
        %v1280 = vpop.f32.mrb[0].mxu0
        %v1281 = vadd.f32 0.0, %v1280
        %v1282 = vpop.f32.mrb[0].mxu0
        %v1283 = vadd.f32 0.0, %v1282
        %1284 = vmatprep.mubr.f32.mxu0 0.0
        %1285 = vmatmul.mubr.f32.gmra.mrb[0].mxu0 %v1194
        %v1286 = vpop.f32.mrb[0].mxu0
        %v1287 = vadd.f32 0.0, %v1286
        %v1288 = vpop.f32.mrb[0].mxu0
        %v1289 = vadd.f32 0.0, %v1288
        %1290 = vmatprep.mubr.f32.mxu0 0.0
        %1291 = vmatmul.mubr.f32.gmra.mrb[0].mxu0 %v1197
        %v1292 = vpop.f32.mrb[0].mxu0
        %v1293 = vadd.f32 0.0, %v1292
        %v1294 = vpop.f32.mrb[0].mxu0
        %v1295 = vadd.f32 0.0, %v1294
        %1296 = vmatprep.mubr.f32.mxu0 0.0
        %1297 = vmatmul.mubr.f32.gmra.mrb[0].mxu0 %v1200
        %v1298 = vpop.f32.mrb[0].mxu0
        %v1299 = vadd.f32 0.0, %v1298
        %v1300 = vpop.f32.mrb[0].mxu0
        %v1301 = vadd.f32 0.0, %v1300
        %1302 = vmatprep.mubr.f32.mxu0 0.0
        %1303 = vmatmul.mubr.f32.gmra.mrb[0].mxu0 %v1203
        %v1304 = vpop.f32.mrb[0].mxu0
        %v1305 = vadd.f32 0.0, %v1304
        %v1306 = vpop.f32.mrb[0].mxu0
        %v1307 = vadd.f32 0.0, %v1306
        %1308 = vmatprep.mubr.f32.mxu0 0.0
        %1309 = vmatmul.mubr.f32.gmra.mrb[0].mxu0 %v1206
        %v1310 = vpop.f32.mrb[0].mxu0
        %v1311 = vadd.f32 0.0, %v1310
        %v1312 = vpop.f32.mrb[0].mxu0
        %v1313 = vadd.f32 0.0, %v1312
        %1314 = vmatprep.mubr.f32.mxu0 0.0
        %1315 = vmatmul.mubr.f32.gmra.mrb[0].mxu0 %v1209
        %v1316 = vpop.f32.mrb[0].mxu0
        %v1317 = vadd.f32 0.0, %v1316
        %v1318 = vpop.f32.mrb[0].mxu0
        %v1319 = vadd.f32 0.0, %v1318
        %1320 = vmatprep.mubr.f32.mxu0 0.0
        %1321 = vmatmul.mubr.f32.gmra.mrb[0].mxu0 %v1212
        %v1322 = vpop.f32.mrb[0].mxu0
        %v1323 = vadd.f32 0.0, %v1322
        %v1324 = vpop.f32.mrb[0].mxu0
        %v1325 = vadd.f32 0.0, %v1324
        %1326 = vdwg.mxu0
        %1327 = vmatprep.subr.mxu0 0.0
        %1328 = vmatpush1.msra.mxu0 %v1127
        %1329 = vmatprep.subr.mxu0 0.0
        %1330 = vmatpush1.msra.mxu0 %v1130
        %1331 = vmatprep.subr.mxu0 0.0
        %1332 = vmatpush1.msra.mxu0 %v1133
        %1333 = vmatprep.subr.mxu0 0.0
        %1334 = vmatpush1.msra.mxu0 %v1136
        %1335 = vmatprep.subr.mxu0 0.0
        %1336 = vmatpush1.msra.mxu0 0.0
        %1337 = vmatprep.subr.mxu0 0.0
        %1338 = vmatpush1.msra.mxu0 0.0
        %1339 = vmatprep.subr.mxu0 0.0
        %1340 = vmatpush1.msra.mxu0 0.0
        %1341 = vmatprep.subr.mxu0 0.0
        %1342 = vmatpush1.msra.mxu0 0.0
        %1343 = vmatprep.subr.mxu0 0.0
        %1344 = vmatpush1.msra.mxu0 0.0
        %1345 = vmatprep.subr.mxu0 0.0
        %1346 = vmatpush1.msra.mxu0 0.0
        %1347 = vmatprep.subr.mxu0 0.0
        %1348 = vmatpush1.msra.mxu0 0.0
        %1349 = vmatprep.subr.mxu0 0.0
        %1350 = vmatpush1.msra.mxu0 0.0
        %1351 = vmatprep.subr.mxu0 0.0
        %1352 = vmatpush1.msra.mxu0 0.0
        %1353 = vmatprep.subr.mxu0 0.0
        %1354 = vmatpush1.msra.mxu0 0.0
        %1355 = vmatprep.subr.mxu0 0.0
        %1356 = vmatpush1.msra.mxu0 0.0
        %1357 = vmatprep.subr.mxu0 0.0
        %1358 = vmatpush1.msra.mxu0 0.0
        %1359 = vmatprep.subr.mxu0 0.0
        %1360 = vmatpush1.msra.mxu0 0.0
        %1361 = vmatprep.subr.mxu0 0.0
        %1362 = vmatpush1.msra.mxu0 0.0
        %1363 = vmatprep.subr.mxu0 0.0
        %1364 = vmatpush1.msra.mxu0 0.0
        %1365 = vmatprep.subr.mxu0 0.0
        %1366 = vmatpush1.msra.mxu0 0.0
        %1367 = vmatprep.subr.mxu0 0.0
        %1368 = vmatpush1.msra.mxu0 0.0
        %1369 = vmatprep.subr.mxu0 0.0
        %1370 = vmatpush1.msra.mxu0 0.0
        %1371 = vmatprep.subr.mxu0 0.0
        %1372 = vmatpush1.msra.mxu0 0.0
        %1373 = vmatprep.subr.mxu0 0.0
        %1374 = vmatpush1.msra.mxu0 0.0
        %1375 = vmatprep.subr.mxu0 0.0
        %1376 = vmatpush1.msra.mxu0 0.0
        %1377 = vmatprep.subr.mxu0 0.0
        %1378 = vmatpush1.msra.mxu0 0.0
        %1379 = vmatprep.subr.mxu0 0.0
        %1380 = vmatpush1.msra.mxu0 0.0
        %1381 = vmatprep.subr.mxu0 0.0
        %1382 = vmatpush1.msra.mxu0 0.0
        %1383 = vmatprep.subr.mxu0 0.0
        %1384 = vmatpush1.msra.mxu0 0.0
        %1385 = vmatprep.subr.mxu0 0.0
        %1386 = vmatpush1.msra.mxu0 0.0
        %1387 = vmatprep.subr.mxu0 0.0
        %1388 = vmatpush1.msra.mxu0 0.0
        %1389 = vmatprep.subr.mxu0 0.0
        %1390 = vmatpush1.msra.mxu0 0.0
        %1391 = vmatprep.mubr.f32.mxu0 0.0
        %1392 = vmatmul.mubr.f32.gmra.mrb[0].mxu0 %v1191
        %v1393 = vpop.f32.mrb[0].mxu0
        %v1394 = vadd.f32 0.0, %v1393
        %v1395 = vpop.f32.mrb[0].mxu0
        %1396 = vmatprep.mubr.f32.mxu0 0.0
        %1397 = vmatmul.mubr.f32.gmra.mrb[0].mxu0 %v1194
        %v1398 = vpop.f32.mrb[0].mxu0
        %v1399 = vadd.f32 0.0, %v1398
        %v1400 = vpop.f32.mrb[0].mxu0
        %1401 = vmatprep.mubr.f32.mxu0 0.0
        %1402 = vmatmul.mubr.f32.gmra.mrb[0].mxu0 %v1197
        %v1403 = vpop.f32.mrb[0].mxu0
        %v1404 = vadd.f32 0.0, %v1403
        %v1405 = vpop.f32.mrb[0].mxu0
        %1406 = vmatprep.mubr.f32.mxu0 0.0
        %1407 = vmatmul.mubr.f32.gmra.mrb[0].mxu0 %v1200
        %v1408 = vpop.f32.mrb[0].mxu0
        %v1409 = vadd.f32 0.0, %v1408
        %v1410 = vpop.f32.mrb[0].mxu0
        %1411 = vmatprep.mubr.f32.mxu0 0.0
        %1412 = vmatmul.mubr.f32.gmra.mrb[0].mxu0 %v1203
        %v1413 = vpop.f32.mrb[0].mxu0
        %v1414 = vadd.f32 0.0, %v1413
        %v1415 = vpop.f32.mrb[0].mxu0
        %1416 = vmatprep.mubr.f32.mxu0 0.0
        %1417 = vmatmul.mubr.f32.gmra.mrb[0].mxu0 %v1206
        %v1418 = vpop.f32.mrb[0].mxu0
        %v1419 = vadd.f32 0.0, %v1418
        %v1420 = vpop.f32.mrb[0].mxu0
        %1421 = vmatprep.mubr.f32.mxu0 0.0
        %1422 = vmatmul.mubr.f32.gmra.mrb[0].mxu0 %v1209
        %v1423 = vpop.f32.mrb[0].mxu0
        %v1424 = vadd.f32 0.0, %v1423
        %v1425 = vpop.f32.mrb[0].mxu0
        %1426 = vmatprep.mubr.f32.mxu0 0.0
        %1427 = vmatmul.mubr.f32.gmra.mrb[0].mxu0 %v1212
        %v1428 = vpop.f32.mrb[0].mxu0
        %v1429 = vadd.f32 0.0, %v1428
        %v1430 = vpop.f32.mrb[0].mxu0
        %1431 = vdwg.mxu0
        %v1433 = vsel %vm1189, %v1137, 0
        %v1436 = vsel %vm1189, %v1138, 0
        %v1439 = vsel %vm1189, %v1139, 0
        %v1442 = vsel %vm1189, %v1140, 0
        %v1445 = vsel %vm1189, %v1141, 0
        %v1448 = vsel %vm1189, %v1142, 0
        %v1451 = vsel %vm1189, %v1143, 0
        %v1454 = vsel %vm1189, %v1144, 0
        %1456 = vmatprep.subr.mxu0 %v1114
        %1457 = vmatpush1.msra.mxu0 %v1113
        %1458 = vmatprep.subr.mxu0 %v1117
        %1459 = vmatpush1.msra.mxu0 %v1116
        %1460 = vmatprep.subr.mxu0 %v1120
        %1461 = vmatpush1.msra.mxu0 %v1119
        %1462 = vmatprep.subr.mxu0 %v1123
        %1463 = vmatpush1.msra.mxu0 %v1122
        %1464 = vmatprep.subr.mxu0 0.0
        %1465 = vmatpush1.msra.mxu0 0.0
        %1466 = vmatprep.subr.mxu0 0.0
        %1467 = vmatpush1.msra.mxu0 0.0
        %1468 = vmatprep.subr.mxu0 0.0
        %1469 = vmatpush1.msra.mxu0 0.0
        %1470 = vmatprep.subr.mxu0 0.0
        %1471 = vmatpush1.msra.mxu0 0.0
        %1472 = vmatprep.subr.mxu0 0.0
        %1473 = vmatpush1.msra.mxu0 0.0
        %1474 = vmatprep.subr.mxu0 0.0
        %1475 = vmatpush1.msra.mxu0 0.0
        %1476 = vmatprep.subr.mxu0 0.0
        %1477 = vmatpush1.msra.mxu0 0.0
        %1478 = vmatprep.subr.mxu0 0.0
        %1479 = vmatpush1.msra.mxu0 0.0
        %1480 = vmatprep.subr.mxu0 0.0
        %1481 = vmatpush1.msra.mxu0 0.0
        %1482 = vmatprep.subr.mxu0 0.0
        %1483 = vmatpush1.msra.mxu0 0.0
        %1484 = vmatprep.subr.mxu0 0.0
        %1485 = vmatpush1.msra.mxu0 0.0
        %1486 = vmatprep.subr.mxu0 0.0
        %1487 = vmatpush1.msra.mxu0 0.0
        %1488 = vmatprep.subr.mxu0 0.0
        %1489 = vmatpush1.msra.mxu0 0.0
        %1490 = vmatprep.subr.mxu0 0.0
        %1491 = vmatpush1.msra.mxu0 0.0
        %1492 = vmatprep.subr.mxu0 0.0
        %1493 = vmatpush1.msra.mxu0 0.0
        %1494 = vmatprep.subr.mxu0 0.0
        %1495 = vmatpush1.msra.mxu0 0.0
        %1496 = vmatprep.subr.mxu0 0.0
        %1497 = vmatpush1.msra.mxu0 0.0
        %1498 = vmatprep.subr.mxu0 0.0
        %1499 = vmatpush1.msra.mxu0 0.0
        %1500 = vmatprep.subr.mxu0 0.0
        %1501 = vmatpush1.msra.mxu0 0.0
        %1502 = vmatprep.subr.mxu0 0.0
        %1503 = vmatpush1.msra.mxu0 0.0
        %1504 = vmatprep.subr.mxu0 0.0
        %1505 = vmatpush1.msra.mxu0 0.0
        %1506 = vmatprep.subr.mxu0 0.0
        %1507 = vmatpush1.msra.mxu0 0.0
        %1508 = vmatprep.subr.mxu0 0.0
        %1509 = vmatpush1.msra.mxu0 0.0
        %1510 = vmatprep.subr.mxu0 0.0
        %1511 = vmatpush1.msra.mxu0 0.0
        %1512 = vmatprep.subr.mxu0 0.0
        %1513 = vmatpush1.msra.mxu0 0.0
        %1514 = vmatprep.subr.mxu0 0.0
        %1515 = vmatpush1.msra.mxu0 0.0
        %1516 = vmatprep.subr.mxu0 0.0
        %1517 = vmatpush1.msra.mxu0 0.0
        %1518 = vmatprep.subr.mxu0 0.0
        %1519 = vmatpush1.msra.mxu0 0.0
        %1520 = vmatprep.mubr.f32.mxu0 0.0
        %1521 = vmatmul.mubr.f32.gmra.mrb[0].mxu0 %v1433
        %v1522 = vpop.f32.mrb[0].mxu0
        %v1523 = vadd.f32 %v1281, %v1522
        %v1524 = vpop.f32.mrb[0].mxu0
        %v1525 = vadd.f32 %v1283, %v1524
        %1526 = vmatprep.mubr.f32.mxu0 0.0
        %1527 = vmatmul.mubr.f32.gmra.mrb[0].mxu0 %v1436
        %v1528 = vpop.f32.mrb[0].mxu0
        %v1529 = vadd.f32 %v1287, %v1528
        %v1530 = vpop.f32.mrb[0].mxu0
        %v1531 = vadd.f32 %v1289, %v1530
        %1532 = vmatprep.mubr.f32.mxu0 0.0
        %1533 = vmatmul.mubr.f32.gmra.mrb[0].mxu0 %v1439
        %v1534 = vpop.f32.mrb[0].mxu0
        %v1535 = vadd.f32 %v1293, %v1534
        %v1536 = vpop.f32.mrb[0].mxu0
        %v1537 = vadd.f32 %v1295, %v1536
        %1538 = vmatprep.mubr.f32.mxu0 0.0
        %1539 = vmatmul.mubr.f32.gmra.mrb[0].mxu0 %v1442
        %v1540 = vpop.f32.mrb[0].mxu0
        %v1541 = vadd.f32 %v1299, %v1540
        %v1542 = vpop.f32.mrb[0].mxu0
        %v1543 = vadd.f32 %v1301, %v1542
        %1544 = vmatprep.mubr.f32.mxu0 0.0
        %1545 = vmatmul.mubr.f32.gmra.mrb[0].mxu0 %v1445
        %v1546 = vpop.f32.mrb[0].mxu0
        %v1547 = vadd.f32 %v1305, %v1546
        %v1548 = vpop.f32.mrb[0].mxu0
        %v1549 = vadd.f32 %v1307, %v1548
        %1550 = vmatprep.mubr.f32.mxu0 0.0
        %1551 = vmatmul.mubr.f32.gmra.mrb[0].mxu0 %v1448
        %v1552 = vpop.f32.mrb[0].mxu0
        %v1553 = vadd.f32 %v1311, %v1552
        %v1554 = vpop.f32.mrb[0].mxu0
        %v1555 = vadd.f32 %v1313, %v1554
        %1556 = vmatprep.mubr.f32.mxu0 0.0
        %1557 = vmatmul.mubr.f32.gmra.mrb[0].mxu0 %v1451
        %v1558 = vpop.f32.mrb[0].mxu0
        %v1559 = vadd.f32 %v1317, %v1558
        %v1560 = vpop.f32.mrb[0].mxu0
        %v1561 = vadd.f32 %v1319, %v1560
        %1562 = vmatprep.mubr.f32.mxu0 0.0
        %1563 = vmatmul.mubr.f32.gmra.mrb[0].mxu0 %v1454
        %v1564 = vpop.f32.mrb[0].mxu0
        %v1565 = vadd.f32 %v1323, %v1564
        %v1566 = vpop.f32.mrb[0].mxu0
        %v1567 = vadd.f32 %v1325, %v1566
        %1568 = vdwg.mxu0
        %1569 = vmatprep.subr.mxu0 0.0
        %1570 = vmatpush1.msra.mxu0 %v1115
        %1571 = vmatprep.subr.mxu0 0.0
        %1572 = vmatpush1.msra.mxu0 %v1118
        %1573 = vmatprep.subr.mxu0 0.0
        %1574 = vmatpush1.msra.mxu0 %v1121
        %1575 = vmatprep.subr.mxu0 0.0
        %1576 = vmatpush1.msra.mxu0 %v1124
        %1577 = vmatprep.subr.mxu0 0.0
        %1578 = vmatpush1.msra.mxu0 0.0
        %1579 = vmatprep.subr.mxu0 0.0
        %1580 = vmatpush1.msra.mxu0 0.0
        %1581 = vmatprep.subr.mxu0 0.0
        %1582 = vmatpush1.msra.mxu0 0.0
        %1583 = vmatprep.subr.mxu0 0.0
        %1584 = vmatpush1.msra.mxu0 0.0
        %1585 = vmatprep.subr.mxu0 0.0
        %1586 = vmatpush1.msra.mxu0 0.0
        %1587 = vmatprep.subr.mxu0 0.0
        %1588 = vmatpush1.msra.mxu0 0.0
        %1589 = vmatprep.subr.mxu0 0.0
        %1590 = vmatpush1.msra.mxu0 0.0
        %1591 = vmatprep.subr.mxu0 0.0
        %1592 = vmatpush1.msra.mxu0 0.0
        %1593 = vmatprep.subr.mxu0 0.0
        %1594 = vmatpush1.msra.mxu0 0.0
        %1595 = vmatprep.subr.mxu0 0.0
        %1596 = vmatpush1.msra.mxu0 0.0
        %1597 = vmatprep.subr.mxu0 0.0
        %1598 = vmatpush1.msra.mxu0 0.0
        %1599 = vmatprep.subr.mxu0 0.0
        %1600 = vmatpush1.msra.mxu0 0.0
        %1601 = vmatprep.subr.mxu0 0.0
        %1602 = vmatpush1.msra.mxu0 0.0
        %1603 = vmatprep.subr.mxu0 0.0
        %1604 = vmatpush1.msra.mxu0 0.0
        %1605 = vmatprep.subr.mxu0 0.0
        %1606 = vmatpush1.msra.mxu0 0.0
        %1607 = vmatprep.subr.mxu0 0.0
        %1608 = vmatpush1.msra.mxu0 0.0
        %1609 = vmatprep.subr.mxu0 0.0
        %1610 = vmatpush1.msra.mxu0 0.0
        %1611 = vmatprep.subr.mxu0 0.0
        %1612 = vmatpush1.msra.mxu0 0.0
        %1613 = vmatprep.subr.mxu0 0.0
        %1614 = vmatpush1.msra.mxu0 0.0
        %1615 = vmatprep.subr.mxu0 0.0
        %1616 = vmatpush1.msra.mxu0 0.0
        %1617 = vmatprep.subr.mxu0 0.0
        %1618 = vmatpush1.msra.mxu0 0.0
        %1619 = vmatprep.subr.mxu0 0.0
        %1620 = vmatpush1.msra.mxu0 0.0
        %1621 = vmatprep.subr.mxu0 0.0
        %1622 = vmatpush1.msra.mxu0 0.0
        %1623 = vmatprep.subr.mxu0 0.0
        %1624 = vmatpush1.msra.mxu0 0.0
        %1625 = vmatprep.subr.mxu0 0.0
        %1626 = vmatpush1.msra.mxu0 0.0
        %1627 = vmatprep.subr.mxu0 0.0
        %1628 = vmatpush1.msra.mxu0 0.0
        %1629 = vmatprep.subr.mxu0 0.0
        %1630 = vmatpush1.msra.mxu0 0.0
        %1631 = vmatprep.subr.mxu0 0.0
        %1632 = vmatpush1.msra.mxu0 0.0
        %1633 = vmatprep.mubr.f32.mxu0 0.0
        %1634 = vmatmul.mubr.f32.gmra.mrb[0].mxu0 %v1433
        %v1635 = vpop.f32.mrb[0].mxu0
        %v1636 = vadd.f32 %v1394, %v1635
        %v1637 = vpop.f32.mrb[0].mxu0
        %1638 = vmatprep.mubr.f32.mxu0 0.0
        %1639 = vmatmul.mubr.f32.gmra.mrb[0].mxu0 %v1436
        %v1640 = vpop.f32.mrb[0].mxu0
        %v1641 = vadd.f32 %v1399, %v1640
        %v1642 = vpop.f32.mrb[0].mxu0
        %1643 = vmatprep.mubr.f32.mxu0 0.0
        %1644 = vmatmul.mubr.f32.gmra.mrb[0].mxu0 %v1439
        %v1645 = vpop.f32.mrb[0].mxu0
        %v1646 = vadd.f32 %v1404, %v1645
        %v1647 = vpop.f32.mrb[0].mxu0
        %1648 = vmatprep.mubr.f32.mxu0 0.0
        %1649 = vmatmul.mubr.f32.gmra.mrb[0].mxu0 %v1442
        %v1650 = vpop.f32.mrb[0].mxu0
        %v1651 = vadd.f32 %v1409, %v1650
        %v1652 = vpop.f32.mrb[0].mxu0
        %1653 = vmatprep.mubr.f32.mxu0 0.0
        %1654 = vmatmul.mubr.f32.gmra.mrb[0].mxu0 %v1445
        %v1655 = vpop.f32.mrb[0].mxu0
        %v1656 = vadd.f32 %v1414, %v1655
        %v1657 = vpop.f32.mrb[0].mxu0
        %1658 = vmatprep.mubr.f32.mxu0 0.0
        %1659 = vmatmul.mubr.f32.gmra.mrb[0].mxu0 %v1448
        %v1660 = vpop.f32.mrb[0].mxu0
        %v1661 = vadd.f32 %v1419, %v1660
        %v1662 = vpop.f32.mrb[0].mxu0
        %1663 = vmatprep.mubr.f32.mxu0 0.0
        %1664 = vmatmul.mubr.f32.gmra.mrb[0].mxu0 %v1451
        %v1665 = vpop.f32.mrb[0].mxu0
        %v1666 = vadd.f32 %v1424, %v1665
        %v1667 = vpop.f32.mrb[0].mxu0
        %1668 = vmatprep.mubr.f32.mxu0 0.0
        %1669 = vmatmul.mubr.f32.gmra.mrb[0].mxu0 %v1454
        %v1670 = vpop.f32.mrb[0].mxu0
        %v1671 = vadd.f32 %v1429, %v1670
        %v1672 = vpop.f32.mrb[0].mxu0
        %1673 = vdwg.mxu0
        %1686 = vrot.lane.b32.xlu0 %v1113, 127
        %v1687 = vpop.permute.xlu0 %1686
        %1688 = vrot.lane.b32.xlu0 %v1114, 127
        %v1689 = vpop.permute.xlu0 %1688
        %1690 = vrot.lane.b32.xlu0 %v1115, 127
        %v1691 = vpop.permute.xlu0 %1690
        %1692 = vrot.lane.b32.xlu0 %v1116, 127
        %v1693 = vpop.permute.xlu0 %1692
        %1694 = vrot.lane.b32.xlu0 %v1117, 127
        %v1695 = vpop.permute.xlu0 %1694
        %1696 = vrot.lane.b32.xlu0 %v1118, 127
        %v1697 = vpop.permute.xlu0 %1696
        %1698 = vrot.lane.b32.xlu0 %v1119, 127
        %v1699 = vpop.permute.xlu0 %1698
        %1700 = vrot.lane.b32.xlu0 %v1120, 127
        %v1701 = vpop.permute.xlu0 %1700
        %1702 = vrot.lane.b32.xlu0 %v1121, 127
        %v1703 = vpop.permute.xlu0 %1702
        %1704 = vrot.lane.b32.xlu0 %v1122, 127
        %v1705 = vpop.permute.xlu0 %1704
        %1706 = vrot.lane.b32.xlu0 %v1123, 127
        %v1707 = vpop.permute.xlu0 %1706
        %1708 = vrot.lane.b32.xlu0 %v1124, 127
        %v1709 = vpop.permute.xlu0 %1708
        %vm1710 = vcmask 1039360
        %v1711 = vsel %vm1710, %v1687, %v1689
        %v1712 = vsel %vm1710, %v1689, %v1691
        %v1713 = vsel %vm1710, %v1693, %v1695
        %v1714 = vsel %vm1710, %v1695, %v1697
        %v1715 = vsel %vm1710, %v1699, %v1701
        %v1716 = vsel %vm1710, %v1701, %v1703
        %v1717 = vsel %vm1710, %v1705, %v1707
        %v1718 = vsel %vm1710, %v1707, %v1709
        %v1732 = vsel %vm1189, %v1155, 0
        %v1735 = vsel %vm1189, %v1156, 0
        %v1738 = vsel %vm1189, %v1157, 0
        %v1741 = vsel %vm1189, %v1158, 0
        %v1744 = vsel %vm1189, %v1159, 0
        %v1747 = vsel %vm1189, %v1160, 0
        %v1750 = vsel %vm1189, %v1161, 0
        %v1753 = vsel %vm1189, %v1162, 0
        %1755 = vmatprep.subr.mxu0 %v1712
        %1756 = vmatpush1.msra.mxu0 %v1711
        %1757 = vmatprep.subr.mxu0 %v1714
        %1758 = vmatpush1.msra.mxu0 %v1713
        %1759 = vmatprep.subr.mxu0 %v1716
        %1760 = vmatpush1.msra.mxu0 %v1715
        %1761 = vmatprep.subr.mxu0 %v1718
        %1762 = vmatpush1.msra.mxu0 %v1717
        %1763 = vmatprep.subr.mxu0 0.0
        %1764 = vmatpush1.msra.mxu0 0.0
        %1765 = vmatprep.subr.mxu0 0.0
        %1766 = vmatpush1.msra.mxu0 0.0
        %1767 = vmatprep.subr.mxu0 0.0
        %1768 = vmatpush1.msra.mxu0 0.0
        %1769 = vmatprep.subr.mxu0 0.0
        %1770 = vmatpush1.msra.mxu0 0.0
        %1771 = vmatprep.subr.mxu0 0.0
        %1772 = vmatpush1.msra.mxu0 0.0
        %1773 = vmatprep.subr.mxu0 0.0
        %1774 = vmatpush1.msra.mxu0 0.0
        %1775 = vmatprep.subr.mxu0 0.0
        %1776 = vmatpush1.msra.mxu0 0.0
        %1777 = vmatprep.subr.mxu0 0.0
        %1778 = vmatpush1.msra.mxu0 0.0
        %1779 = vmatprep.subr.mxu0 0.0
        %1780 = vmatpush1.msra.mxu0 0.0
        %1781 = vmatprep.subr.mxu0 0.0
        %1782 = vmatpush1.msra.mxu0 0.0
        %1783 = vmatprep.subr.mxu0 0.0
        %1784 = vmatpush1.msra.mxu0 0.0
        %1785 = vmatprep.subr.mxu0 0.0
        %1786 = vmatpush1.msra.mxu0 0.0
        %1787 = vmatprep.subr.mxu0 0.0
        %1788 = vmatpush1.msra.mxu0 0.0
        %1789 = vmatprep.subr.mxu0 0.0
        %1790 = vmatpush1.msra.mxu0 0.0
        %1791 = vmatprep.subr.mxu0 0.0
        %1792 = vmatpush1.msra.mxu0 0.0
        %1793 = vmatprep.subr.mxu0 0.0
        %1794 = vmatpush1.msra.mxu0 0.0
        %1795 = vmatprep.subr.mxu0 0.0
        %1796 = vmatpush1.msra.mxu0 0.0
        %1797 = vmatprep.subr.mxu0 0.0
        %1798 = vmatpush1.msra.mxu0 0.0
        %1799 = vmatprep.subr.mxu0 0.0
        %1800 = vmatpush1.msra.mxu0 0.0
        %1801 = vmatprep.subr.mxu0 0.0
        %1802 = vmatpush1.msra.mxu0 0.0
        %1803 = vmatprep.subr.mxu0 0.0
        %1804 = vmatpush1.msra.mxu0 0.0
        %1805 = vmatprep.subr.mxu0 0.0
        %1806 = vmatpush1.msra.mxu0 0.0
        %1807 = vmatprep.subr.mxu0 0.0
        %1808 = vmatpush1.msra.mxu0 0.0
        %1809 = vmatprep.subr.mxu0 0.0
        %1810 = vmatpush1.msra.mxu0 0.0
        %1811 = vmatprep.subr.mxu0 0.0
        %1812 = vmatpush1.msra.mxu0 0.0
        %1813 = vmatprep.subr.mxu0 0.0
        %1814 = vmatpush1.msra.mxu0 0.0
        %1815 = vmatprep.subr.mxu0 0.0
        %1816 = vmatpush1.msra.mxu0 0.0
        %1817 = vmatprep.subr.mxu0 0.0
        %1818 = vmatpush1.msra.mxu0 0.0
        %1819 = vmatprep.mubr.f32.mxu0 0.0
        %1820 = vmatmul.mubr.f32.gmra.mrb[0].mxu0 %v1732
        %v1821 = vpop.f32.mrb[0].mxu0
        %v1822 = vadd.f32 0.0, %v1821
        %v1823 = vpop.f32.mrb[0].mxu0
        %v1824 = vadd.f32 0.0, %v1823
        %1825 = vmatprep.mubr.f32.mxu0 0.0
        %1826 = vmatmul.mubr.f32.gmra.mrb[0].mxu0 %v1735
        %v1827 = vpop.f32.mrb[0].mxu0
        %v1828 = vadd.f32 0.0, %v1827
        %v1829 = vpop.f32.mrb[0].mxu0
        %v1830 = vadd.f32 0.0, %v1829
        %1831 = vmatprep.mubr.f32.mxu0 0.0
        %1832 = vmatmul.mubr.f32.gmra.mrb[0].mxu0 %v1738
        %v1833 = vpop.f32.mrb[0].mxu0
        %v1834 = vadd.f32 0.0, %v1833
        %v1835 = vpop.f32.mrb[0].mxu0
        %v1836 = vadd.f32 0.0, %v1835
        %1837 = vmatprep.mubr.f32.mxu0 0.0
        %1838 = vmatmul.mubr.f32.gmra.mrb[0].mxu0 %v1741
        %v1839 = vpop.f32.mrb[0].mxu0
        %v1840 = vadd.f32 0.0, %v1839
        %v1841 = vpop.f32.mrb[0].mxu0
        %v1842 = vadd.f32 0.0, %v1841
        %1843 = vmatprep.mubr.f32.mxu0 0.0
        %1844 = vmatmul.mubr.f32.gmra.mrb[0].mxu0 %v1744
        %v1845 = vpop.f32.mrb[0].mxu0
        %v1846 = vadd.f32 0.0, %v1845
        %v1847 = vpop.f32.mrb[0].mxu0
        %v1848 = vadd.f32 0.0, %v1847
        %1849 = vmatprep.mubr.f32.mxu0 0.0
        %1850 = vmatmul.mubr.f32.gmra.mrb[0].mxu0 %v1747
        %v1851 = vpop.f32.mrb[0].mxu0
        %v1852 = vadd.f32 0.0, %v1851
        %v1853 = vpop.f32.mrb[0].mxu0
        %v1854 = vadd.f32 0.0, %v1853
        %1855 = vmatprep.mubr.f32.mxu0 0.0
        %1856 = vmatmul.mubr.f32.gmra.mrb[0].mxu0 %v1750
        %v1857 = vpop.f32.mrb[0].mxu0
        %v1858 = vadd.f32 0.0, %v1857
        %v1859 = vpop.f32.mrb[0].mxu0
        %v1860 = vadd.f32 0.0, %v1859
        %1861 = vmatprep.mubr.f32.mxu0 0.0
        %1862 = vmatmul.mubr.f32.gmra.mrb[0].mxu0 %v1753
        %v1863 = vpop.f32.mrb[0].mxu0
        %v1864 = vadd.f32 0.0, %v1863
        %v1865 = vpop.f32.mrb[0].mxu0
        %v1866 = vadd.f32 0.0, %v1865
        %1867 = vdwg.mxu0
        %1868 = vmatprep.subr.mxu0 0.0
        %1869 = vmatpush1.msra.mxu0 %v1691
        %1870 = vmatprep.subr.mxu0 0.0
        %1871 = vmatpush1.msra.mxu0 %v1697
        %1872 = vmatprep.subr.mxu0 0.0
        %1873 = vmatpush1.msra.mxu0 %v1703
        %1874 = vmatprep.subr.mxu0 0.0
        %1875 = vmatpush1.msra.mxu0 %v1709
        %1876 = vmatprep.subr.mxu0 0.0
        %1877 = vmatpush1.msra.mxu0 0.0
        %1878 = vmatprep.subr.mxu0 0.0
        %1879 = vmatpush1.msra.mxu0 0.0
        %1880 = vmatprep.subr.mxu0 0.0
        %1881 = vmatpush1.msra.mxu0 0.0
        %1882 = vmatprep.subr.mxu0 0.0
        %1883 = vmatpush1.msra.mxu0 0.0
        %1884 = vmatprep.subr.mxu0 0.0
        %1885 = vmatpush1.msra.mxu0 0.0
        %1886 = vmatprep.subr.mxu0 0.0
        %1887 = vmatpush1.msra.mxu0 0.0
        %1888 = vmatprep.subr.mxu0 0.0
        %1889 = vmatpush1.msra.mxu0 0.0
        %1890 = vmatprep.subr.mxu0 0.0
        %1891 = vmatpush1.msra.mxu0 0.0
        %1892 = vmatprep.subr.mxu0 0.0
        %1893 = vmatpush1.msra.mxu0 0.0
        %1894 = vmatprep.subr.mxu0 0.0
        %1895 = vmatpush1.msra.mxu0 0.0
        %1896 = vmatprep.subr.mxu0 0.0
        %1897 = vmatpush1.msra.mxu0 0.0
        %1898 = vmatprep.subr.mxu0 0.0
        %1899 = vmatpush1.msra.mxu0 0.0
        %1900 = vmatprep.subr.mxu0 0.0
        %1901 = vmatpush1.msra.mxu0 0.0
        %1902 = vmatprep.subr.mxu0 0.0
        %1903 = vmatpush1.msra.mxu0 0.0
        %1904 = vmatprep.subr.mxu0 0.0
        %1905 = vmatpush1.msra.mxu0 0.0
        %1906 = vmatprep.subr.mxu0 0.0
        %1907 = vmatpush1.msra.mxu0 0.0
        %1908 = vmatprep.subr.mxu0 0.0
        %1909 = vmatpush1.msra.mxu0 0.0
        %1910 = vmatprep.subr.mxu0 0.0
        %1911 = vmatpush1.msra.mxu0 0.0
        %1912 = vmatprep.subr.mxu0 0.0
        %1913 = vmatpush1.msra.mxu0 0.0
        %1914 = vmatprep.subr.mxu0 0.0
        %1915 = vmatpush1.msra.mxu0 0.0
        %1916 = vmatprep.subr.mxu0 0.0
        %1917 = vmatpush1.msra.mxu0 0.0
        %1918 = vmatprep.subr.mxu0 0.0
        %1919 = vmatpush1.msra.mxu0 0.0
        %1920 = vmatprep.subr.mxu0 0.0
        %1921 = vmatpush1.msra.mxu0 0.0
        %1922 = vmatprep.subr.mxu0 0.0
        %1923 = vmatpush1.msra.mxu0 0.0
        %1924 = vmatprep.subr.mxu0 0.0
        %1925 = vmatpush1.msra.mxu0 0.0
        %1926 = vmatprep.subr.mxu0 0.0
        %1927 = vmatpush1.msra.mxu0 0.0
        %1928 = vmatprep.subr.mxu0 0.0
        %1929 = vmatpush1.msra.mxu0 0.0
        %1930 = vmatprep.subr.mxu0 0.0
        %1931 = vmatpush1.msra.mxu0 0.0
        %1932 = vmatprep.mubr.f32.mxu0 0.0
        %1933 = vmatmul.mubr.f32.gmra.mrb[0].mxu0 %v1732
        %v1934 = vpop.f32.mrb[0].mxu0
        %v1935 = vadd.f32 0.0, %v1934
        %v1936 = vpop.f32.mrb[0].mxu0
        %1937 = vmatprep.mubr.f32.mxu0 0.0
        %1938 = vmatmul.mubr.f32.gmra.mrb[0].mxu0 %v1735
        %v1939 = vpop.f32.mrb[0].mxu0
        %v1940 = vadd.f32 0.0, %v1939
        %v1941 = vpop.f32.mrb[0].mxu0
        %1942 = vmatprep.mubr.f32.mxu0 0.0
        %1943 = vmatmul.mubr.f32.gmra.mrb[0].mxu0 %v1738
        %v1944 = vpop.f32.mrb[0].mxu0
        %v1945 = vadd.f32 0.0, %v1944
        %v1946 = vpop.f32.mrb[0].mxu0
        %1947 = vmatprep.mubr.f32.mxu0 0.0
        %1948 = vmatmul.mubr.f32.gmra.mrb[0].mxu0 %v1741
        %v1949 = vpop.f32.mrb[0].mxu0
        %v1950 = vadd.f32 0.0, %v1949
        %v1951 = vpop.f32.mrb[0].mxu0
        %1952 = vmatprep.mubr.f32.mxu0 0.0
        %1953 = vmatmul.mubr.f32.gmra.mrb[0].mxu0 %v1744
        %v1954 = vpop.f32.mrb[0].mxu0
        %v1955 = vadd.f32 0.0, %v1954
        %v1956 = vpop.f32.mrb[0].mxu0
        %1957 = vmatprep.mubr.f32.mxu0 0.0
        %1958 = vmatmul.mubr.f32.gmra.mrb[0].mxu0 %v1747
        %v1959 = vpop.f32.mrb[0].mxu0
        %v1960 = vadd.f32 0.0, %v1959
        %v1961 = vpop.f32.mrb[0].mxu0
        %1962 = vmatprep.mubr.f32.mxu0 0.0
        %1963 = vmatmul.mubr.f32.gmra.mrb[0].mxu0 %v1750
        %v1964 = vpop.f32.mrb[0].mxu0
        %v1965 = vadd.f32 0.0, %v1964
        %v1966 = vpop.f32.mrb[0].mxu0
        %1967 = vmatprep.mubr.f32.mxu0 0.0
        %1968 = vmatmul.mubr.f32.gmra.mrb[0].mxu0 %v1753
        %v1969 = vpop.f32.mrb[0].mxu0
        %v1970 = vadd.f32 0.0, %v1969
        %v1971 = vpop.f32.mrb[0].mxu0
        %1972 = vdwg.mxu0
        %v1973 = vadd.f32 %v1523, %v1822
        %v1974 = vadd.f32 %v1525, %v1824
        %v1975 = vadd.f32 %v1636, %v1935
        %v1976 = vadd.f32 %v1529, %v1828
        %v1977 = vadd.f32 %v1531, %v1830
        %v1978 = vadd.f32 %v1641, %v1940
        %v1979 = vadd.f32 %v1535, %v1834
        %v1980 = vadd.f32 %v1537, %v1836
        %v1981 = vadd.f32 %v1646, %v1945
        %v1982 = vadd.f32 %v1541, %v1840
        %v1983 = vadd.f32 %v1543, %v1842
        %v1984 = vadd.f32 %v1651, %v1950
        %v1985 = vadd.f32 %v1547, %v1846
        %v1986 = vadd.f32 %v1549, %v1848
        %v1987 = vadd.f32 %v1656, %v1955
        %v1988 = vadd.f32 %v1553, %v1852
        %v1989 = vadd.f32 %v1555, %v1854
        %v1990 = vadd.f32 %v1661, %v1960
        %v1991 = vadd.f32 %v1559, %v1858
        %v1992 = vadd.f32 %v1561, %v1860
        %v1993 = vadd.f32 %v1666, %v1965
        %v1994 = vadd.f32 %v1565, %v1864
        %v1995 = vadd.f32 %v1567, %v1866
        %v1996 = vadd.f32 %v1671, %v1970
        %2009 = vrot.lane.b32.xlu0 %v1125, 127
        %v2010 = vpop.permute.xlu0 %2009
        %2011 = vrot.lane.b32.xlu0 %v1126, 127
        %v2012 = vpop.permute.xlu0 %2011
        %2013 = vrot.lane.b32.xlu0 %v1127, 127
        %v2014 = vpop.permute.xlu0 %2013
        %2015 = vrot.lane.b32.xlu0 %v1128, 127
        %v2016 = vpop.permute.xlu0 %2015
        %2017 = vrot.lane.b32.xlu0 %v1129, 127
        %v2018 = vpop.permute.xlu0 %2017
        %2019 = vrot.lane.b32.xlu0 %v1130, 127
        %v2020 = vpop.permute.xlu0 %2019
        %2021 = vrot.lane.b32.xlu0 %v1131, 127
        %v2022 = vpop.permute.xlu0 %2021
        %2023 = vrot.lane.b32.xlu0 %v1132, 127
        %v2024 = vpop.permute.xlu0 %2023
        %2025 = vrot.lane.b32.xlu0 %v1133, 127
        %v2026 = vpop.permute.xlu0 %2025
        %2027 = vrot.lane.b32.xlu0 %v1134, 127
        %v2028 = vpop.permute.xlu0 %2027
        %2029 = vrot.lane.b32.xlu0 %v1135, 127
        %v2030 = vpop.permute.xlu0 %2029
        %2031 = vrot.lane.b32.xlu0 %v1136, 127
        %v2032 = vpop.permute.xlu0 %2031
        %v2033 = vsel %vm1710, %v2010, %v2012
        %v2034 = vsel %vm1710, %v2012, %v2014
        %v2035 = vsel %vm1710, %v2016, %v2018
        %v2036 = vsel %vm1710, %v2018, %v2020
        %v2037 = vsel %vm1710, %v2022, %v2024
        %v2038 = vsel %vm1710, %v2024, %v2026
        %v2039 = vsel %vm1710, %v2028, %v2030
        %v2040 = vsel %vm1710, %v2030, %v2032
        %v2054 = vsel %vm1189, %v1164, 0
        %v2057 = vsel %vm1189, %v1165, 0
        %v2060 = vsel %vm1189, %v1166, 0
        %v2063 = vsel %vm1189, %v1167, 0
        %v2066 = vsel %vm1189, %v1168, 0
        %v2069 = vsel %vm1189, %v1169, 0
        %v2072 = vsel %vm1189, %v1170, 0
        %v2075 = vsel %vm1189, %v1171, 0
        %2077 = vmatprep.subr.mxu0 %v2034
        %2078 = vmatpush1.msra.mxu0 %v2033
        %2079 = vmatprep.subr.mxu0 %v2036
        %2080 = vmatpush1.msra.mxu0 %v2035
        %2081 = vmatprep.subr.mxu0 %v2038
        %2082 = vmatpush1.msra.mxu0 %v2037
        %2083 = vmatprep.subr.mxu0 %v2040
        %2084 = vmatpush1.msra.mxu0 %v2039
        %2085 = vmatprep.subr.mxu0 0.0
        %2086 = vmatpush1.msra.mxu0 0.0
        %2087 = vmatprep.subr.mxu0 0.0
        %2088 = vmatpush1.msra.mxu0 0.0
        %2089 = vmatprep.subr.mxu0 0.0
        %2090 = vmatpush1.msra.mxu0 0.0
        %2091 = vmatprep.subr.mxu0 0.0
        %2092 = vmatpush1.msra.mxu0 0.0
        %2093 = vmatprep.subr.mxu0 0.0
        %2094 = vmatpush1.msra.mxu0 0.0
        %2095 = vmatprep.subr.mxu0 0.0
        %2096 = vmatpush1.msra.mxu0 0.0
        %2097 = vmatprep.subr.mxu0 0.0
        %2098 = vmatpush1.msra.mxu0 0.0
        %2099 = vmatprep.subr.mxu0 0.0
        %2100 = vmatpush1.msra.mxu0 0.0
        %2101 = vmatprep.subr.mxu0 0.0
        %2102 = vmatpush1.msra.mxu0 0.0
        %2103 = vmatprep.subr.mxu0 0.0
        %2104 = vmatpush1.msra.mxu0 0.0
        %2105 = vmatprep.subr.mxu0 0.0
        %2106 = vmatpush1.msra.mxu0 0.0
        %2107 = vmatprep.subr.mxu0 0.0
        %2108 = vmatpush1.msra.mxu0 0.0
        %2109 = vmatprep.subr.mxu0 0.0
        %2110 = vmatpush1.msra.mxu0 0.0
        %2111 = vmatprep.subr.mxu0 0.0
        %2112 = vmatpush1.msra.mxu0 0.0
        %2113 = vmatprep.subr.mxu0 0.0
        %2114 = vmatpush1.msra.mxu0 0.0
        %2115 = vmatprep.subr.mxu0 0.0
        %2116 = vmatpush1.msra.mxu0 0.0
        %2117 = vmatprep.subr.mxu0 0.0
        %2118 = vmatpush1.msra.mxu0 0.0
        %2119 = vmatprep.subr.mxu0 0.0
        %2120 = vmatpush1.msra.mxu0 0.0
        %2121 = vmatprep.subr.mxu0 0.0
        %2122 = vmatpush1.msra.mxu0 0.0
        %2123 = vmatprep.subr.mxu0 0.0
        %2124 = vmatpush1.msra.mxu0 0.0
        %2125 = vmatprep.subr.mxu0 0.0
        %2126 = vmatpush1.msra.mxu0 0.0
        %2127 = vmatprep.subr.mxu0 0.0
        %2128 = vmatpush1.msra.mxu0 0.0
        %2129 = vmatprep.subr.mxu0 0.0
        %2130 = vmatpush1.msra.mxu0 0.0
        %2131 = vmatprep.subr.mxu0 0.0
        %2132 = vmatpush1.msra.mxu0 0.0
        %2133 = vmatprep.subr.mxu0 0.0
        %2134 = vmatpush1.msra.mxu0 0.0
        %2135 = vmatprep.subr.mxu0 0.0
        %2136 = vmatpush1.msra.mxu0 0.0
        %2137 = vmatprep.subr.mxu0 0.0
        %2138 = vmatpush1.msra.mxu0 0.0
        %2139 = vmatprep.subr.mxu0 0.0
        %2140 = vmatpush1.msra.mxu0 0.0
        %2141 = vmatprep.mubr.f32.mxu0 0.0
        %2142 = vmatmul.mubr.f32.gmra.mrb[0].mxu0 %v2054
        %v2143 = vpop.f32.mrb[0].mxu0
        %v2144 = vadd.f32 0.0, %v2143
        %v2145 = vpop.f32.mrb[0].mxu0
        %v2146 = vadd.f32 0.0, %v2145
        %2147 = vmatprep.mubr.f32.mxu0 0.0
        %2148 = vmatmul.mubr.f32.gmra.mrb[0].mxu0 %v2057
        %v2149 = vpop.f32.mrb[0].mxu0
        %v2150 = vadd.f32 0.0, %v2149
        %v2151 = vpop.f32.mrb[0].mxu0
        %v2152 = vadd.f32 0.0, %v2151
        %2153 = vmatprep.mubr.f32.mxu0 0.0
        %2154 = vmatmul.mubr.f32.gmra.mrb[0].mxu0 %v2060
        %v2155 = vpop.f32.mrb[0].mxu0
        %v2156 = vadd.f32 0.0, %v2155
        %v2157 = vpop.f32.mrb[0].mxu0
        %v2158 = vadd.f32 0.0, %v2157
        %2159 = vmatprep.mubr.f32.mxu0 0.0
        %2160 = vmatmul.mubr.f32.gmra.mrb[0].mxu0 %v2063
        %v2161 = vpop.f32.mrb[0].mxu0
        %v2162 = vadd.f32 0.0, %v2161
        %v2163 = vpop.f32.mrb[0].mxu0
        %v2164 = vadd.f32 0.0, %v2163
        %2165 = vmatprep.mubr.f32.mxu0 0.0
        %2166 = vmatmul.mubr.f32.gmra.mrb[0].mxu0 %v2066
        %v2167 = vpop.f32.mrb[0].mxu0
        %v2168 = vadd.f32 0.0, %v2167
        %v2169 = vpop.f32.mrb[0].mxu0
        %v2170 = vadd.f32 0.0, %v2169
        %2171 = vmatprep.mubr.f32.mxu0 0.0
        %2172 = vmatmul.mubr.f32.gmra.mrb[0].mxu0 %v2069
        %v2173 = vpop.f32.mrb[0].mxu0
        %v2174 = vadd.f32 0.0, %v2173
        %v2175 = vpop.f32.mrb[0].mxu0
        %v2176 = vadd.f32 0.0, %v2175
        %2177 = vmatprep.mubr.f32.mxu0 0.0
        %2178 = vmatmul.mubr.f32.gmra.mrb[0].mxu0 %v2072
        %v2179 = vpop.f32.mrb[0].mxu0
        %v2180 = vadd.f32 0.0, %v2179
        %v2181 = vpop.f32.mrb[0].mxu0
        %v2182 = vadd.f32 0.0, %v2181
        %2183 = vmatprep.mubr.f32.mxu0 0.0
        %2184 = vmatmul.mubr.f32.gmra.mrb[0].mxu0 %v2075
        %v2185 = vpop.f32.mrb[0].mxu0
        %v2186 = vadd.f32 0.0, %v2185
        %v2187 = vpop.f32.mrb[0].mxu0
        %v2188 = vadd.f32 0.0, %v2187
        %2189 = vdwg.mxu0
        %2190 = vmatprep.subr.mxu0 0.0
        %2191 = vmatpush1.msra.mxu0 %v2014
        %2192 = vmatprep.subr.mxu0 0.0
        %2193 = vmatpush1.msra.mxu0 %v2020
        %2194 = vmatprep.subr.mxu0 0.0
        %2195 = vmatpush1.msra.mxu0 %v2026
        %2196 = vmatprep.subr.mxu0 0.0
        %2197 = vmatpush1.msra.mxu0 %v2032
        %2198 = vmatprep.subr.mxu0 0.0
        %2199 = vmatpush1.msra.mxu0 0.0
        %2200 = vmatprep.subr.mxu0 0.0
        %2201 = vmatpush1.msra.mxu0 0.0
        %2202 = vmatprep.subr.mxu0 0.0
        %2203 = vmatpush1.msra.mxu0 0.0
        %2204 = vmatprep.subr.mxu0 0.0
        %2205 = vmatpush1.msra.mxu0 0.0
        %2206 = vmatprep.subr.mxu0 0.0
        %2207 = vmatpush1.msra.mxu0 0.0
        %2208 = vmatprep.subr.mxu0 0.0
        %2209 = vmatpush1.msra.mxu0 0.0
        %2210 = vmatprep.subr.mxu0 0.0
        %2211 = vmatpush1.msra.mxu0 0.0
        %2212 = vmatprep.subr.mxu0 0.0
        %2213 = vmatpush1.msra.mxu0 0.0
        %2214 = vmatprep.subr.mxu0 0.0
        %2215 = vmatpush1.msra.mxu0 0.0
        %2216 = vmatprep.subr.mxu0 0.0
        %2217 = vmatpush1.msra.mxu0 0.0
        %2218 = vmatprep.subr.mxu0 0.0
        %2219 = vmatpush1.msra.mxu0 0.0
        %2220 = vmatprep.subr.mxu0 0.0
        %2221 = vmatpush1.msra.mxu0 0.0
        %2222 = vmatprep.subr.mxu0 0.0
        %2223 = vmatpush1.msra.mxu0 0.0
        %2224 = vmatprep.subr.mxu0 0.0
        %2225 = vmatpush1.msra.mxu0 0.0
        %2226 = vmatprep.subr.mxu0 0.0
        %2227 = vmatpush1.msra.mxu0 0.0
        %2228 = vmatprep.subr.mxu0 0.0
        %2229 = vmatpush1.msra.mxu0 0.0
        %2230 = vmatprep.subr.mxu0 0.0
        %2231 = vmatpush1.msra.mxu0 0.0
        %2232 = vmatprep.subr.mxu0 0.0
        %2233 = vmatpush1.msra.mxu0 0.0
        %2234 = vmatprep.subr.mxu0 0.0
        %2235 = vmatpush1.msra.mxu0 0.0
        %2236 = vmatprep.subr.mxu0 0.0
        %2237 = vmatpush1.msra.mxu0 0.0
        %2238 = vmatprep.subr.mxu0 0.0
        %2239 = vmatpush1.msra.mxu0 0.0
        %2240 = vmatprep.subr.mxu0 0.0
        %2241 = vmatpush1.msra.mxu0 0.0
        %2242 = vmatprep.subr.mxu0 0.0
        %2243 = vmatpush1.msra.mxu0 0.0
        %2244 = vmatprep.subr.mxu0 0.0
        %2245 = vmatpush1.msra.mxu0 0.0
        %2246 = vmatprep.subr.mxu0 0.0
        %2247 = vmatpush1.msra.mxu0 0.0
        %2248 = vmatprep.subr.mxu0 0.0
        %2249 = vmatpush1.msra.mxu0 0.0
        %2250 = vmatprep.subr.mxu0 0.0
        %2251 = vmatpush1.msra.mxu0 0.0
        %2252 = vmatprep.subr.mxu0 0.0
        %2253 = vmatpush1.msra.mxu0 0.0
        %2254 = vmatprep.mubr.f32.mxu0 0.0
        %2255 = vmatmul.mubr.f32.gmra.mrb[0].mxu0 %v2054
        %v2256 = vpop.f32.mrb[0].mxu0
        %v2257 = vadd.f32 0.0, %v2256
        %v2258 = vpop.f32.mrb[0].mxu0
        %2259 = vmatprep.mubr.f32.mxu0 0.0
        %2260 = vmatmul.mubr.f32.gmra.mrb[0].mxu0 %v2057
        %v2261 = vpop.f32.mrb[0].mxu0
        %v2262 = vadd.f32 0.0, %v2261
        %v2263 = vpop.f32.mrb[0].mxu0
        %2264 = vmatprep.mubr.f32.mxu0 0.0
        %2265 = vmatmul.mubr.f32.gmra.mrb[0].mxu0 %v2060
        %v2266 = vpop.f32.mrb[0].mxu0
        %v2267 = vadd.f32 0.0, %v2266
        %v2268 = vpop.f32.mrb[0].mxu0
        %2269 = vmatprep.mubr.f32.mxu0 0.0
        %2270 = vmatmul.mubr.f32.gmra.mrb[0].mxu0 %v2063
        %v2271 = vpop.f32.mrb[0].mxu0
        %v2272 = vadd.f32 0.0, %v2271
        %v2273 = vpop.f32.mrb[0].mxu0
        %2274 = vmatprep.mubr.f32.mxu0 0.0
        %2275 = vmatmul.mubr.f32.gmra.mrb[0].mxu0 %v2066
        %v2276 = vpop.f32.mrb[0].mxu0
        %v2277 = vadd.f32 0.0, %v2276
        %v2278 = vpop.f32.mrb[0].mxu0
        %2279 = vmatprep.mubr.f32.mxu0 0.0
        %2280 = vmatmul.mubr.f32.gmra.mrb[0].mxu0 %v2069
        %v2281 = vpop.f32.mrb[0].mxu0
        %v2282 = vadd.f32 0.0, %v2281
        %v2283 = vpop.f32.mrb[0].mxu0
        %2284 = vmatprep.mubr.f32.mxu0 0.0
        %2285 = vmatmul.mubr.f32.gmra.mrb[0].mxu0 %v2072
        %v2286 = vpop.f32.mrb[0].mxu0
        %v2287 = vadd.f32 0.0, %v2286
        %v2288 = vpop.f32.mrb[0].mxu0
        %2289 = vmatprep.mubr.f32.mxu0 0.0
        %2290 = vmatmul.mubr.f32.gmra.mrb[0].mxu0 %v2075
        %v2291 = vpop.f32.mrb[0].mxu0
        %v2292 = vadd.f32 0.0, %v2291
        %v2293 = vpop.f32.mrb[0].mxu0
        %2294 = vdwg.mxu0
        %v2295 = vadd.f32 %v1973, %v2144
        %v2296 = vadd.f32 %v1974, %v2146
        %v2297 = vadd.f32 %v1975, %v2257
        %v2298 = vadd.f32 %v1976, %v2150
        %v2299 = vadd.f32 %v1977, %v2152
        %v2300 = vadd.f32 %v1978, %v2262
        %v2301 = vadd.f32 %v1979, %v2156
        %v2302 = vadd.f32 %v1980, %v2158
        %v2303 = vadd.f32 %v1981, %v2267
        %v2304 = vadd.f32 %v1982, %v2162
        %v2305 = vadd.f32 %v1983, %v2164
        %v2306 = vadd.f32 %v1984, %v2272
        %v2307 = vadd.f32 %v1985, %v2168
        %v2308 = vadd.f32 %v1986, %v2170
        %v2309 = vadd.f32 %v1987, %v2277
        %v2310 = vadd.f32 %v1988, %v2174
        %v2311 = vadd.f32 %v1989, %v2176
        %v2312 = vadd.f32 %v1990, %v2282
        %v2313 = vadd.f32 %v1991, %v2180
        %v2314 = vadd.f32 %v1992, %v2182
        %v2315 = vadd.f32 %v1993, %v2287
        %v2316 = vadd.f32 %v1994, %v2186
        %v2317 = vadd.f32 %v1995, %v2188
        %v2318 = vadd.f32 %v1996, %v2292
        %2319 = vrot.lane.b32.xlu0 %v1113, 126
        %v2320 = vpop.permute.xlu0 %2319
        %2321 = vrot.lane.b32.xlu0 %v1114, 126
        %v2322 = vpop.permute.xlu0 %2321
        %2323 = vrot.lane.b32.xlu0 %v1115, 126
        %v2324 = vpop.permute.xlu0 %2323
        %2325 = vrot.lane.b32.xlu0 %v1116, 126
        %v2326 = vpop.permute.xlu0 %2325
        %2327 = vrot.lane.b32.xlu0 %v1117, 126
        %v2328 = vpop.permute.xlu0 %2327
        %2329 = vrot.lane.b32.xlu0 %v1118, 126
        %v2330 = vpop.permute.xlu0 %2329
        %2331 = vrot.lane.b32.xlu0 %v1119, 126
        %v2332 = vpop.permute.xlu0 %2331
        %2333 = vrot.lane.b32.xlu0 %v1120, 126
        %v2334 = vpop.permute.xlu0 %2333
        %2335 = vrot.lane.b32.xlu0 %v1121, 126
        %v2336 = vpop.permute.xlu0 %2335
        %2337 = vrot.lane.b32.xlu0 %v1122, 126
        %v2338 = vpop.permute.xlu0 %2337
        %2339 = vrot.lane.b32.xlu0 %v1123, 126
        %v2340 = vpop.permute.xlu0 %2339
        %2341 = vrot.lane.b32.xlu0 %v1124, 126
        %v2342 = vpop.permute.xlu0 %2341
        %vm2343 = vcmask 1031168
        %v2344 = vsel %vm2343, %v2320, %v2322
        %v2345 = vsel %vm2343, %v2322, %v2324
        %v2346 = vsel %vm2343, %v2326, %v2328
        %v2347 = vsel %vm2343, %v2328, %v2330
        %v2348 = vsel %vm2343, %v2332, %v2334
        %v2349 = vsel %vm2343, %v2334, %v2336
        %v2350 = vsel %vm2343, %v2338, %v2340
        %v2351 = vsel %vm2343, %v2340, %v2342
        %v2365 = vsel %vm1189, %v1173, 0
        %v2368 = vsel %vm1189, %v1174, 0
        %v2371 = vsel %vm1189, %v1175, 0
        %v2374 = vsel %vm1189, %v1176, 0
        %v2377 = vsel %vm1189, %v1177, 0
        %v2380 = vsel %vm1189, %v1178, 0
        %v2383 = vsel %vm1189, %v1179, 0
        %v2386 = vsel %vm1189, %v1180, 0
        %2388 = vmatprep.subr.mxu0 %v2345
        %2389 = vmatpush1.msra.mxu0 %v2344
        %2390 = vmatprep.subr.mxu0 %v2347
        %2391 = vmatpush1.msra.mxu0 %v2346
        %2392 = vmatprep.subr.mxu0 %v2349
        %2393 = vmatpush1.msra.mxu0 %v2348
        %2394 = vmatprep.subr.mxu0 %v2351
        %2395 = vmatpush1.msra.mxu0 %v2350
        %2396 = vmatprep.subr.mxu0 0.0
        %2397 = vmatpush1.msra.mxu0 0.0
        %2398 = vmatprep.subr.mxu0 0.0
        %2399 = vmatpush1.msra.mxu0 0.0
        %2400 = vmatprep.subr.mxu0 0.0
        %2401 = vmatpush1.msra.mxu0 0.0
        %2402 = vmatprep.subr.mxu0 0.0
        %2403 = vmatpush1.msra.mxu0 0.0
        %2404 = vmatprep.subr.mxu0 0.0
        %2405 = vmatpush1.msra.mxu0 0.0
        %2406 = vmatprep.subr.mxu0 0.0
        %2407 = vmatpush1.msra.mxu0 0.0
        %2408 = vmatprep.subr.mxu0 0.0
        %2409 = vmatpush1.msra.mxu0 0.0
        %2410 = vmatprep.subr.mxu0 0.0
        %2411 = vmatpush1.msra.mxu0 0.0
        %2412 = vmatprep.subr.mxu0 0.0
        %2413 = vmatpush1.msra.mxu0 0.0
        %2414 = vmatprep.subr.mxu0 0.0
        %2415 = vmatpush1.msra.mxu0 0.0
        %2416 = vmatprep.subr.mxu0 0.0
        %2417 = vmatpush1.msra.mxu0 0.0
        %2418 = vmatprep.subr.mxu0 0.0
        %2419 = vmatpush1.msra.mxu0 0.0
        %2420 = vmatprep.subr.mxu0 0.0
        %2421 = vmatpush1.msra.mxu0 0.0
        %2422 = vmatprep.subr.mxu0 0.0
        %2423 = vmatpush1.msra.mxu0 0.0
        %2424 = vmatprep.subr.mxu0 0.0
        %2425 = vmatpush1.msra.mxu0 0.0
        %2426 = vmatprep.subr.mxu0 0.0
        %2427 = vmatpush1.msra.mxu0 0.0
        %2428 = vmatprep.subr.mxu0 0.0
        %2429 = vmatpush1.msra.mxu0 0.0
        %2430 = vmatprep.subr.mxu0 0.0
        %2431 = vmatpush1.msra.mxu0 0.0
        %2432 = vmatprep.subr.mxu0 0.0
        %2433 = vmatpush1.msra.mxu0 0.0
        %2434 = vmatprep.subr.mxu0 0.0
        %2435 = vmatpush1.msra.mxu0 0.0
        %2436 = vmatprep.subr.mxu0 0.0
        %2437 = vmatpush1.msra.mxu0 0.0
        %2438 = vmatprep.subr.mxu0 0.0
        %2439 = vmatpush1.msra.mxu0 0.0
        %2440 = vmatprep.subr.mxu0 0.0
        %2441 = vmatpush1.msra.mxu0 0.0
        %2442 = vmatprep.subr.mxu0 0.0
        %2443 = vmatpush1.msra.mxu0 0.0
        %2444 = vmatprep.subr.mxu0 0.0
        %2445 = vmatpush1.msra.mxu0 0.0
        %2446 = vmatprep.subr.mxu0 0.0
        %2447 = vmatpush1.msra.mxu0 0.0
        %2448 = vmatprep.subr.mxu0 0.0
        %2449 = vmatpush1.msra.mxu0 0.0
        %2450 = vmatprep.subr.mxu0 0.0
        %2451 = vmatpush1.msra.mxu0 0.0
        %2452 = vmatprep.mubr.f32.mxu0 0.0
        %2453 = vmatmul.mubr.f32.gmra.mrb[0].mxu0 %v2365
        %v2454 = vpop.f32.mrb[0].mxu0
        %v2455 = vadd.f32 0.0, %v2454
        %v2456 = vpop.f32.mrb[0].mxu0
        %v2457 = vadd.f32 0.0, %v2456
        %2458 = vmatprep.mubr.f32.mxu0 0.0
        %2459 = vmatmul.mubr.f32.gmra.mrb[0].mxu0 %v2368
        %v2460 = vpop.f32.mrb[0].mxu0
        %v2461 = vadd.f32 0.0, %v2460
        %v2462 = vpop.f32.mrb[0].mxu0
        %v2463 = vadd.f32 0.0, %v2462
        %2464 = vmatprep.mubr.f32.mxu0 0.0
        %2465 = vmatmul.mubr.f32.gmra.mrb[0].mxu0 %v2371
        %v2466 = vpop.f32.mrb[0].mxu0
        %v2467 = vadd.f32 0.0, %v2466
        %v2468 = vpop.f32.mrb[0].mxu0
        %v2469 = vadd.f32 0.0, %v2468
        %2470 = vmatprep.mubr.f32.mxu0 0.0
        %2471 = vmatmul.mubr.f32.gmra.mrb[0].mxu0 %v2374
        %v2472 = vpop.f32.mrb[0].mxu0
        %v2473 = vadd.f32 0.0, %v2472
        %v2474 = vpop.f32.mrb[0].mxu0
        %v2475 = vadd.f32 0.0, %v2474
        %2476 = vmatprep.mubr.f32.mxu0 0.0
        %2477 = vmatmul.mubr.f32.gmra.mrb[0].mxu0 %v2377
        %v2478 = vpop.f32.mrb[0].mxu0
        %v2479 = vadd.f32 0.0, %v2478
        %v2480 = vpop.f32.mrb[0].mxu0
        %v2481 = vadd.f32 0.0, %v2480
        %2482 = vmatprep.mubr.f32.mxu0 0.0
        %2483 = vmatmul.mubr.f32.gmra.mrb[0].mxu0 %v2380
        %v2484 = vpop.f32.mrb[0].mxu0
        %v2485 = vadd.f32 0.0, %v2484
        %v2486 = vpop.f32.mrb[0].mxu0
        %v2487 = vadd.f32 0.0, %v2486
        %2488 = vmatprep.mubr.f32.mxu0 0.0
        %2489 = vmatmul.mubr.f32.gmra.mrb[0].mxu0 %v2383
        %v2490 = vpop.f32.mrb[0].mxu0
        %v2491 = vadd.f32 0.0, %v2490
        %v2492 = vpop.f32.mrb[0].mxu0
        %v2493 = vadd.f32 0.0, %v2492
        %2494 = vmatprep.mubr.f32.mxu0 0.0
        %2495 = vmatmul.mubr.f32.gmra.mrb[0].mxu0 %v2386
        %v2496 = vpop.f32.mrb[0].mxu0
        %v2497 = vadd.f32 0.0, %v2496
        %v2498 = vpop.f32.mrb[0].mxu0
        %v2499 = vadd.f32 0.0, %v2498
        %2500 = vdwg.mxu0
        %2501 = vmatprep.subr.mxu0 0.0
        %2502 = vmatpush1.msra.mxu0 %v2324
        %2503 = vmatprep.subr.mxu0 0.0
        %2504 = vmatpush1.msra.mxu0 %v2330
        %2505 = vmatprep.subr.mxu0 0.0
        %2506 = vmatpush1.msra.mxu0 %v2336
        %2507 = vmatprep.subr.mxu0 0.0
        %2508 = vmatpush1.msra.mxu0 %v2342
        %2509 = vmatprep.subr.mxu0 0.0
        %2510 = vmatpush1.msra.mxu0 0.0
        %2511 = vmatprep.subr.mxu0 0.0
        %2512 = vmatpush1.msra.mxu0 0.0
        %2513 = vmatprep.subr.mxu0 0.0
        %2514 = vmatpush1.msra.mxu0 0.0
        %2515 = vmatprep.subr.mxu0 0.0
        %2516 = vmatpush1.msra.mxu0 0.0
        %2517 = vmatprep.subr.mxu0 0.0
        %2518 = vmatpush1.msra.mxu0 0.0
        %2519 = vmatprep.subr.mxu0 0.0
        %2520 = vmatpush1.msra.mxu0 0.0
        %2521 = vmatprep.subr.mxu0 0.0
        %2522 = vmatpush1.msra.mxu0 0.0
        %2523 = vmatprep.subr.mxu0 0.0
        %2524 = vmatpush1.msra.mxu0 0.0
        %2525 = vmatprep.subr.mxu0 0.0
        %2526 = vmatpush1.msra.mxu0 0.0
        %2527 = vmatprep.subr.mxu0 0.0
        %2528 = vmatpush1.msra.mxu0 0.0
        %2529 = vmatprep.subr.mxu0 0.0
        %2530 = vmatpush1.msra.mxu0 0.0
        %2531 = vmatprep.subr.mxu0 0.0
        %2532 = vmatpush1.msra.mxu0 0.0
        %2533 = vmatprep.subr.mxu0 0.0
        %2534 = vmatpush1.msra.mxu0 0.0
        %2535 = vmatprep.subr.mxu0 0.0
        %2536 = vmatpush1.msra.mxu0 0.0
        %2537 = vmatprep.subr.mxu0 0.0
        %2538 = vmatpush1.msra.mxu0 0.0
        %2539 = vmatprep.subr.mxu0 0.0
        %2540 = vmatpush1.msra.mxu0 0.0
        %2541 = vmatprep.subr.mxu0 0.0
        %2542 = vmatpush1.msra.mxu0 0.0
        %2543 = vmatprep.subr.mxu0 0.0
        %2544 = vmatpush1.msra.mxu0 0.0
        %2545 = vmatprep.subr.mxu0 0.0
        %2546 = vmatpush1.msra.mxu0 0.0
        %2547 = vmatprep.subr.mxu0 0.0
        %2548 = vmatpush1.msra.mxu0 0.0
        %2549 = vmatprep.subr.mxu0 0.0
        %2550 = vmatpush1.msra.mxu0 0.0
        %2551 = vmatprep.subr.mxu0 0.0
        %2552 = vmatpush1.msra.mxu0 0.0
        %2553 = vmatprep.subr.mxu0 0.0
        %2554 = vmatpush1.msra.mxu0 0.0
        %2555 = vmatprep.subr.mxu0 0.0
        %2556 = vmatpush1.msra.mxu0 0.0
        %2557 = vmatprep.subr.mxu0 0.0
        %2558 = vmatpush1.msra.mxu0 0.0
        %2559 = vmatprep.subr.mxu0 0.0
        %2560 = vmatpush1.msra.mxu0 0.0
        %2561 = vmatprep.subr.mxu0 0.0
        %2562 = vmatpush1.msra.mxu0 0.0
        %2563 = vmatprep.subr.mxu0 0.0
        %2564 = vmatpush1.msra.mxu0 0.0
        %2565 = vmatprep.mubr.f32.mxu0 0.0
        %2566 = vmatmul.mubr.f32.gmra.mrb[0].mxu0 %v2365
        %v2567 = vpop.f32.mrb[0].mxu0
        %v2568 = vadd.f32 0.0, %v2567
        %v2569 = vpop.f32.mrb[0].mxu0
        %2570 = vmatprep.mubr.f32.mxu0 0.0
        %2571 = vmatmul.mubr.f32.gmra.mrb[0].mxu0 %v2368
        %v2572 = vpop.f32.mrb[0].mxu0
        %v2573 = vadd.f32 0.0, %v2572
        %v2574 = vpop.f32.mrb[0].mxu0
        %2575 = vmatprep.mubr.f32.mxu0 0.0
        %2576 = vmatmul.mubr.f32.gmra.mrb[0].mxu0 %v2371
        %v2577 = vpop.f32.mrb[0].mxu0
        %v2578 = vadd.f32 0.0, %v2577
        %v2579 = vpop.f32.mrb[0].mxu0
        %2580 = vmatprep.mubr.f32.mxu0 0.0
        %2581 = vmatmul.mubr.f32.gmra.mrb[0].mxu0 %v2374
        %v2582 = vpop.f32.mrb[0].mxu0
        %v2583 = vadd.f32 0.0, %v2582
        %v2584 = vpop.f32.mrb[0].mxu0
        %2585 = vmatprep.mubr.f32.mxu0 0.0
        %2586 = vmatmul.mubr.f32.gmra.mrb[0].mxu0 %v2377
        %v2587 = vpop.f32.mrb[0].mxu0
        %v2588 = vadd.f32 0.0, %v2587
        %v2589 = vpop.f32.mrb[0].mxu0
        %2590 = vmatprep.mubr.f32.mxu0 0.0
        %2591 = vmatmul.mubr.f32.gmra.mrb[0].mxu0 %v2380
        %v2592 = vpop.f32.mrb[0].mxu0
        %v2593 = vadd.f32 0.0, %v2592
        %v2594 = vpop.f32.mrb[0].mxu0
        %2595 = vmatprep.mubr.f32.mxu0 0.0
        %2596 = vmatmul.mubr.f32.gmra.mrb[0].mxu0 %v2383
        %v2597 = vpop.f32.mrb[0].mxu0
        %v2598 = vadd.f32 0.0, %v2597
        %v2599 = vpop.f32.mrb[0].mxu0
        %2600 = vmatprep.mubr.f32.mxu0 0.0
        %2601 = vmatmul.mubr.f32.gmra.mrb[0].mxu0 %v2386
        %v2602 = vpop.f32.mrb[0].mxu0
        %v2603 = vadd.f32 0.0, %v2602
        %v2604 = vpop.f32.mrb[0].mxu0
        %2605 = vdwg.mxu0
        %v2606 = vadd.f32 %v2295, %v2455
        %v2607 = vadd.f32 %v2296, %v2457
        %v2608 = vadd.f32 %v2297, %v2568
        %v2609 = vadd.f32 %v2298, %v2461
        %v2610 = vadd.f32 %v2299, %v2463
        %v2611 = vadd.f32 %v2300, %v2573
        %v2612 = vadd.f32 %v2301, %v2467
        %v2613 = vadd.f32 %v2302, %v2469
        %v2614 = vadd.f32 %v2303, %v2578
        %v2615 = vadd.f32 %v2304, %v2473
        %v2616 = vadd.f32 %v2305, %v2475
        %v2617 = vadd.f32 %v2306, %v2583
        %v2618 = vadd.f32 %v2307, %v2479
        %v2619 = vadd.f32 %v2308, %v2481
        %v2620 = vadd.f32 %v2309, %v2588
        %v2621 = vadd.f32 %v2310, %v2485
        %v2622 = vadd.f32 %v2311, %v2487
        %v2623 = vadd.f32 %v2312, %v2593
        %v2624 = vadd.f32 %v2313, %v2491
        %v2625 = vadd.f32 %v2314, %v2493
        %v2626 = vadd.f32 %v2315, %v2598
        %v2627 = vadd.f32 %v2316, %v2497
        %v2628 = vadd.f32 %v2317, %v2499
        %v2629 = vadd.f32 %v2318, %v2603
        %2630 = vmatprep.subr.mxu0 %v1712
        %2631 = vmatpush1.msra.mxu0 %v1711
        %2632 = vmatprep.subr.mxu0 %v1714
        %2633 = vmatpush1.msra.mxu0 %v1713
        %2634 = vmatprep.subr.mxu0 %v1716
        %2635 = vmatpush1.msra.mxu0 %v1715
        %2636 = vmatprep.subr.mxu0 %v1718
        %2637 = vmatpush1.msra.mxu0 %v1717
        %2638 = vmatprep.subr.mxu0 0.0
        %2639 = vmatpush1.msra.mxu0 0.0
        %2640 = vmatprep.subr.mxu0 0.0
        %2641 = vmatpush1.msra.mxu0 0.0
        %2642 = vmatprep.subr.mxu0 0.0
        %2643 = vmatpush1.msra.mxu0 0.0
        %2644 = vmatprep.subr.mxu0 0.0
        %2645 = vmatpush1.msra.mxu0 0.0
        %2646 = vmatprep.subr.mxu0 0.0
        %2647 = vmatpush1.msra.mxu0 0.0
        %2648 = vmatprep.subr.mxu0 0.0
        %2649 = vmatpush1.msra.mxu0 0.0
        %2650 = vmatprep.subr.mxu0 0.0
        %2651 = vmatpush1.msra.mxu0 0.0
        %2652 = vmatprep.subr.mxu0 0.0
        %2653 = vmatpush1.msra.mxu0 0.0
        %2654 = vmatprep.subr.mxu0 0.0
        %2655 = vmatpush1.msra.mxu0 0.0
        %2656 = vmatprep.subr.mxu0 0.0
        %2657 = vmatpush1.msra.mxu0 0.0
        %2658 = vmatprep.subr.mxu0 0.0
        %2659 = vmatpush1.msra.mxu0 0.0
        %2660 = vmatprep.subr.mxu0 0.0
        %2661 = vmatpush1.msra.mxu0 0.0
        %2662 = vmatprep.subr.mxu0 0.0
        %2663 = vmatpush1.msra.mxu0 0.0
        %2664 = vmatprep.subr.mxu0 0.0
        %2665 = vmatpush1.msra.mxu0 0.0
        %2666 = vmatprep.subr.mxu0 0.0
        %2667 = vmatpush1.msra.mxu0 0.0
        %2668 = vmatprep.subr.mxu0 0.0
        %2669 = vmatpush1.msra.mxu0 0.0
        %2670 = vmatprep.subr.mxu0 0.0
        %2671 = vmatpush1.msra.mxu0 0.0
        %2672 = vmatprep.subr.mxu0 0.0
        %2673 = vmatpush1.msra.mxu0 0.0
        %2674 = vmatprep.subr.mxu0 0.0
        %2675 = vmatpush1.msra.mxu0 0.0
        %2676 = vmatprep.subr.mxu0 0.0
        %2677 = vmatpush1.msra.mxu0 0.0
        %2678 = vmatprep.subr.mxu0 0.0
        %2679 = vmatpush1.msra.mxu0 0.0
        %2680 = vmatprep.subr.mxu0 0.0
        %2681 = vmatpush1.msra.mxu0 0.0
        %2682 = vmatprep.subr.mxu0 0.0
        %2683 = vmatpush1.msra.mxu0 0.0
        %2684 = vmatprep.subr.mxu0 0.0
        %2685 = vmatpush1.msra.mxu0 0.0
        %2686 = vmatprep.subr.mxu0 0.0
        %2687 = vmatpush1.msra.mxu0 0.0
        %2688 = vmatprep.subr.mxu0 0.0
        %2689 = vmatpush1.msra.mxu0 0.0
        %2690 = vmatprep.subr.mxu0 0.0
        %2691 = vmatpush1.msra.mxu0 0.0
        %2692 = vmatprep.subr.mxu0 0.0
        %2693 = vmatpush1.msra.mxu0 0.0
        %2694 = vmatprep.mubr.f32.mxu0 0.0
        %2695 = vmatmul.mubr.f32.gmra.mrb[0].mxu0 %v1191
        %v2696 = vpop.f32.mrb[0].mxu0
        %v2697 = vadd.f32 0.0, %v2696
        %v2698 = vpop.f32.mrb[0].mxu0
        %v2699 = vadd.f32 0.0, %v2698
        %2700 = vmatprep.mubr.f32.mxu0 0.0
        %2701 = vmatmul.mubr.f32.gmra.mrb[0].mxu0 %v1194
        %v2702 = vpop.f32.mrb[0].mxu0
        %v2703 = vadd.f32 0.0, %v2702
        %v2704 = vpop.f32.mrb[0].mxu0
        %v2705 = vadd.f32 0.0, %v2704
        %2706 = vmatprep.mubr.f32.mxu0 0.0
        %2707 = vmatmul.mubr.f32.gmra.mrb[0].mxu0 %v1197
        %v2708 = vpop.f32.mrb[0].mxu0
        %v2709 = vadd.f32 0.0, %v2708
        %v2710 = vpop.f32.mrb[0].mxu0
        %v2711 = vadd.f32 0.0, %v2710
        %2712 = vmatprep.mubr.f32.mxu0 0.0
        %2713 = vmatmul.mubr.f32.gmra.mrb[0].mxu0 %v1200
        %v2714 = vpop.f32.mrb[0].mxu0
        %v2715 = vadd.f32 0.0, %v2714
        %v2716 = vpop.f32.mrb[0].mxu0
        %v2717 = vadd.f32 0.0, %v2716
        %2718 = vmatprep.mubr.f32.mxu0 0.0
        %2719 = vmatmul.mubr.f32.gmra.mrb[0].mxu0 %v1203
        %v2720 = vpop.f32.mrb[0].mxu0
        %v2721 = vadd.f32 0.0, %v2720
        %v2722 = vpop.f32.mrb[0].mxu0
        %v2723 = vadd.f32 0.0, %v2722
        %2724 = vmatprep.mubr.f32.mxu0 0.0
        %2725 = vmatmul.mubr.f32.gmra.mrb[0].mxu0 %v1206
        %v2726 = vpop.f32.mrb[0].mxu0
        %v2727 = vadd.f32 0.0, %v2726
        %v2728 = vpop.f32.mrb[0].mxu0
        %v2729 = vadd.f32 0.0, %v2728
        %2730 = vmatprep.mubr.f32.mxu0 0.0
        %2731 = vmatmul.mubr.f32.gmra.mrb[0].mxu0 %v1209
        %v2732 = vpop.f32.mrb[0].mxu0
        %v2733 = vadd.f32 0.0, %v2732
        %v2734 = vpop.f32.mrb[0].mxu0
        %v2735 = vadd.f32 0.0, %v2734
        %2736 = vmatprep.mubr.f32.mxu0 0.0
        %2737 = vmatmul.mubr.f32.gmra.mrb[0].mxu0 %v1212
        %v2738 = vpop.f32.mrb[0].mxu0
        %v2739 = vadd.f32 0.0, %v2738
        %v2740 = vpop.f32.mrb[0].mxu0
        %v2741 = vadd.f32 0.0, %v2740
        %2742 = vdwg.mxu0
        %2743 = vmatprep.subr.mxu0 0.0
        %2744 = vmatpush1.msra.mxu0 %v1691
        %2745 = vmatprep.subr.mxu0 0.0
        %2746 = vmatpush1.msra.mxu0 %v1697
        %2747 = vmatprep.subr.mxu0 0.0
        %2748 = vmatpush1.msra.mxu0 %v1703
        %2749 = vmatprep.subr.mxu0 0.0
        %2750 = vmatpush1.msra.mxu0 %v1709
        %2751 = vmatprep.subr.mxu0 0.0
        %2752 = vmatpush1.msra.mxu0 0.0
        %2753 = vmatprep.subr.mxu0 0.0
        %2754 = vmatpush1.msra.mxu0 0.0
        %2755 = vmatprep.subr.mxu0 0.0
        %2756 = vmatpush1.msra.mxu0 0.0
        %2757 = vmatprep.subr.mxu0 0.0
        %2758 = vmatpush1.msra.mxu0 0.0
        %2759 = vmatprep.subr.mxu0 0.0
        %2760 = vmatpush1.msra.mxu0 0.0
        %2761 = vmatprep.subr.mxu0 0.0
        %2762 = vmatpush1.msra.mxu0 0.0
        %2763 = vmatprep.subr.mxu0 0.0
        %2764 = vmatpush1.msra.mxu0 0.0
        %2765 = vmatprep.subr.mxu0 0.0
        %2766 = vmatpush1.msra.mxu0 0.0
        %2767 = vmatprep.subr.mxu0 0.0
        %2768 = vmatpush1.msra.mxu0 0.0
        %2769 = vmatprep.subr.mxu0 0.0
        %2770 = vmatpush1.msra.mxu0 0.0
        %2771 = vmatprep.subr.mxu0 0.0
        %2772 = vmatpush1.msra.mxu0 0.0
        %2773 = vmatprep.subr.mxu0 0.0
        %2774 = vmatpush1.msra.mxu0 0.0
        %2775 = vmatprep.subr.mxu0 0.0
        %2776 = vmatpush1.msra.mxu0 0.0
        %2777 = vmatprep.subr.mxu0 0.0
        %2778 = vmatpush1.msra.mxu0 0.0
        %2779 = vmatprep.subr.mxu0 0.0
        %2780 = vmatpush1.msra.mxu0 0.0
        %2781 = vmatprep.subr.mxu0 0.0
        %2782 = vmatpush1.msra.mxu0 0.0
        %2783 = vmatprep.subr.mxu0 0.0
        %2784 = vmatpush1.msra.mxu0 0.0
        %2785 = vmatprep.subr.mxu0 0.0
        %2786 = vmatpush1.msra.mxu0 0.0
        %2787 = vmatprep.subr.mxu0 0.0
        %2788 = vmatpush1.msra.mxu0 0.0
        %2789 = vmatprep.subr.mxu0 0.0
        %2790 = vmatpush1.msra.mxu0 0.0
        %2791 = vmatprep.subr.mxu0 0.0
        %2792 = vmatpush1.msra.mxu0 0.0
        %2793 = vmatprep.subr.mxu0 0.0
        %2794 = vmatpush1.msra.mxu0 0.0
        %2795 = vmatprep.subr.mxu0 0.0
        %2796 = vmatpush1.msra.mxu0 0.0
        %2797 = vmatprep.subr.mxu0 0.0
        %2798 = vmatpush1.msra.mxu0 0.0
        %2799 = vmatprep.subr.mxu0 0.0
        %2800 = vmatpush1.msra.mxu0 0.0
        %2801 = vmatprep.subr.mxu0 0.0
        %2802 = vmatpush1.msra.mxu0 0.0
        %2803 = vmatprep.subr.mxu0 0.0
        %2804 = vmatpush1.msra.mxu0 0.0
        %2805 = vmatprep.subr.mxu0 0.0
        %2806 = vmatpush1.msra.mxu0 0.0
        %2807 = vmatprep.mubr.f32.mxu0 0.0
        %2808 = vmatmul.mubr.f32.gmra.mrb[0].mxu0 %v1191
        %v2809 = vpop.f32.mrb[0].mxu0
        %v2810 = vadd.f32 0.0, %v2809
        %v2811 = vpop.f32.mrb[0].mxu0
        %2812 = vmatprep.mubr.f32.mxu0 0.0
        %2813 = vmatmul.mubr.f32.gmra.mrb[0].mxu0 %v1194
        %v2814 = vpop.f32.mrb[0].mxu0
        %v2815 = vadd.f32 0.0, %v2814
        %v2816 = vpop.f32.mrb[0].mxu0
        %2817 = vmatprep.mubr.f32.mxu0 0.0
        %2818 = vmatmul.mubr.f32.gmra.mrb[0].mxu0 %v1197
        %v2819 = vpop.f32.mrb[0].mxu0
        %v2820 = vadd.f32 0.0, %v2819
        %v2821 = vpop.f32.mrb[0].mxu0
        %2822 = vmatprep.mubr.f32.mxu0 0.0
        %2823 = vmatmul.mubr.f32.gmra.mrb[0].mxu0 %v1200
        %v2824 = vpop.f32.mrb[0].mxu0
        %v2825 = vadd.f32 0.0, %v2824
        %v2826 = vpop.f32.mrb[0].mxu0
        %2827 = vmatprep.mubr.f32.mxu0 0.0
        %2828 = vmatmul.mubr.f32.gmra.mrb[0].mxu0 %v1203
        %v2829 = vpop.f32.mrb[0].mxu0
        %v2830 = vadd.f32 0.0, %v2829
        %v2831 = vpop.f32.mrb[0].mxu0
        %2832 = vmatprep.mubr.f32.mxu0 0.0
        %2833 = vmatmul.mubr.f32.gmra.mrb[0].mxu0 %v1206
        %v2834 = vpop.f32.mrb[0].mxu0
        %v2835 = vadd.f32 0.0, %v2834
        %v2836 = vpop.f32.mrb[0].mxu0
        %2837 = vmatprep.mubr.f32.mxu0 0.0
        %2838 = vmatmul.mubr.f32.gmra.mrb[0].mxu0 %v1209
        %v2839 = vpop.f32.mrb[0].mxu0
        %v2840 = vadd.f32 0.0, %v2839
        %v2841 = vpop.f32.mrb[0].mxu0
        %2842 = vmatprep.mubr.f32.mxu0 0.0
        %2843 = vmatmul.mubr.f32.gmra.mrb[0].mxu0 %v1212
        %v2844 = vpop.f32.mrb[0].mxu0
        %v2845 = vadd.f32 0.0, %v2844
        %v2846 = vpop.f32.mrb[0].mxu0
        %2847 = vdwg.mxu0
        %2848 = vmatprep.subr.mxu0 %v1126
        %2849 = vmatpush1.msra.mxu0 %v1125
        %2850 = vmatprep.subr.mxu0 %v1129
        %2851 = vmatpush1.msra.mxu0 %v1128
        %2852 = vmatprep.subr.mxu0 %v1132
        %2853 = vmatpush1.msra.mxu0 %v1131
        %2854 = vmatprep.subr.mxu0 %v1135
        %2855 = vmatpush1.msra.mxu0 %v1134
        %2856 = vmatprep.subr.mxu0 0.0
        %2857 = vmatpush1.msra.mxu0 0.0
        %2858 = vmatprep.subr.mxu0 0.0
        %2859 = vmatpush1.msra.mxu0 0.0
        %2860 = vmatprep.subr.mxu0 0.0
        %2861 = vmatpush1.msra.mxu0 0.0
        %2862 = vmatprep.subr.mxu0 0.0
        %2863 = vmatpush1.msra.mxu0 0.0
        %2864 = vmatprep.subr.mxu0 0.0
        %2865 = vmatpush1.msra.mxu0 0.0
        %2866 = vmatprep.subr.mxu0 0.0
        %2867 = vmatpush1.msra.mxu0 0.0
        %2868 = vmatprep.subr.mxu0 0.0
        %2869 = vmatpush1.msra.mxu0 0.0
        %2870 = vmatprep.subr.mxu0 0.0
        %2871 = vmatpush1.msra.mxu0 0.0
        %2872 = vmatprep.subr.mxu0 0.0
        %2873 = vmatpush1.msra.mxu0 0.0
        %2874 = vmatprep.subr.mxu0 0.0
        %2875 = vmatpush1.msra.mxu0 0.0
        %2876 = vmatprep.subr.mxu0 0.0
        %2877 = vmatpush1.msra.mxu0 0.0
        %2878 = vmatprep.subr.mxu0 0.0
        %2879 = vmatpush1.msra.mxu0 0.0
        %2880 = vmatprep.subr.mxu0 0.0
        %2881 = vmatpush1.msra.mxu0 0.0
        %2882 = vmatprep.subr.mxu0 0.0
        %2883 = vmatpush1.msra.mxu0 0.0
        %2884 = vmatprep.subr.mxu0 0.0
        %2885 = vmatpush1.msra.mxu0 0.0
        %2886 = vmatprep.subr.mxu0 0.0
        %2887 = vmatpush1.msra.mxu0 0.0
        %2888 = vmatprep.subr.mxu0 0.0
        %2889 = vmatpush1.msra.mxu0 0.0
        %2890 = vmatprep.subr.mxu0 0.0
        %2891 = vmatpush1.msra.mxu0 0.0
        %2892 = vmatprep.subr.mxu0 0.0
        %2893 = vmatpush1.msra.mxu0 0.0
        %2894 = vmatprep.subr.mxu0 0.0
        %2895 = vmatpush1.msra.mxu0 0.0
        %2896 = vmatprep.subr.mxu0 0.0
        %2897 = vmatpush1.msra.mxu0 0.0
        %2898 = vmatprep.subr.mxu0 0.0
        %2899 = vmatpush1.msra.mxu0 0.0
        %2900 = vmatprep.subr.mxu0 0.0
        %2901 = vmatpush1.msra.mxu0 0.0
        %2902 = vmatprep.subr.mxu0 0.0
        %2903 = vmatpush1.msra.mxu0 0.0
        %2904 = vmatprep.subr.mxu0 0.0
        %2905 = vmatpush1.msra.mxu0 0.0
        %2906 = vmatprep.subr.mxu0 0.0
        %2907 = vmatpush1.msra.mxu0 0.0
        %2908 = vmatprep.subr.mxu0 0.0
        %2909 = vmatpush1.msra.mxu0 0.0
        %2910 = vmatprep.subr.mxu0 0.0
        %2911 = vmatpush1.msra.mxu0 0.0
        %2912 = vmatprep.mubr.f32.mxu0 0.0
        %2913 = vmatmul.mubr.f32.gmra.mrb[0].mxu0 %v1433
        %v2914 = vpop.f32.mrb[0].mxu0
        %v2915 = vadd.f32 %v2697, %v2914
        %v2916 = vpop.f32.mrb[0].mxu0
        %v2917 = vadd.f32 %v2699, %v2916
        %2918 = vmatprep.mubr.f32.mxu0 0.0
        %2919 = vmatmul.mubr.f32.gmra.mrb[0].mxu0 %v1436
        %v2920 = vpop.f32.mrb[0].mxu0
        %v2921 = vadd.f32 %v2703, %v2920
        %v2922 = vpop.f32.mrb[0].mxu0
        %v2923 = vadd.f32 %v2705, %v2922
        %2924 = vmatprep.mubr.f32.mxu0 0.0
        %2925 = vmatmul.mubr.f32.gmra.mrb[0].mxu0 %v1439
        %v2926 = vpop.f32.mrb[0].mxu0
        %v2927 = vadd.f32 %v2709, %v2926
        %v2928 = vpop.f32.mrb[0].mxu0
        %v2929 = vadd.f32 %v2711, %v2928
        %2930 = vmatprep.mubr.f32.mxu0 0.0
        %2931 = vmatmul.mubr.f32.gmra.mrb[0].mxu0 %v1442
        %v2932 = vpop.f32.mrb[0].mxu0
        %v2933 = vadd.f32 %v2715, %v2932
        %v2934 = vpop.f32.mrb[0].mxu0
        %v2935 = vadd.f32 %v2717, %v2934
        %2936 = vmatprep.mubr.f32.mxu0 0.0
        %2937 = vmatmul.mubr.f32.gmra.mrb[0].mxu0 %v1445
        %v2938 = vpop.f32.mrb[0].mxu0
        %v2939 = vadd.f32 %v2721, %v2938
        %v2940 = vpop.f32.mrb[0].mxu0
        %v2941 = vadd.f32 %v2723, %v2940
        %2942 = vmatprep.mubr.f32.mxu0 0.0
        %2943 = vmatmul.mubr.f32.gmra.mrb[0].mxu0 %v1448
        %v2944 = vpop.f32.mrb[0].mxu0
        %v2945 = vadd.f32 %v2727, %v2944
        %v2946 = vpop.f32.mrb[0].mxu0
        %v2947 = vadd.f32 %v2729, %v2946
        %2948 = vmatprep.mubr.f32.mxu0 0.0
        %2949 = vmatmul.mubr.f32.gmra.mrb[0].mxu0 %v1451
        %v2950 = vpop.f32.mrb[0].mxu0
        %v2951 = vadd.f32 %v2733, %v2950
        %v2952 = vpop.f32.mrb[0].mxu0
        %v2953 = vadd.f32 %v2735, %v2952
        %2954 = vmatprep.mubr.f32.mxu0 0.0
        %2955 = vmatmul.mubr.f32.gmra.mrb[0].mxu0 %v1454
        %v2956 = vpop.f32.mrb[0].mxu0
        %v2957 = vadd.f32 %v2739, %v2956
        %v2958 = vpop.f32.mrb[0].mxu0
        %v2959 = vadd.f32 %v2741, %v2958
        %2960 = vdwg.mxu0
        %2961 = vmatprep.subr.mxu0 0.0
        %2962 = vmatpush1.msra.mxu0 %v1127
        %2963 = vmatprep.subr.mxu0 0.0
        %2964 = vmatpush1.msra.mxu0 %v1130
        %2965 = vmatprep.subr.mxu0 0.0
        %2966 = vmatpush1.msra.mxu0 %v1133
        %2967 = vmatprep.subr.mxu0 0.0
        %2968 = vmatpush1.msra.mxu0 %v1136
        %2969 = vmatprep.subr.mxu0 0.0
        %2970 = vmatpush1.msra.mxu0 0.0
        %2971 = vmatprep.subr.mxu0 0.0
        %2972 = vmatpush1.msra.mxu0 0.0
        %2973 = vmatprep.subr.mxu0 0.0
        %2974 = vmatpush1.msra.mxu0 0.0
        %2975 = vmatprep.subr.mxu0 0.0
        %2976 = vmatpush1.msra.mxu0 0.0
        %2977 = vmatprep.subr.mxu0 0.0
        %2978 = vmatpush1.msra.mxu0 0.0
        %2979 = vmatprep.subr.mxu0 0.0
        %2980 = vmatpush1.msra.mxu0 0.0
        %2981 = vmatprep.subr.mxu0 0.0
        %2982 = vmatpush1.msra.mxu0 0.0
        %2983 = vmatprep.subr.mxu0 0.0
        %2984 = vmatpush1.msra.mxu0 0.0
        %2985 = vmatprep.subr.mxu0 0.0
        %2986 = vmatpush1.msra.mxu0 0.0
        %2987 = vmatprep.subr.mxu0 0.0
        %2988 = vmatpush1.msra.mxu0 0.0
        %2989 = vmatprep.subr.mxu0 0.0
        %2990 = vmatpush1.msra.mxu0 0.0
        %2991 = vmatprep.subr.mxu0 0.0
        %2992 = vmatpush1.msra.mxu0 0.0
        %2993 = vmatprep.subr.mxu0 0.0
        %2994 = vmatpush1.msra.mxu0 0.0
        %2995 = vmatprep.subr.mxu0 0.0
        %2996 = vmatpush1.msra.mxu0 0.0
        %2997 = vmatprep.subr.mxu0 0.0
        %2998 = vmatpush1.msra.mxu0 0.0
        %2999 = vmatprep.subr.mxu0 0.0
        %3000 = vmatpush1.msra.mxu0 0.0
        %3001 = vmatprep.subr.mxu0 0.0
        %3002 = vmatpush1.msra.mxu0 0.0
        %3003 = vmatprep.subr.mxu0 0.0
        %3004 = vmatpush1.msra.mxu0 0.0
        %3005 = vmatprep.subr.mxu0 0.0
        %3006 = vmatpush1.msra.mxu0 0.0
        %3007 = vmatprep.subr.mxu0 0.0
        %3008 = vmatpush1.msra.mxu0 0.0
        %3009 = vmatprep.subr.mxu0 0.0
        %3010 = vmatpush1.msra.mxu0 0.0
        %3011 = vmatprep.subr.mxu0 0.0
        %3012 = vmatpush1.msra.mxu0 0.0
        %3013 = vmatprep.subr.mxu0 0.0
        %3014 = vmatpush1.msra.mxu0 0.0
        %3015 = vmatprep.subr.mxu0 0.0
        %3016 = vmatpush1.msra.mxu0 0.0
        %3017 = vmatprep.subr.mxu0 0.0
        %3018 = vmatpush1.msra.mxu0 0.0
        %3019 = vmatprep.subr.mxu0 0.0
        %3020 = vmatpush1.msra.mxu0 0.0
        %3021 = vmatprep.subr.mxu0 0.0
        %3022 = vmatpush1.msra.mxu0 0.0
        %3023 = vmatprep.subr.mxu0 0.0
        %3024 = vmatpush1.msra.mxu0 0.0
        %3025 = vmatprep.mubr.f32.mxu0 0.0
        %3026 = vmatmul.mubr.f32.gmra.mrb[0].mxu0 %v1433
        %v3027 = vpop.f32.mrb[0].mxu0
        %v3028 = vadd.f32 %v2810, %v3027
        %v3029 = vpop.f32.mrb[0].mxu0
        %3030 = vmatprep.mubr.f32.mxu0 0.0
        %3031 = vmatmul.mubr.f32.gmra.mrb[0].mxu0 %v1436
        %v3032 = vpop.f32.mrb[0].mxu0
        %v3033 = vadd.f32 %v2815, %v3032
        %v3034 = vpop.f32.mrb[0].mxu0
        %3035 = vmatprep.mubr.f32.mxu0 0.0
        %3036 = vmatmul.mubr.f32.gmra.mrb[0].mxu0 %v1439
        %v3037 = vpop.f32.mrb[0].mxu0
        %v3038 = vadd.f32 %v2820, %v3037
        %v3039 = vpop.f32.mrb[0].mxu0
        %3040 = vmatprep.mubr.f32.mxu0 0.0
        %3041 = vmatmul.mubr.f32.gmra.mrb[0].mxu0 %v1442
        %v3042 = vpop.f32.mrb[0].mxu0
        %v3043 = vadd.f32 %v2825, %v3042
        %v3044 = vpop.f32.mrb[0].mxu0
        %3045 = vmatprep.mubr.f32.mxu0 0.0
        %3046 = vmatmul.mubr.f32.gmra.mrb[0].mxu0 %v1445
        %v3047 = vpop.f32.mrb[0].mxu0
        %v3048 = vadd.f32 %v2830, %v3047
        %v3049 = vpop.f32.mrb[0].mxu0
        %3050 = vmatprep.mubr.f32.mxu0 0.0
        %3051 = vmatmul.mubr.f32.gmra.mrb[0].mxu0 %v1448
        %v3052 = vpop.f32.mrb[0].mxu0
        %v3053 = vadd.f32 %v2835, %v3052
        %v3054 = vpop.f32.mrb[0].mxu0
        %3055 = vmatprep.mubr.f32.mxu0 0.0
        %3056 = vmatmul.mubr.f32.gmra.mrb[0].mxu0 %v1451
        %v3057 = vpop.f32.mrb[0].mxu0
        %v3058 = vadd.f32 %v2840, %v3057
        %v3059 = vpop.f32.mrb[0].mxu0
        %3060 = vmatprep.mubr.f32.mxu0 0.0
        %3061 = vmatmul.mubr.f32.gmra.mrb[0].mxu0 %v1454
        %v3062 = vpop.f32.mrb[0].mxu0
        %v3063 = vadd.f32 %v2845, %v3062
        %v3064 = vpop.f32.mrb[0].mxu0
        %3065 = vdwg.mxu0
        %3066 = vmatprep.subr.mxu0 %v2034
        %3067 = vmatpush1.msra.mxu0 %v2033
        %3068 = vmatprep.subr.mxu0 %v2036
        %3069 = vmatpush1.msra.mxu0 %v2035
        %3070 = vmatprep.subr.mxu0 %v2038
        %3071 = vmatpush1.msra.mxu0 %v2037
        %3072 = vmatprep.subr.mxu0 %v2040
        %3073 = vmatpush1.msra.mxu0 %v2039
        %3074 = vmatprep.subr.mxu0 0.0
        %3075 = vmatpush1.msra.mxu0 0.0
        %3076 = vmatprep.subr.mxu0 0.0
        %3077 = vmatpush1.msra.mxu0 0.0
        %3078 = vmatprep.subr.mxu0 0.0
        %3079 = vmatpush1.msra.mxu0 0.0
        %3080 = vmatprep.subr.mxu0 0.0
        %3081 = vmatpush1.msra.mxu0 0.0
        %3082 = vmatprep.subr.mxu0 0.0
        %3083 = vmatpush1.msra.mxu0 0.0
        %3084 = vmatprep.subr.mxu0 0.0
        %3085 = vmatpush1.msra.mxu0 0.0
        %3086 = vmatprep.subr.mxu0 0.0
        %3087 = vmatpush1.msra.mxu0 0.0
        %3088 = vmatprep.subr.mxu0 0.0
        %3089 = vmatpush1.msra.mxu0 0.0
        %3090 = vmatprep.subr.mxu0 0.0
        %3091 = vmatpush1.msra.mxu0 0.0
        %3092 = vmatprep.subr.mxu0 0.0
        %3093 = vmatpush1.msra.mxu0 0.0
        %3094 = vmatprep.subr.mxu0 0.0
        %3095 = vmatpush1.msra.mxu0 0.0
        %3096 = vmatprep.subr.mxu0 0.0
        %3097 = vmatpush1.msra.mxu0 0.0
        %3098 = vmatprep.subr.mxu0 0.0
        %3099 = vmatpush1.msra.mxu0 0.0
        %3100 = vmatprep.subr.mxu0 0.0
        %3101 = vmatpush1.msra.mxu0 0.0
        %3102 = vmatprep.subr.mxu0 0.0
        %3103 = vmatpush1.msra.mxu0 0.0
        %3104 = vmatprep.subr.mxu0 0.0
        %3105 = vmatpush1.msra.mxu0 0.0
        %3106 = vmatprep.subr.mxu0 0.0
        %3107 = vmatpush1.msra.mxu0 0.0
        %3108 = vmatprep.subr.mxu0 0.0
        %3109 = vmatpush1.msra.mxu0 0.0
        %3110 = vmatprep.subr.mxu0 0.0
        %3111 = vmatpush1.msra.mxu0 0.0
        %3112 = vmatprep.subr.mxu0 0.0
        %3113 = vmatpush1.msra.mxu0 0.0
        %3114 = vmatprep.subr.mxu0 0.0
        %3115 = vmatpush1.msra.mxu0 0.0
        %3116 = vmatprep.subr.mxu0 0.0
        %3117 = vmatpush1.msra.mxu0 0.0
        %3118 = vmatprep.subr.mxu0 0.0
        %3119 = vmatpush1.msra.mxu0 0.0
        %3120 = vmatprep.subr.mxu0 0.0
        %3121 = vmatpush1.msra.mxu0 0.0
        %3122 = vmatprep.subr.mxu0 0.0
        %3123 = vmatpush1.msra.mxu0 0.0
        %3124 = vmatprep.subr.mxu0 0.0
        %3125 = vmatpush1.msra.mxu0 0.0
        %3126 = vmatprep.subr.mxu0 0.0
        %3127 = vmatpush1.msra.mxu0 0.0
        %3128 = vmatprep.subr.mxu0 0.0
        %3129 = vmatpush1.msra.mxu0 0.0
        %3130 = vmatprep.mubr.f32.mxu0 0.0
        %3131 = vmatmul.mubr.f32.gmra.mrb[0].mxu0 %v1732
        %v3132 = vpop.f32.mrb[0].mxu0
        %v3133 = vadd.f32 0.0, %v3132
        %v3134 = vpop.f32.mrb[0].mxu0
        %v3135 = vadd.f32 0.0, %v3134
        %3136 = vmatprep.mubr.f32.mxu0 0.0
        %3137 = vmatmul.mubr.f32.gmra.mrb[0].mxu0 %v1735
        %v3138 = vpop.f32.mrb[0].mxu0
        %v3139 = vadd.f32 0.0, %v3138
        %v3140 = vpop.f32.mrb[0].mxu0
        %v3141 = vadd.f32 0.0, %v3140
        %3142 = vmatprep.mubr.f32.mxu0 0.0
        %3143 = vmatmul.mubr.f32.gmra.mrb[0].mxu0 %v1738
        %v3144 = vpop.f32.mrb[0].mxu0
        %v3145 = vadd.f32 0.0, %v3144
        %v3146 = vpop.f32.mrb[0].mxu0
        %v3147 = vadd.f32 0.0, %v3146
        %3148 = vmatprep.mubr.f32.mxu0 0.0
        %3149 = vmatmul.mubr.f32.gmra.mrb[0].mxu0 %v1741
        %v3150 = vpop.f32.mrb[0].mxu0
        %v3151 = vadd.f32 0.0, %v3150
        %v3152 = vpop.f32.mrb[0].mxu0
        %v3153 = vadd.f32 0.0, %v3152
        %3154 = vmatprep.mubr.f32.mxu0 0.0
        %3155 = vmatmul.mubr.f32.gmra.mrb[0].mxu0 %v1744
        %v3156 = vpop.f32.mrb[0].mxu0
        %v3157 = vadd.f32 0.0, %v3156
        %v3158 = vpop.f32.mrb[0].mxu0
        %v3159 = vadd.f32 0.0, %v3158
        %3160 = vmatprep.mubr.f32.mxu0 0.0
        %3161 = vmatmul.mubr.f32.gmra.mrb[0].mxu0 %v1747
        %v3162 = vpop.f32.mrb[0].mxu0
        %v3163 = vadd.f32 0.0, %v3162
        %v3164 = vpop.f32.mrb[0].mxu0
        %v3165 = vadd.f32 0.0, %v3164
        %3166 = vmatprep.mubr.f32.mxu0 0.0
        %3167 = vmatmul.mubr.f32.gmra.mrb[0].mxu0 %v1750
        %v3168 = vpop.f32.mrb[0].mxu0
        %v3169 = vadd.f32 0.0, %v3168
        %v3170 = vpop.f32.mrb[0].mxu0
        %v3171 = vadd.f32 0.0, %v3170
        %3172 = vmatprep.mubr.f32.mxu0 0.0
        %3173 = vmatmul.mubr.f32.gmra.mrb[0].mxu0 %v1753
        %v3174 = vpop.f32.mrb[0].mxu0
        %v3175 = vadd.f32 0.0, %v3174
        %v3176 = vpop.f32.mrb[0].mxu0
        %v3177 = vadd.f32 0.0, %v3176
        %3178 = vdwg.mxu0
        %3179 = vmatprep.subr.mxu0 0.0
        %3180 = vmatpush1.msra.mxu0 %v2014
        %3181 = vmatprep.subr.mxu0 0.0
        %3182 = vmatpush1.msra.mxu0 %v2020
        %3183 = vmatprep.subr.mxu0 0.0
        %3184 = vmatpush1.msra.mxu0 %v2026
        %3185 = vmatprep.subr.mxu0 0.0
        %3186 = vmatpush1.msra.mxu0 %v2032
        %3187 = vmatprep.subr.mxu0 0.0
        %3188 = vmatpush1.msra.mxu0 0.0
        %3189 = vmatprep.subr.mxu0 0.0
        %3190 = vmatpush1.msra.mxu0 0.0
        %3191 = vmatprep.subr.mxu0 0.0
        %3192 = vmatpush1.msra.mxu0 0.0
        %3193 = vmatprep.subr.mxu0 0.0
        %3194 = vmatpush1.msra.mxu0 0.0
        %3195 = vmatprep.subr.mxu0 0.0
        %3196 = vmatpush1.msra.mxu0 0.0
        %3197 = vmatprep.subr.mxu0 0.0
        %3198 = vmatpush1.msra.mxu0 0.0
        %3199 = vmatprep.subr.mxu0 0.0
        %3200 = vmatpush1.msra.mxu0 0.0
        %3201 = vmatprep.subr.mxu0 0.0
        %3202 = vmatpush1.msra.mxu0 0.0
        %3203 = vmatprep.subr.mxu0 0.0
        %3204 = vmatpush1.msra.mxu0 0.0
        %3205 = vmatprep.subr.mxu0 0.0
        %3206 = vmatpush1.msra.mxu0 0.0
        %3207 = vmatprep.subr.mxu0 0.0
        %3208 = vmatpush1.msra.mxu0 0.0
        %3209 = vmatprep.subr.mxu0 0.0
        %3210 = vmatpush1.msra.mxu0 0.0
        %3211 = vmatprep.subr.mxu0 0.0
        %3212 = vmatpush1.msra.mxu0 0.0
        %3213 = vmatprep.subr.mxu0 0.0
        %3214 = vmatpush1.msra.mxu0 0.0
        %3215 = vmatprep.subr.mxu0 0.0
        %3216 = vmatpush1.msra.mxu0 0.0
        %3217 = vmatprep.subr.mxu0 0.0
        %3218 = vmatpush1.msra.mxu0 0.0
        %3219 = vmatprep.subr.mxu0 0.0
        %3220 = vmatpush1.msra.mxu0 0.0
        %3221 = vmatprep.subr.mxu0 0.0
        %3222 = vmatpush1.msra.mxu0 0.0
        %3223 = vmatprep.subr.mxu0 0.0
        %3224 = vmatpush1.msra.mxu0 0.0
        %3225 = vmatprep.subr.mxu0 0.0
        %3226 = vmatpush1.msra.mxu0 0.0
        %3227 = vmatprep.subr.mxu0 0.0
        %3228 = vmatpush1.msra.mxu0 0.0
        %3229 = vmatprep.subr.mxu0 0.0
        %3230 = vmatpush1.msra.mxu0 0.0
        %3231 = vmatprep.subr.mxu0 0.0
        %3232 = vmatpush1.msra.mxu0 0.0
        %3233 = vmatprep.subr.mxu0 0.0
        %3234 = vmatpush1.msra.mxu0 0.0
        %3235 = vmatprep.subr.mxu0 0.0
        %3236 = vmatpush1.msra.mxu0 0.0
        %3237 = vmatprep.subr.mxu0 0.0
        %3238 = vmatpush1.msra.mxu0 0.0
        %3239 = vmatprep.subr.mxu0 0.0
        %3240 = vmatpush1.msra.mxu0 0.0
        %3241 = vmatprep.subr.mxu0 0.0
        %3242 = vmatpush1.msra.mxu0 0.0
        %3243 = vmatprep.mubr.f32.mxu0 0.0
        %3244 = vmatmul.mubr.f32.gmra.mrb[0].mxu0 %v1732
        %v3245 = vpop.f32.mrb[0].mxu0
        %v3246 = vadd.f32 0.0, %v3245
        %v3247 = vpop.f32.mrb[0].mxu0
        %3248 = vmatprep.mubr.f32.mxu0 0.0
        %3249 = vmatmul.mubr.f32.gmra.mrb[0].mxu0 %v1735
        %v3250 = vpop.f32.mrb[0].mxu0
        %v3251 = vadd.f32 0.0, %v3250
        %v3252 = vpop.f32.mrb[0].mxu0
        %3253 = vmatprep.mubr.f32.mxu0 0.0
        %3254 = vmatmul.mubr.f32.gmra.mrb[0].mxu0 %v1738
        %v3255 = vpop.f32.mrb[0].mxu0
        %v3256 = vadd.f32 0.0, %v3255
        %v3257 = vpop.f32.mrb[0].mxu0
        %3258 = vmatprep.mubr.f32.mxu0 0.0
        %3259 = vmatmul.mubr.f32.gmra.mrb[0].mxu0 %v1741
        %v3260 = vpop.f32.mrb[0].mxu0
        %v3261 = vadd.f32 0.0, %v3260
        %v3262 = vpop.f32.mrb[0].mxu0
        %3263 = vmatprep.mubr.f32.mxu0 0.0
        %3264 = vmatmul.mubr.f32.gmra.mrb[0].mxu0 %v1744
        %v3265 = vpop.f32.mrb[0].mxu0
        %v3266 = vadd.f32 0.0, %v3265
        %v3267 = vpop.f32.mrb[0].mxu0
        %3268 = vmatprep.mubr.f32.mxu0 0.0
        %3269 = vmatmul.mubr.f32.gmra.mrb[0].mxu0 %v1747
        %v3270 = vpop.f32.mrb[0].mxu0
        %v3271 = vadd.f32 0.0, %v3270
        %v3272 = vpop.f32.mrb[0].mxu0
        %3273 = vmatprep.mubr.f32.mxu0 0.0
        %3274 = vmatmul.mubr.f32.gmra.mrb[0].mxu0 %v1750
        %v3275 = vpop.f32.mrb[0].mxu0
        %v3276 = vadd.f32 0.0, %v3275
        %v3277 = vpop.f32.mrb[0].mxu0
        %3278 = vmatprep.mubr.f32.mxu0 0.0
        %3279 = vmatmul.mubr.f32.gmra.mrb[0].mxu0 %v1753
        %v3280 = vpop.f32.mrb[0].mxu0
        %v3281 = vadd.f32 0.0, %v3280
        %v3282 = vpop.f32.mrb[0].mxu0
        %3283 = vdwg.mxu0
        %v3284 = vadd.f32 %v2915, %v3133
        %v3285 = vadd.f32 %v2917, %v3135
        %v3286 = vadd.f32 %v3028, %v3246
        %v3287 = vadd.f32 %v2921, %v3139
        %v3288 = vadd.f32 %v2923, %v3141
        %v3289 = vadd.f32 %v3033, %v3251
        %v3290 = vadd.f32 %v2927, %v3145
        %v3291 = vadd.f32 %v2929, %v3147
        %v3292 = vadd.f32 %v3038, %v3256
        %v3293 = vadd.f32 %v2933, %v3151
        %v3294 = vadd.f32 %v2935, %v3153
        %v3295 = vadd.f32 %v3043, %v3261
        %v3296 = vadd.f32 %v2939, %v3157
        %v3297 = vadd.f32 %v2941, %v3159
        %v3298 = vadd.f32 %v3048, %v3266
        %v3299 = vadd.f32 %v2945, %v3163
        %v3300 = vadd.f32 %v2947, %v3165
        %v3301 = vadd.f32 %v3053, %v3271
        %v3302 = vadd.f32 %v2951, %v3169
        %v3303 = vadd.f32 %v2953, %v3171
        %v3304 = vadd.f32 %v3058, %v3276
        %v3305 = vadd.f32 %v2957, %v3175
        %v3306 = vadd.f32 %v2959, %v3177
        %v3307 = vadd.f32 %v3063, %v3281
        %3308 = vmatprep.subr.mxu0 %v2345
        %3309 = vmatpush1.msra.mxu0 %v2344
        %3310 = vmatprep.subr.mxu0 %v2347
        %3311 = vmatpush1.msra.mxu0 %v2346
        %3312 = vmatprep.subr.mxu0 %v2349
        %3313 = vmatpush1.msra.mxu0 %v2348
        %3314 = vmatprep.subr.mxu0 %v2351
        %3315 = vmatpush1.msra.mxu0 %v2350
        %3316 = vmatprep.subr.mxu0 0.0
        %3317 = vmatpush1.msra.mxu0 0.0
        %3318 = vmatprep.subr.mxu0 0.0
        %3319 = vmatpush1.msra.mxu0 0.0
        %3320 = vmatprep.subr.mxu0 0.0
        %3321 = vmatpush1.msra.mxu0 0.0
        %3322 = vmatprep.subr.mxu0 0.0
        %3323 = vmatpush1.msra.mxu0 0.0
        %3324 = vmatprep.subr.mxu0 0.0
        %3325 = vmatpush1.msra.mxu0 0.0
        %3326 = vmatprep.subr.mxu0 0.0
        %3327 = vmatpush1.msra.mxu0 0.0
        %3328 = vmatprep.subr.mxu0 0.0
        %3329 = vmatpush1.msra.mxu0 0.0
        %3330 = vmatprep.subr.mxu0 0.0
        %3331 = vmatpush1.msra.mxu0 0.0
        %3332 = vmatprep.subr.mxu0 0.0
        %3333 = vmatpush1.msra.mxu0 0.0
        %3334 = vmatprep.subr.mxu0 0.0
        %3335 = vmatpush1.msra.mxu0 0.0
        %3336 = vmatprep.subr.mxu0 0.0
        %3337 = vmatpush1.msra.mxu0 0.0
        %3338 = vmatprep.subr.mxu0 0.0
        %3339 = vmatpush1.msra.mxu0 0.0
        %3340 = vmatprep.subr.mxu0 0.0
        %3341 = vmatpush1.msra.mxu0 0.0
        %3342 = vmatprep.subr.mxu0 0.0
        %3343 = vmatpush1.msra.mxu0 0.0
        %3344 = vmatprep.subr.mxu0 0.0
        %3345 = vmatpush1.msra.mxu0 0.0
        %3346 = vmatprep.subr.mxu0 0.0
        %3347 = vmatpush1.msra.mxu0 0.0
        %3348 = vmatprep.subr.mxu0 0.0
        %3349 = vmatpush1.msra.mxu0 0.0
        %3350 = vmatprep.subr.mxu0 0.0
        %3351 = vmatpush1.msra.mxu0 0.0
        %3352 = vmatprep.subr.mxu0 0.0
        %3353 = vmatpush1.msra.mxu0 0.0
        %3354 = vmatprep.subr.mxu0 0.0
        %3355 = vmatpush1.msra.mxu0 0.0
        %3356 = vmatprep.subr.mxu0 0.0
        %3357 = vmatpush1.msra.mxu0 0.0
        %3358 = vmatprep.subr.mxu0 0.0
        %3359 = vmatpush1.msra.mxu0 0.0
        %3360 = vmatprep.subr.mxu0 0.0
        %3361 = vmatpush1.msra.mxu0 0.0
        %3362 = vmatprep.subr.mxu0 0.0
        %3363 = vmatpush1.msra.mxu0 0.0
        %3364 = vmatprep.subr.mxu0 0.0
        %3365 = vmatpush1.msra.mxu0 0.0
        %3366 = vmatprep.subr.mxu0 0.0
        %3367 = vmatpush1.msra.mxu0 0.0
        %3368 = vmatprep.subr.mxu0 0.0
        %3369 = vmatpush1.msra.mxu0 0.0
        %3370 = vmatprep.subr.mxu0 0.0
        %3371 = vmatpush1.msra.mxu0 0.0
        %3372 = vmatprep.mubr.f32.mxu0 0.0
        %3373 = vmatmul.mubr.f32.gmra.mrb[0].mxu0 %v2054
        %v3374 = vpop.f32.mrb[0].mxu0
        %v3375 = vadd.f32 0.0, %v3374
        %v3376 = vpop.f32.mrb[0].mxu0
        %v3377 = vadd.f32 0.0, %v3376
        %3378 = vmatprep.mubr.f32.mxu0 0.0
        %3379 = vmatmul.mubr.f32.gmra.mrb[0].mxu0 %v2057
        %v3380 = vpop.f32.mrb[0].mxu0
        %v3381 = vadd.f32 0.0, %v3380
        %v3382 = vpop.f32.mrb[0].mxu0
        %v3383 = vadd.f32 0.0, %v3382
        %3384 = vmatprep.mubr.f32.mxu0 0.0
        %3385 = vmatmul.mubr.f32.gmra.mrb[0].mxu0 %v2060
        %v3386 = vpop.f32.mrb[0].mxu0
        %v3387 = vadd.f32 0.0, %v3386
        %v3388 = vpop.f32.mrb[0].mxu0
        %v3389 = vadd.f32 0.0, %v3388
        %3390 = vmatprep.mubr.f32.mxu0 0.0
        %3391 = vmatmul.mubr.f32.gmra.mrb[0].mxu0 %v2063
        %v3392 = vpop.f32.mrb[0].mxu0
        %v3393 = vadd.f32 0.0, %v3392
        %v3394 = vpop.f32.mrb[0].mxu0
        %v3395 = vadd.f32 0.0, %v3394
        %3396 = vmatprep.mubr.f32.mxu0 0.0
        %3397 = vmatmul.mubr.f32.gmra.mrb[0].mxu0 %v2066
        %v3398 = vpop.f32.mrb[0].mxu0
        %v3399 = vadd.f32 0.0, %v3398
        %v3400 = vpop.f32.mrb[0].mxu0
        %v3401 = vadd.f32 0.0, %v3400
        %3402 = vmatprep.mubr.f32.mxu0 0.0
        %3403 = vmatmul.mubr.f32.gmra.mrb[0].mxu0 %v2069
        %v3404 = vpop.f32.mrb[0].mxu0
        %v3405 = vadd.f32 0.0, %v3404
        %v3406 = vpop.f32.mrb[0].mxu0
        %v3407 = vadd.f32 0.0, %v3406
        %3408 = vmatprep.mubr.f32.mxu0 0.0
        %3409 = vmatmul.mubr.f32.gmra.mrb[0].mxu0 %v2072
        %v3410 = vpop.f32.mrb[0].mxu0
        %v3411 = vadd.f32 0.0, %v3410
        %v3412 = vpop.f32.mrb[0].mxu0
        %v3413 = vadd.f32 0.0, %v3412
        %3414 = vmatprep.mubr.f32.mxu0 0.0
        %3415 = vmatmul.mubr.f32.gmra.mrb[0].mxu0 %v2075
        %v3416 = vpop.f32.mrb[0].mxu0
        %v3417 = vadd.f32 0.0, %v3416
        %v3418 = vpop.f32.mrb[0].mxu0
        %v3419 = vadd.f32 0.0, %v3418
        %3420 = vdwg.mxu0
        %3421 = vmatprep.subr.mxu0 0.0
        %3422 = vmatpush1.msra.mxu0 %v2324
        %3423 = vmatprep.subr.mxu0 0.0
        %3424 = vmatpush1.msra.mxu0 %v2330
        %3425 = vmatprep.subr.mxu0 0.0
        %3426 = vmatpush1.msra.mxu0 %v2336
        %3427 = vmatprep.subr.mxu0 0.0
        %3428 = vmatpush1.msra.mxu0 %v2342
        %3429 = vmatprep.subr.mxu0 0.0
        %3430 = vmatpush1.msra.mxu0 0.0
        %3431 = vmatprep.subr.mxu0 0.0
        %3432 = vmatpush1.msra.mxu0 0.0
        %3433 = vmatprep.subr.mxu0 0.0
        %3434 = vmatpush1.msra.mxu0 0.0
        %3435 = vmatprep.subr.mxu0 0.0
        %3436 = vmatpush1.msra.mxu0 0.0
        %3437 = vmatprep.subr.mxu0 0.0
        %3438 = vmatpush1.msra.mxu0 0.0
        %3439 = vmatprep.subr.mxu0 0.0
        %3440 = vmatpush1.msra.mxu0 0.0
        %3441 = vmatprep.subr.mxu0 0.0
        %3442 = vmatpush1.msra.mxu0 0.0
        %3443 = vmatprep.subr.mxu0 0.0
        %3444 = vmatpush1.msra.mxu0 0.0
        %3445 = vmatprep.subr.mxu0 0.0
        %3446 = vmatpush1.msra.mxu0 0.0
        %3447 = vmatprep.subr.mxu0 0.0
        %3448 = vmatpush1.msra.mxu0 0.0
        %3449 = vmatprep.subr.mxu0 0.0
        %3450 = vmatpush1.msra.mxu0 0.0
        %3451 = vmatprep.subr.mxu0 0.0
        %3452 = vmatpush1.msra.mxu0 0.0
        %3453 = vmatprep.subr.mxu0 0.0
        %3454 = vmatpush1.msra.mxu0 0.0
        %3455 = vmatprep.subr.mxu0 0.0
        %3456 = vmatpush1.msra.mxu0 0.0
        %3457 = vmatprep.subr.mxu0 0.0
        %3458 = vmatpush1.msra.mxu0 0.0
        %3459 = vmatprep.subr.mxu0 0.0
        %3460 = vmatpush1.msra.mxu0 0.0
        %3461 = vmatprep.subr.mxu0 0.0
        %3462 = vmatpush1.msra.mxu0 0.0
        %3463 = vmatprep.subr.mxu0 0.0
        %3464 = vmatpush1.msra.mxu0 0.0
        %3465 = vmatprep.subr.mxu0 0.0
        %3466 = vmatpush1.msra.mxu0 0.0
        %3467 = vmatprep.subr.mxu0 0.0
        %3468 = vmatpush1.msra.mxu0 0.0
        %3469 = vmatprep.subr.mxu0 0.0
        %3470 = vmatpush1.msra.mxu0 0.0
        %3471 = vmatprep.subr.mxu0 0.0
        %3472 = vmatpush1.msra.mxu0 0.0
        %3473 = vmatprep.subr.mxu0 0.0
        %3474 = vmatpush1.msra.mxu0 0.0
        %3475 = vmatprep.subr.mxu0 0.0
        %3476 = vmatpush1.msra.mxu0 0.0
        %3477 = vmatprep.subr.mxu0 0.0
        %3478 = vmatpush1.msra.mxu0 0.0
        %3479 = vmatprep.subr.mxu0 0.0
        %3480 = vmatpush1.msra.mxu0 0.0
        %3481 = vmatprep.subr.mxu0 0.0
        %3482 = vmatpush1.msra.mxu0 0.0
        %3483 = vmatprep.subr.mxu0 0.0
        %3484 = vmatpush1.msra.mxu0 0.0
        %3485 = vmatprep.mubr.f32.mxu0 0.0
        %3486 = vmatmul.mubr.f32.gmra.mrb[0].mxu0 %v2054
        %v3487 = vpop.f32.mrb[0].mxu0
        %v3488 = vadd.f32 0.0, %v3487
        %v3489 = vpop.f32.mrb[0].mxu0
        %3490 = vmatprep.mubr.f32.mxu0 0.0
        %3491 = vmatmul.mubr.f32.gmra.mrb[0].mxu0 %v2057
        %v3492 = vpop.f32.mrb[0].mxu0
        %v3493 = vadd.f32 0.0, %v3492
        %v3494 = vpop.f32.mrb[0].mxu0
        %3495 = vmatprep.mubr.f32.mxu0 0.0
        %3496 = vmatmul.mubr.f32.gmra.mrb[0].mxu0 %v2060
        %v3497 = vpop.f32.mrb[0].mxu0
        %v3498 = vadd.f32 0.0, %v3497
        %v3499 = vpop.f32.mrb[0].mxu0
        %3500 = vmatprep.mubr.f32.mxu0 0.0
        %3501 = vmatmul.mubr.f32.gmra.mrb[0].mxu0 %v2063
        %v3502 = vpop.f32.mrb[0].mxu0
        %v3503 = vadd.f32 0.0, %v3502
        %v3504 = vpop.f32.mrb[0].mxu0
        %3505 = vmatprep.mubr.f32.mxu0 0.0
        %3506 = vmatmul.mubr.f32.gmra.mrb[0].mxu0 %v2066
        %v3507 = vpop.f32.mrb[0].mxu0
        %v3508 = vadd.f32 0.0, %v3507
        %v3509 = vpop.f32.mrb[0].mxu0
        %3510 = vmatprep.mubr.f32.mxu0 0.0
        %3511 = vmatmul.mubr.f32.gmra.mrb[0].mxu0 %v2069
        %v3512 = vpop.f32.mrb[0].mxu0
        %v3513 = vadd.f32 0.0, %v3512
        %v3514 = vpop.f32.mrb[0].mxu0
        %3515 = vmatprep.mubr.f32.mxu0 0.0
        %3516 = vmatmul.mubr.f32.gmra.mrb[0].mxu0 %v2072
        %v3517 = vpop.f32.mrb[0].mxu0
        %v3518 = vadd.f32 0.0, %v3517
        %v3519 = vpop.f32.mrb[0].mxu0
        %3520 = vmatprep.mubr.f32.mxu0 0.0
        %3521 = vmatmul.mubr.f32.gmra.mrb[0].mxu0 %v2075
        %v3522 = vpop.f32.mrb[0].mxu0
        %v3523 = vadd.f32 0.0, %v3522
        %v3524 = vpop.f32.mrb[0].mxu0
        %3525 = vdwg.mxu0
        %v3526 = vadd.f32 %v3284, %v3375
        %v3527 = vadd.f32 %v3285, %v3377
        %v3528 = vadd.f32 %v3286, %v3488
        %v3529 = vadd.f32 %v3287, %v3381
        %v3530 = vadd.f32 %v3288, %v3383
        %v3531 = vadd.f32 %v3289, %v3493
        %v3532 = vadd.f32 %v3290, %v3387
        %v3533 = vadd.f32 %v3291, %v3389
        %v3534 = vadd.f32 %v3292, %v3498
        %v3535 = vadd.f32 %v3293, %v3393
        %v3536 = vadd.f32 %v3294, %v3395
        %v3537 = vadd.f32 %v3295, %v3503
        %v3538 = vadd.f32 %v3296, %v3399
        %v3539 = vadd.f32 %v3297, %v3401
        %v3540 = vadd.f32 %v3298, %v3508
        %v3541 = vadd.f32 %v3299, %v3405
        %v3542 = vadd.f32 %v3300, %v3407
        %v3543 = vadd.f32 %v3301, %v3513
        %v3544 = vadd.f32 %v3302, %v3411
        %v3545 = vadd.f32 %v3303, %v3413
        %v3546 = vadd.f32 %v3304, %v3518
        %v3547 = vadd.f32 %v3305, %v3417
        %v3548 = vadd.f32 %v3306, %v3419
        %v3549 = vadd.f32 %v3307, %v3523
        %3550 = vrot.lane.b32.xlu0 %v1125, 126
        %v3551 = vpop.permute.xlu0 %3550
        %3552 = vrot.lane.b32.xlu0 %v1126, 126
        %v3553 = vpop.permute.xlu0 %3552
        %3554 = vrot.lane.b32.xlu0 %v1127, 126
        %v3555 = vpop.permute.xlu0 %3554
        %3556 = vrot.lane.b32.xlu0 %v1128, 126
        %v3557 = vpop.permute.xlu0 %3556
        %3558 = vrot.lane.b32.xlu0 %v1129, 126
        %v3559 = vpop.permute.xlu0 %3558
        %3560 = vrot.lane.b32.xlu0 %v1130, 126
        %v3561 = vpop.permute.xlu0 %3560
        %3562 = vrot.lane.b32.xlu0 %v1131, 126
        %v3563 = vpop.permute.xlu0 %3562
        %3564 = vrot.lane.b32.xlu0 %v1132, 126
        %v3565 = vpop.permute.xlu0 %3564
        %3566 = vrot.lane.b32.xlu0 %v1133, 126
        %v3567 = vpop.permute.xlu0 %3566
        %3568 = vrot.lane.b32.xlu0 %v1134, 126
        %v3569 = vpop.permute.xlu0 %3568
        %3570 = vrot.lane.b32.xlu0 %v1135, 126
        %v3571 = vpop.permute.xlu0 %3570
        %3572 = vrot.lane.b32.xlu0 %v1136, 126
        %v3573 = vpop.permute.xlu0 %3572
        %v3574 = vsel %vm2343, %v3551, %v3553
        %v3575 = vsel %vm2343, %v3553, %v3555
        %v3576 = vsel %vm2343, %v3557, %v3559
        %v3577 = vsel %vm2343, %v3559, %v3561
        %v3578 = vsel %vm2343, %v3563, %v3565
        %v3579 = vsel %vm2343, %v3565, %v3567
        %v3580 = vsel %vm2343, %v3569, %v3571
        %v3581 = vsel %vm2343, %v3571, %v3573
        %3594 = vmatprep.subr.mxu0 %v3575
        %3595 = vmatpush1.msra.mxu0 %v3574
        %3596 = vmatprep.subr.mxu0 %v3577
        %3597 = vmatpush1.msra.mxu0 %v3576
        %3598 = vmatprep.subr.mxu0 %v3579
        %3599 = vmatpush1.msra.mxu0 %v3578
        %3600 = vmatprep.subr.mxu0 %v3581
        %3601 = vmatpush1.msra.mxu0 %v3580
        %3602 = vmatprep.subr.mxu0 0.0
        %3603 = vmatpush1.msra.mxu0 0.0
        %3604 = vmatprep.subr.mxu0 0.0
        %3605 = vmatpush1.msra.mxu0 0.0
        %3606 = vmatprep.subr.mxu0 0.0
        %3607 = vmatpush1.msra.mxu0 0.0
        %3608 = vmatprep.subr.mxu0 0.0
        %3609 = vmatpush1.msra.mxu0 0.0
        %3610 = vmatprep.subr.mxu0 0.0
        %3611 = vmatpush1.msra.mxu0 0.0
        %3612 = vmatprep.subr.mxu0 0.0
        %3613 = vmatpush1.msra.mxu0 0.0
        %3614 = vmatprep.subr.mxu0 0.0
        %3615 = vmatpush1.msra.mxu0 0.0
        %3616 = vmatprep.subr.mxu0 0.0
        %3617 = vmatpush1.msra.mxu0 0.0
        %3618 = vmatprep.subr.mxu0 0.0
        %3619 = vmatpush1.msra.mxu0 0.0
        %3620 = vmatprep.subr.mxu0 0.0
        %3621 = vmatpush1.msra.mxu0 0.0
        %3622 = vmatprep.subr.mxu0 0.0
        %3623 = vmatpush1.msra.mxu0 0.0
        %3624 = vmatprep.subr.mxu0 0.0
        %3625 = vmatpush1.msra.mxu0 0.0
        %3626 = vmatprep.subr.mxu0 0.0
        %3627 = vmatpush1.msra.mxu0 0.0
        %3628 = vmatprep.subr.mxu0 0.0
        %3629 = vmatpush1.msra.mxu0 0.0
        %3630 = vmatprep.subr.mxu0 0.0
        %3631 = vmatpush1.msra.mxu0 0.0
        %3632 = vmatprep.subr.mxu0 0.0
        %3633 = vmatpush1.msra.mxu0 0.0
        %3634 = vmatprep.subr.mxu0 0.0
        %3635 = vmatpush1.msra.mxu0 0.0
        %3636 = vmatprep.subr.mxu0 0.0
        %3637 = vmatpush1.msra.mxu0 0.0
        %3638 = vmatprep.subr.mxu0 0.0
        %3639 = vmatpush1.msra.mxu0 0.0
        %3640 = vmatprep.subr.mxu0 0.0
        %3641 = vmatpush1.msra.mxu0 0.0
        %3642 = vmatprep.subr.mxu0 0.0
        %3643 = vmatpush1.msra.mxu0 0.0
        %3644 = vmatprep.subr.mxu0 0.0
        %3645 = vmatpush1.msra.mxu0 0.0
        %3646 = vmatprep.subr.mxu0 0.0
        %3647 = vmatpush1.msra.mxu0 0.0
        %3648 = vmatprep.subr.mxu0 0.0
        %3649 = vmatpush1.msra.mxu0 0.0
        %3650 = vmatprep.subr.mxu0 0.0
        %3651 = vmatpush1.msra.mxu0 0.0
        %3652 = vmatprep.subr.mxu0 0.0
        %3653 = vmatpush1.msra.mxu0 0.0
        %3654 = vmatprep.subr.mxu0 0.0
        %3655 = vmatpush1.msra.mxu0 0.0
        %3656 = vmatprep.subr.mxu0 0.0
        %3657 = vmatpush1.msra.mxu0 0.0
        %3658 = vmatprep.mubr.f32.mxu0 0.0
        %3659 = vmatmul.mubr.f32.gmra.mrb[0].mxu0 %v2365
        %v3660 = vpop.f32.mrb[0].mxu0
        %v3661 = vadd.f32 0.0, %v3660
        %v3662 = vpop.f32.mrb[0].mxu0
        %v3663 = vadd.f32 0.0, %v3662
        %3664 = vmatprep.mubr.f32.mxu0 0.0
        %3665 = vmatmul.mubr.f32.gmra.mrb[0].mxu0 %v2368
        %v3666 = vpop.f32.mrb[0].mxu0
        %v3667 = vadd.f32 0.0, %v3666
        %v3668 = vpop.f32.mrb[0].mxu0
        %v3669 = vadd.f32 0.0, %v3668
        %3670 = vmatprep.mubr.f32.mxu0 0.0
        %3671 = vmatmul.mubr.f32.gmra.mrb[0].mxu0 %v2371
        %v3672 = vpop.f32.mrb[0].mxu0
        %v3673 = vadd.f32 0.0, %v3672
        %v3674 = vpop.f32.mrb[0].mxu0
        %v3675 = vadd.f32 0.0, %v3674
        %3676 = vmatprep.mubr.f32.mxu0 0.0
        %3677 = vmatmul.mubr.f32.gmra.mrb[0].mxu0 %v2374
        %v3678 = vpop.f32.mrb[0].mxu0
        %v3679 = vadd.f32 0.0, %v3678
        %v3680 = vpop.f32.mrb[0].mxu0
        %v3681 = vadd.f32 0.0, %v3680
        %3682 = vmatprep.mubr.f32.mxu0 0.0
        %3683 = vmatmul.mubr.f32.gmra.mrb[0].mxu0 %v2377
        %v3684 = vpop.f32.mrb[0].mxu0
        %v3685 = vadd.f32 0.0, %v3684
        %v3686 = vpop.f32.mrb[0].mxu0
        %v3687 = vadd.f32 0.0, %v3686
        %3688 = vmatprep.mubr.f32.mxu0 0.0
        %3689 = vmatmul.mubr.f32.gmra.mrb[0].mxu0 %v2380
        %v3690 = vpop.f32.mrb[0].mxu0
        %v3691 = vadd.f32 0.0, %v3690
        %v3692 = vpop.f32.mrb[0].mxu0
        %v3693 = vadd.f32 0.0, %v3692
        %3694 = vmatprep.mubr.f32.mxu0 0.0
        %3695 = vmatmul.mubr.f32.gmra.mrb[0].mxu0 %v2383
        %v3696 = vpop.f32.mrb[0].mxu0
        %v3697 = vadd.f32 0.0, %v3696
        %v3698 = vpop.f32.mrb[0].mxu0
        %v3699 = vadd.f32 0.0, %v3698
        %3700 = vmatprep.mubr.f32.mxu0 0.0
        %3701 = vmatmul.mubr.f32.gmra.mrb[0].mxu0 %v2386
        %v3702 = vpop.f32.mrb[0].mxu0
        %v3703 = vadd.f32 0.0, %v3702
        %v3704 = vpop.f32.mrb[0].mxu0
        %v3705 = vadd.f32 0.0, %v3704
        %3706 = vdwg.mxu0
        %3707 = vmatprep.subr.mxu0 0.0
        %3708 = vmatpush1.msra.mxu0 %v3555
        %3709 = vmatprep.subr.mxu0 0.0
        %3710 = vmatpush1.msra.mxu0 %v3561
        %3711 = vmatprep.subr.mxu0 0.0
        %3712 = vmatpush1.msra.mxu0 %v3567
        %3713 = vmatprep.subr.mxu0 0.0
        %3714 = vmatpush1.msra.mxu0 %v3573
        %3715 = vmatprep.subr.mxu0 0.0
        %3716 = vmatpush1.msra.mxu0 0.0
        %3717 = vmatprep.subr.mxu0 0.0
        %3718 = vmatpush1.msra.mxu0 0.0
        %3719 = vmatprep.subr.mxu0 0.0
        %3720 = vmatpush1.msra.mxu0 0.0
        %3721 = vmatprep.subr.mxu0 0.0
        %3722 = vmatpush1.msra.mxu0 0.0
        %3723 = vmatprep.subr.mxu0 0.0
        %3724 = vmatpush1.msra.mxu0 0.0
        %3725 = vmatprep.subr.mxu0 0.0
        %3726 = vmatpush1.msra.mxu0 0.0
        %3727 = vmatprep.subr.mxu0 0.0
        %3728 = vmatpush1.msra.mxu0 0.0
        %3729 = vmatprep.subr.mxu0 0.0
        %3730 = vmatpush1.msra.mxu0 0.0
        %3731 = vmatprep.subr.mxu0 0.0
        %3732 = vmatpush1.msra.mxu0 0.0
        %3733 = vmatprep.subr.mxu0 0.0
        %3734 = vmatpush1.msra.mxu0 0.0
        %3735 = vmatprep.subr.mxu0 0.0
        %3736 = vmatpush1.msra.mxu0 0.0
        %3737 = vmatprep.subr.mxu0 0.0
        %3738 = vmatpush1.msra.mxu0 0.0
        %3739 = vmatprep.subr.mxu0 0.0
        %3740 = vmatpush1.msra.mxu0 0.0
        %3741 = vmatprep.subr.mxu0 0.0
        %3742 = vmatpush1.msra.mxu0 0.0
        %3743 = vmatprep.subr.mxu0 0.0
        %3744 = vmatpush1.msra.mxu0 0.0
        %3745 = vmatprep.subr.mxu0 0.0
        %3746 = vmatpush1.msra.mxu0 0.0
        %3747 = vmatprep.subr.mxu0 0.0
        %3748 = vmatpush1.msra.mxu0 0.0
        %3749 = vmatprep.subr.mxu0 0.0
        %3750 = vmatpush1.msra.mxu0 0.0
        %3751 = vmatprep.subr.mxu0 0.0
        %3752 = vmatpush1.msra.mxu0 0.0
        %3753 = vmatprep.subr.mxu0 0.0
        %3754 = vmatpush1.msra.mxu0 0.0
        %3755 = vmatprep.subr.mxu0 0.0
        %3756 = vmatpush1.msra.mxu0 0.0
        %3757 = vmatprep.subr.mxu0 0.0
        %3758 = vmatpush1.msra.mxu0 0.0
        %3759 = vmatprep.subr.mxu0 0.0
        %3760 = vmatpush1.msra.mxu0 0.0
        %3761 = vmatprep.subr.mxu0 0.0
        %3762 = vmatpush1.msra.mxu0 0.0
        %3763 = vmatprep.subr.mxu0 0.0
        %3764 = vmatpush1.msra.mxu0 0.0
        %3765 = vmatprep.subr.mxu0 0.0
        %3766 = vmatpush1.msra.mxu0 0.0
        %3767 = vmatprep.subr.mxu0 0.0
        %3768 = vmatpush1.msra.mxu0 0.0
        %3769 = vmatprep.subr.mxu0 0.0
        %3770 = vmatpush1.msra.mxu0 0.0
        %3771 = vmatprep.mubr.f32.mxu0 0.0
        %3772 = vmatmul.mubr.f32.gmra.mrb[0].mxu0 %v2365
        %v3773 = vpop.f32.mrb[0].mxu0
        %v3774 = vadd.f32 0.0, %v3773
        %v3775 = vpop.f32.mrb[0].mxu0
        %3776 = vmatprep.mubr.f32.mxu0 0.0
        %3777 = vmatmul.mubr.f32.gmra.mrb[0].mxu0 %v2368
        %v3778 = vpop.f32.mrb[0].mxu0
        %v3779 = vadd.f32 0.0, %v3778
        %v3780 = vpop.f32.mrb[0].mxu0
        %3781 = vmatprep.mubr.f32.mxu0 0.0
        %3782 = vmatmul.mubr.f32.gmra.mrb[0].mxu0 %v2371
        %v3783 = vpop.f32.mrb[0].mxu0
        %v3784 = vadd.f32 0.0, %v3783
        %v3785 = vpop.f32.mrb[0].mxu0
        %3786 = vmatprep.mubr.f32.mxu0 0.0
        %3787 = vmatmul.mubr.f32.gmra.mrb[0].mxu0 %v2374
        %v3788 = vpop.f32.mrb[0].mxu0
        %v3789 = vadd.f32 0.0, %v3788
        %v3790 = vpop.f32.mrb[0].mxu0
        %3791 = vmatprep.mubr.f32.mxu0 0.0
        %3792 = vmatmul.mubr.f32.gmra.mrb[0].mxu0 %v2377
        %v3793 = vpop.f32.mrb[0].mxu0
        %v3794 = vadd.f32 0.0, %v3793
        %v3795 = vpop.f32.mrb[0].mxu0
        %3796 = vmatprep.mubr.f32.mxu0 0.0
        %3797 = vmatmul.mubr.f32.gmra.mrb[0].mxu0 %v2380
        %v3798 = vpop.f32.mrb[0].mxu0
        %v3799 = vadd.f32 0.0, %v3798
        %v3800 = vpop.f32.mrb[0].mxu0
        %3801 = vmatprep.mubr.f32.mxu0 0.0
        %3802 = vmatmul.mubr.f32.gmra.mrb[0].mxu0 %v2383
        %v3803 = vpop.f32.mrb[0].mxu0
        %v3804 = vadd.f32 0.0, %v3803
        %v3805 = vpop.f32.mrb[0].mxu0
        %3806 = vmatprep.mubr.f32.mxu0 0.0
        %3807 = vmatmul.mubr.f32.gmra.mrb[0].mxu0 %v2386
        %v3808 = vpop.f32.mrb[0].mxu0
        %v3809 = vadd.f32 0.0, %v3808
        %v3810 = vpop.f32.mrb[0].mxu0
        %3811 = vdwg.mxu0
        %v3812 = vadd.f32 %v3526, %v3661
        %v3813 = vadd.f32 %v3527, %v3663
        %v3814 = vadd.f32 %v3528, %v3774
        %v3815 = vadd.f32 %v3529, %v3667
        %v3816 = vadd.f32 %v3530, %v3669
        %v3817 = vadd.f32 %v3531, %v3779
        %v3818 = vadd.f32 %v3532, %v3673
        %v3819 = vadd.f32 %v3533, %v3675
        %v3820 = vadd.f32 %v3534, %v3784
        %v3821 = vadd.f32 %v3535, %v3679
        %v3822 = vadd.f32 %v3536, %v3681
        %v3823 = vadd.f32 %v3537, %v3789
        %v3824 = vadd.f32 %v3538, %v3685
        %v3825 = vadd.f32 %v3539, %v3687
        %v3826 = vadd.f32 %v3540, %v3794
        %v3827 = vadd.f32 %v3541, %v3691
        %v3828 = vadd.f32 %v3542, %v3693
        %v3829 = vadd.f32 %v3543, %v3799
        %v3830 = vadd.f32 %v3544, %v3697
        %v3831 = vadd.f32 %v3545, %v3699
        %v3832 = vadd.f32 %v3546, %v3804
        %v3833 = vadd.f32 %v3547, %v3703
        %v3834 = vadd.f32 %v3548, %v3705
        %v3835 = vadd.f32 %v3549, %v3809
        %3837 = vset.pattern.permute.xlu0 0
        %3838 = vperm.xlu0 %3837, %v1181
        %v3839 = vpop.permute.xlu0 %3838
        %3842 = vset.pattern.permute.xlu0 0
        %3843 = vperm.xlu0 %3842, %v1182
        %v3844 = vpop.permute.xlu0 %3843
        %3847 = vset.pattern.permute.xlu0 0
        %3848 = vperm.xlu0 %3847, %v1183
        %v3849 = vpop.permute.xlu0 %3848
        %3852 = vset.pattern.permute.xlu0 0
        %3853 = vperm.xlu0 %3852, %v1184
        %v3854 = vpop.permute.xlu0 %3853
        %3857 = vset.pattern.permute.xlu0 0
        %3858 = vperm.xlu0 %3857, %v1185
        %v3859 = vpop.permute.xlu0 %3858
        %3862 = vset.pattern.permute.xlu0 0
        %3863 = vperm.xlu0 %3862, %v1186
        %v3864 = vpop.permute.xlu0 %3863
        %3867 = vset.pattern.permute.xlu0 0
        %3868 = vperm.xlu0 %3867, %v1187
        %v3869 = vpop.permute.xlu0 %3868
        %3872 = vset.pattern.permute.xlu0 0
        %3873 = vperm.xlu0 %3872, %v1188
        %v3874 = vpop.permute.xlu0 %3873
        %v3876 = vadd.f32 %v2606, %v3839
        %v3877 = vadd.f32 %v2607, %v3839
        %v3878 = vadd.f32 %v2608, %v3839
        %v3879 = vadd.f32 %v2609, %v3844
        %v3880 = vadd.f32 %v2610, %v3844
        %v3881 = vadd.f32 %v2611, %v3844
        %v3882 = vadd.f32 %v2612, %v3849
        %v3883 = vadd.f32 %v2613, %v3849
        %v3884 = vadd.f32 %v2614, %v3849
        %v3885 = vadd.f32 %v2615, %v3854
        %v3886 = vadd.f32 %v2616, %v3854
        %v3887 = vadd.f32 %v2617, %v3854
        %v3888 = vadd.f32 %v2618, %v3859
        %v3889 = vadd.f32 %v2619, %v3859
        %v3890 = vadd.f32 %v2620, %v3859
        %v3891 = vadd.f32 %v2621, %v3864
        %v3892 = vadd.f32 %v2622, %v3864
        %v3893 = vadd.f32 %v2623, %v3864
        %v3894 = vadd.f32 %v2624, %v3869
        %v3895 = vadd.f32 %v2625, %v3869
        %v3896 = vadd.f32 %v2626, %v3869
        %v3897 = vadd.f32 %v2627, %v3874
        %v3898 = vadd.f32 %v2628, %v3874
        %v3899 = vadd.f32 %v2629, %v3874
        %v3900 = vmax.f32 %v3876, 0.0
        %v3901 = vmax.f32 %v3877, 0.0
        %v3902 = vmax.f32 %v3878, 0.0
        %v3903 = vmax.f32 %v3879, 0.0
        %v3904 = vmax.f32 %v3880, 0.0
        %v3905 = vmax.f32 %v3881, 0.0
        %v3906 = vmax.f32 %v3882, 0.0
        %v3907 = vmax.f32 %v3883, 0.0
        %v3908 = vmax.f32 %v3884, 0.0
        %v3909 = vmax.f32 %v3885, 0.0
        %v3910 = vmax.f32 %v3886, 0.0
        %v3911 = vmax.f32 %v3887, 0.0
        %v3912 = vmax.f32 %v3888, 0.0
        %v3913 = vmax.f32 %v3889, 0.0
        %v3914 = vmax.f32 %v3890, 0.0
        %v3915 = vmax.f32 %v3891, 0.0
        %v3916 = vmax.f32 %v3892, 0.0
        %v3917 = vmax.f32 %v3893, 0.0
        %v3918 = vmax.f32 %v3894, 0.0
        %v3919 = vmax.f32 %v3895, 0.0
        %v3920 = vmax.f32 %v3896, 0.0
        %v3921 = vmax.f32 %v3897, 0.0
        %v3922 = vmax.f32 %v3898, 0.0
        %v3923 = vmax.f32 %v3899, 0.0
        %v3924 = vadd.f32 %v3812, %v3839
        %v3925 = vadd.f32 %v3813, %v3839
        %v3926 = vadd.f32 %v3814, %v3839
        %v3927 = vadd.f32 %v3815, %v3844
        %v3928 = vadd.f32 %v3816, %v3844
        %v3929 = vadd.f32 %v3817, %v3844
        %v3930 = vadd.f32 %v3818, %v3849
        %v3931 = vadd.f32 %v3819, %v3849
        %v3932 = vadd.f32 %v3820, %v3849
        %v3933 = vadd.f32 %v3821, %v3854
        %v3934 = vadd.f32 %v3822, %v3854
        %v3935 = vadd.f32 %v3823, %v3854
        %v3936 = vadd.f32 %v3824, %v3859
        %v3937 = vadd.f32 %v3825, %v3859
        %v3938 = vadd.f32 %v3826, %v3859
        %v3939 = vadd.f32 %v3827, %v3864
        %v3940 = vadd.f32 %v3828, %v3864
        %v3941 = vadd.f32 %v3829, %v3864
        %v3942 = vadd.f32 %v3830, %v3869
        %v3943 = vadd.f32 %v3831, %v3869
        %v3944 = vadd.f32 %v3832, %v3869
        %v3945 = vadd.f32 %v3833, %v3874
        %v3946 = vadd.f32 %v3834, %v3874
        %v3947 = vadd.f32 %v3835, %v3874
        %v3948 = vmax.f32 %v3924, 0.0
        %v3949 = vmax.f32 %v3925, 0.0
        %v3950 = vmax.f32 %v3926, 0.0
        %v3951 = vmax.f32 %v3927, 0.0
        %v3952 = vmax.f32 %v3928, 0.0
        %v3953 = vmax.f32 %v3929, 0.0
        %v3954 = vmax.f32 %v3930, 0.0
        %v3955 = vmax.f32 %v3931, 0.0
        %v3956 = vmax.f32 %v3932, 0.0
        %v3957 = vmax.f32 %v3933, 0.0
        %v3958 = vmax.f32 %v3934, 0.0
        %v3959 = vmax.f32 %v3935, 0.0
        %v3960 = vmax.f32 %v3936, 0.0
        %v3961 = vmax.f32 %v3937, 0.0
        %v3962 = vmax.f32 %v3938, 0.0
        %v3963 = vmax.f32 %v3939, 0.0
        %v3964 = vmax.f32 %v3940, 0.0
        %v3965 = vmax.f32 %v3941, 0.0
        %v3966 = vmax.f32 %v3942, 0.0
        %v3967 = vmax.f32 %v3943, 0.0
        %v3968 = vmax.f32 %v3944, 0.0
        %v3969 = vmax.f32 %v3945, 0.0
        %v3970 = vmax.f32 %v3946, 0.0
        %v3971 = vmax.f32 %v3947, 0.0
        %v3972 = vmax.f32 %v3900, %v3948
        %v3973 = vmax.f32 %v3901, %v3949
        %v3974 = vmax.f32 %v3902, %v3950
        %v3975 = vmax.f32 %v3903, %v3951
        %v3976 = vmax.f32 %v3904, %v3952
        %v3977 = vmax.f32 %v3905, %v3953
        %v3978 = vmax.f32 %v3906, %v3954
        %v3979 = vmax.f32 %v3907, %v3955
        %v3980 = vmax.f32 %v3908, %v3956
        %v3981 = vmax.f32 %v3909, %v3957
        %v3982 = vmax.f32 %v3910, %v3958
        %v3983 = vmax.f32 %v3911, %v3959
        %v3984 = vmax.f32 %v3912, %v3960
        %v3985 = vmax.f32 %v3913, %v3961
        %v3986 = vmax.f32 %v3914, %v3962
        %v3987 = vmax.f32 %v3915, %v3963
        %v3988 = vmax.f32 %v3916, %v3964
        %v3989 = vmax.f32 %v3917, %v3965
        %v3990 = vmax.f32 %v3918, %v3966
        %v3991 = vmax.f32 %v3919, %v3967
        %v3992 = vmax.f32 %v3920, %v3968
        %v3993 = vmax.f32 %v3921, %v3969
        %v3994 = vmax.f32 %v3922, %v3970
        %v3995 = vmax.f32 %v3923, %v3971
        %v3996 = vld [vmem:[%s5] sm:$0xff]
        %v3997 = vld [vmem:[%s5 + $0x8] sm:$0xff]
        %v3998 = vld [vmem:[%s5 + $0x10] sm:$0xff]
        %v3999 = vld [vmem:[%s5 + $0x18] sm:$0xff]
        %v4000 = vld [vmem:[%s5 + $0x20] sm:$0xff]
        %v4001 = vld [vmem:[%s5 + $0x28] sm:$0xff]
        %v4002 = vld [vmem:[%s5 + $0x30] sm:$0xff]
        %v4003 = vld [vmem:[%s5 + $0x38] sm:$0xff]
        %v4004 = vld [vmem:[%s5 + $0x40] sm:$0xff]
        %v4005 = vld [vmem:[%s5 + $0x48] sm:$0xff]
        %v4006 = vld [vmem:[%s5 + $0x50] sm:$0xff]
        %v4007 = vld [vmem:[%s5 + $0x58] sm:$0xff]
        %v4008 = vld [vmem:[%s5 + $0x60] sm:$0xff]
        %v4009 = vld [vmem:[%s5 + $0x68] sm:$0xff]
        %v4010 = vld [vmem:[%s5 + $0x70] sm:$0xff]
        %v4011 = vld [vmem:[%s5 + $0x78] sm:$0xff]
        %v4012 = vld [vmem:[%s5 + $0x80] sm:$0xff]
        %v4013 = vld [vmem:[%s5 + $0x88] sm:$0xff]
        %v4014 = vld [vmem:[%s5 + $0x90] sm:$0xff]
        %v4015 = vld [vmem:[%s5 + $0x98] sm:$0xff]
        %v4016 = vld [vmem:[%s5 + $0xa0] sm:$0xff]
        %v4017 = vld [vmem:[%s5 + $0xa8] sm:$0xff]
        %v4018 = vld [vmem:[%s5 + $0xb0] sm:$0xff]
        %v4019 = vld [vmem:[%s5 + $0xb8] sm:$0xff]
        %v4020 = vmul.f32 %v3972, %v3996
        %v4021 = vmul.f32 %v3973, %v3997
        %v4022 = vmul.f32 %v3974, %v3998
        %v4023 = vmul.f32 %v3975, %v3999
        %v4024 = vmul.f32 %v3976, %v4000
        %v4025 = vmul.f32 %v3977, %v4001
        %v4026 = vmul.f32 %v3978, %v4002
        %v4027 = vmul.f32 %v3979, %v4003
        %v4028 = vmul.f32 %v3980, %v4004
        %v4029 = vmul.f32 %v3981, %v4005
        %v4030 = vmul.f32 %v3982, %v4006
        %v4031 = vmul.f32 %v3983, %v4007
        %v4032 = vmul.f32 %v3984, %v4008
        %v4033 = vmul.f32 %v3985, %v4009
        %v4034 = vmul.f32 %v3986, %v4010
        %v4035 = vmul.f32 %v3987, %v4011
        %v4036 = vmul.f32 %v3988, %v4012
        %v4037 = vmul.f32 %v3989, %v4013
        %v4038 = vmul.f32 %v3990, %v4014
        %v4039 = vmul.f32 %v3991, %v4015
        %v4040 = vmul.f32 %v3992, %v4016
        %v4041 = vmul.f32 %v3993, %v4017
        %v4042 = vmul.f32 %v3994, %v4018
        %v4043 = vmul.f32 %v3995, %v4019
        %v4044 = vadd.f32 %v4020, %v4021
        %vm4045 = vcmask 760832
        %v4046 = vsel %vm4045, %v4022, 0.0
        %v4047 = vadd.f32 %v4044, %v4046
        %v4048 = vadd.f32 %v4047, %v4023
        %v4049 = vadd.f32 %v4048, %v4024
        %v4050 = vsel %vm4045, %v4025, 0.0
        %v4051 = vadd.f32 %v4049, %v4050
        %v4052 = vadd.f32 %v4051, %v4026
        %v4053 = vadd.f32 %v4052, %v4027
        %v4054 = vsel %vm4045, %v4028, 0.0
        %v4055 = vadd.f32 %v4053, %v4054
        %v4056 = vadd.f32 %v4055, %v4029
        %v4057 = vadd.f32 %v4056, %v4030
        %v4058 = vsel %vm4045, %v4031, 0.0
        %v4059 = vadd.f32 %v4057, %v4058
        %v4060 = vadd.f32 %v4059, %v4032
        %v4061 = vadd.f32 %v4060, %v4033
        %v4062 = vsel %vm4045, %v4034, 0.0
        %v4063 = vadd.f32 %v4061, %v4062
        %v4064 = vadd.f32 %v4063, %v4035
        %v4065 = vadd.f32 %v4064, %v4036
        %v4066 = vsel %vm4045, %v4037, 0.0
        %v4067 = vadd.f32 %v4065, %v4066
        %v4068 = vadd.f32 %v4067, %v4038
        %v4069 = vadd.f32 %v4068, %v4039
        %v4070 = vsel %vm4045, %v4040, 0.0
        %v4071 = vadd.f32 %v4069, %v4070
        %v4072 = vadd.f32 %v4071, %v4041
        %v4073 = vadd.f32 %v4072, %v4042
        %v4074 = vsel %vm4045, %v4043, 0.0
        %v4075 = vadd.f32 %v4073, %v4074
        %4076 = vadd.xlane.f32.xlu0 %v4075
        %v4077 = vpop.xlane.xlu0 %4076
        %v4078 = vrot.slane %v4077, 4
        %v4079 = vadd.f32 %v4077, %v4078
        %v4080 = vrot.slane %v4079, 2
        %v4081 = vadd.f32 %v4079, %v4080
        %v4082 = vrot.slane %v4081, 1
        %v4083 = vadd.f32 %v4081, %v4082
        %s4084 = vtos %v4083
        %v4085 = vstv %s4084
        %s4086 = scalar_lea.vmem %s5, 192
        %v4087 = vld [vmem:[%s4086] sm:$0xff]
        %v4088 = vld [vmem:[%s4086 + $0x8] sm:$0xff]
        %v4089 = vld [vmem:[%s4086 + $0x10] sm:$0xff]
        %v4090 = vld [vmem:[%s4086 + $0x18] sm:$0xff]
        %v4091 = vld [vmem:[%s4086 + $0x20] sm:$0xff]
        %v4092 = vld [vmem:[%s4086 + $0x28] sm:$0xff]
        %v4093 = vld [vmem:[%s4086 + $0x30] sm:$0xff]
        %v4094 = vld [vmem:[%s4086 + $0x38] sm:$0xff]
        %v4095 = vld [vmem:[%s4086 + $0x40] sm:$0xff]
        %v4096 = vld [vmem:[%s4086 + $0x48] sm:$0xff]
        %v4097 = vld [vmem:[%s4086 + $0x50] sm:$0xff]
        %v4098 = vld [vmem:[%s4086 + $0x58] sm:$0xff]
        %v4099 = vld [vmem:[%s4086 + $0x60] sm:$0xff]
        %v4100 = vld [vmem:[%s4086 + $0x68] sm:$0xff]
        %v4101 = vld [vmem:[%s4086 + $0x70] sm:$0xff]
        %v4102 = vld [vmem:[%s4086 + $0x78] sm:$0xff]
        %v4103 = vld [vmem:[%s4086 + $0x80] sm:$0xff]
        %v4104 = vld [vmem:[%s4086 + $0x88] sm:$0xff]
        %v4105 = vld [vmem:[%s4086 + $0x90] sm:$0xff]
        %v4106 = vld [vmem:[%s4086 + $0x98] sm:$0xff]
        %v4107 = vld [vmem:[%s4086 + $0xa0] sm:$0xff]
        %v4108 = vld [vmem:[%s4086 + $0xa8] sm:$0xff]
        %v4109 = vld [vmem:[%s4086 + $0xb0] sm:$0xff]
        %v4110 = vld [vmem:[%s4086 + $0xb8] sm:$0xff]
        %v4111 = vmul.f32 %v3972, %v4087
        %v4112 = vmul.f32 %v3973, %v4088
        %v4113 = vmul.f32 %v3974, %v4089
        %v4114 = vmul.f32 %v3975, %v4090
        %v4115 = vmul.f32 %v3976, %v4091
        %v4116 = vmul.f32 %v3977, %v4092
        %v4117 = vmul.f32 %v3978, %v4093
        %v4118 = vmul.f32 %v3979, %v4094
        %v4119 = vmul.f32 %v3980, %v4095
        %v4120 = vmul.f32 %v3981, %v4096
        %v4121 = vmul.f32 %v3982, %v4097
        %v4122 = vmul.f32 %v3983, %v4098
        %v4123 = vmul.f32 %v3984, %v4099
        %v4124 = vmul.f32 %v3985, %v4100
        %v4125 = vmul.f32 %v3986, %v4101
        %v4126 = vmul.f32 %v3987, %v4102
        %v4127 = vmul.f32 %v3988, %v4103
        %v4128 = vmul.f32 %v3989, %v4104
        %v4129 = vmul.f32 %v3990, %v4105
        %v4130 = vmul.f32 %v3991, %v4106
        %v4131 = vmul.f32 %v3992, %v4107
        %v4132 = vmul.f32 %v3993, %v4108
        %v4133 = vmul.f32 %v3994, %v4109
        %v4134 = vmul.f32 %v3995, %v4110
        %v4135 = vadd.f32 %v4111, %v4112
        %v4136 = vsel %vm4045, %v4113, 0.0
        %v4137 = vadd.f32 %v4135, %v4136
        %v4138 = vadd.f32 %v4137, %v4114
        %v4139 = vadd.f32 %v4138, %v4115
        %v4140 = vsel %vm4045, %v4116, 0.0
        %v4141 = vadd.f32 %v4139, %v4140
        %v4142 = vadd.f32 %v4141, %v4117
        %v4143 = vadd.f32 %v4142, %v4118
        %v4144 = vsel %vm4045, %v4119, 0.0
        %v4145 = vadd.f32 %v4143, %v4144
        %v4146 = vadd.f32 %v4145, %v4120
        %v4147 = vadd.f32 %v4146, %v4121
        %v4148 = vsel %vm4045, %v4122, 0.0
        %v4149 = vadd.f32 %v4147, %v4148
        %v4150 = vadd.f32 %v4149, %v4123
        %v4151 = vadd.f32 %v4150, %v4124
        %v4152 = vsel %vm4045, %v4125, 0.0
        %v4153 = vadd.f32 %v4151, %v4152
        %v4154 = vadd.f32 %v4153, %v4126
        %v4155 = vadd.f32 %v4154, %v4127
        %v4156 = vsel %vm4045, %v4128, 0.0
        %v4157 = vadd.f32 %v4155, %v4156
        %v4158 = vadd.f32 %v4157, %v4129
        %v4159 = vadd.f32 %v4158, %v4130
        %v4160 = vsel %vm4045, %v4131, 0.0
        %v4161 = vadd.f32 %v4159, %v4160
        %v4162 = vadd.f32 %v4161, %v4132
        %v4163 = vadd.f32 %v4162, %v4133
        %v4164 = vsel %vm4045, %v4134, 0.0
        %v4165 = vadd.f32 %v4163, %v4164
        %4166 = vadd.xlane.f32.xlu0 %v4165
        %v4167 = vpop.xlane.xlu0 %4166
        %v4168 = vrot.slane %v4167, 4
        %v4169 = vadd.f32 %v4167, %v4168
        %v4170 = vrot.slane %v4169, 2
        %v4171 = vadd.f32 %v4169, %v4170
        %v4172 = vrot.slane %v4171, 1
        %v4173 = vadd.f32 %v4171, %v4172
        %s4174 = vtos %v4173
        %v4175 = vstv %s4174
        %vm4176 = vcmask 7168
        %v4177 = vsel %vm4176, %v4085, %v4175
        %v4178 = vld [vmem:[%s6] sm:$0x1]
        %v4179 = vadd.f32 %v4177, %v4178
        %vm4180 = vcmask 8192
        %4181 = vst.msk [vmem:[%s270] sm:$0x1] %vm4180, %v4179
        %s4182 = sand.u32 %s181, 1
        %s4183 = scalar_lea.sflag [#allocation3], %s4182
        %s4184 = sand.u32 %s181, 1
        %s4185 = scalar_lea.vmem [#allocation2], %s4184
        // Predicated region
        $region49: #{conv1d_model_forward.1} parent=47 // pred_check
          %p4186 = pneg %p191
        $region50: #{conv1d_model_forward.1} parent=47 // pred_check_branch
          %4188 = sbr.rel (%p4186) target = $region52
        $region51: #{conv1d_model_forward.1} parent=47 // pred_region
          %s4190 = ssub.s32 16, 16
          %4191 = vsyncadd %s4183, %s4190
          %s4192 = smul.addr %s21, 16
          %s4193 = scalar_lea.hbm %s7, %s4192
          %s4195 = sshll.u32 %s4185, 4
          %s4196 = int_to_ptr.vmem [resolvable:$true] %s4195
          %4198 = dma.vmem_to_hbm [thread:$0]  %s4196, 16, %s4193, %s4183
        $region52: #{conv1d_model_forward.1} parent=47 // pred_fallthru
          _
      $region48: #{conv1d_model_forward.1} parent=5 // pred_fallthru
        _
      %p4199 = scmp.le.s32.totalorder 2, %s16
      // Predicated region
      $region53: #{conv1d_model_forward.1} parent=5 // pred_check
        %p4200 = pneg %p4199
      $region54: #{conv1d_model_forward.1} parent=5 // pred_check_branch
        %4202 = sbr.rel (%p4200) target = $region56
      $region55: #{conv1d_model_forward.1} parent=5 // pred_region
        %s4203 = ssub.s32 %s16, 2
        // Predicated region
        $region57: #{conv1d_model_forward.1} parent=55 // pred_check
          %p4204 = pneg %p197
        $region58: #{conv1d_model_forward.1} parent=55 // pred_check_branch
          %4206 = sbr.rel (%p4204) target = $region60
        $region59: #{conv1d_model_forward.1} parent=55 // pred_region
          %s4207 = sand.u32 %s182, 1
          %s4208 = scalar_lea.sflag [#allocation3], %s4207
          %s4209 = sand.u32 %s182, 1
          %s4210 = scalar_lea.vmem [#allocation2], %s4209
          %4211 = dma.done %s4208, 16
        $region60: #{conv1d_model_forward.1} parent=55 // pred_fallthru
          _
      $region56: #{conv1d_model_forward.1} parent=5 // pred_fallthru
        _
    $region6: #{conv1d_model_forward.1} parent=1 // loop_footer
      %s20 = sadd.s32 1, %s16
    $region7: #{conv1d_model_forward.1} parent=1 // loop_footer_branch
      %15 = sbr.rel target = $region3
    $region8: #{conv1d_model_forward.1} parent=1 // loop_exit
      _
    %4212 = vsyncpa [#allocation3], 1
    %s4213 = scalar_lea.sflag [#allocation3], 1
    %4214 = vsyncpa %s4213, 1

</llo_original>
